<compile_context>
chip_gen: v5e
topology: v5e:2x2
jax: 0.10.0
libtpu: 0.0.40
codegen_flags: <defaults>
</compile_context>

<pallas_src>
import functools

import jax
import jax.numpy as jnp
from jax.experimental import pallas as pl
from jax.experimental.pallas import tpu as pltpu


def _attention_pool_kernel(x_ref, wq_ref, wkv_ref, wc_ref,
                           posq0_ref, poskv0_ref, poskvx_ref, bc_ref,
                           seg_ref, segt_ref, o_ref, *, num_heads, hw_valid):
    """One grid step: `block_batch` batch elements, single-query (token 0) attention."""
    f32 = jnp.float32
    bt, hwp, c = x_ref.shape
    inv_hw = 1.0 / hw_valid

    xs = x_ref[...]                                        # (Bt, HWp, C) bf16
    x_flat = xs.reshape(bt * hwp, c)                       # free: HWp % 8 == 0

    # Fused K|V projection of the spatial tokens (pos embedding + bias folded into
    # poskvx by the wrapper; both are per-token constants, so the folding is exact).
    kv_raw = jnp.dot(x_flat, wkv_ref[...], preferred_element_type=f32)  # (M, 2C) f32
    kv = kv_raw.reshape(bt, hwp, 2 * c) + poskvx_ref[...][None]
    k_x = kv[:, :, :c]                                     # (Bt, HWp, C) f32
    v_x = kv[:, :, c:]

    # Mean (query) token k/v by linearity: mean(x)@W == mean(x@W). Padded rows of x
    # are zero, so the raw sums are unaffected; divide by the true HW.
    kv_m = jnp.sum(kv_raw.reshape(bt, hwp, 2 * c), axis=1) * inv_hw + poskv0_ref[...]
    k_m = kv_m[:, :c]                                      # (Bt, C) f32
    v_m = kv_m[:, c:]

    # Query projection of the mean token (one skinny matmul; scale folded into wq).
    meanx = jnp.sum(xs, axis=1, dtype=f32) * inv_hw        # (Bt, C) f32, no f32 x copy
    q0 = (jnp.dot(meanx.astype(xs.dtype), wq_ref[...], preferred_element_type=f32)
          + posq0_ref[...])                                # (Bt, C), pre-scaled

    # Per-head scores: elementwise q*k followed by a segment-sum matmul (C, H).
    seg = seg_ref[...]                                     # (C, H) f32
    s_x = jnp.dot((q0[:, None, :] * k_x).reshape(bt * hwp, c), seg,
                  preferred_element_type=f32).reshape(bt, hwp, num_heads)
    s_m = jnp.dot(q0 * k_m, seg, preferred_element_type=f32)        # (Bt, H)

    if hw_valid < hwp:
        # Mask padded key positions before the softmax max.
        pos_ids = jax.lax.broadcasted_iota(jnp.int32, (1, hwp, 1), 1)
        s_x = jnp.where(pos_ids < hw_valid, s_x, jnp.float32(-1e30))

    # Softmax over the HW spatial tokens plus the mean token; fold the normalization
    # into the probabilities while they are still H lanes wide.
    m = jnp.maximum(jnp.max(s_x, axis=1), s_m)             # (Bt, H)
    p_x = jnp.exp(s_x - m[:, None, :])                     # (Bt, HWp, H)
    p_m = jnp.exp(s_m - m)                                 # (Bt, H)
    inv = pl.reciprocal(jnp.sum(p_x, axis=1) + p_m, approx=True)    # (Bt, H), EUP
    p_x = p_x * inv[:, None, :]
    p_m = p_m * inv

    # Weighted value sum; per-head probs expanded back to C lanes via the one-hot
    # segT matmul in bf16 (exactly representable one-hot -> effectively lossless).
    bf = segt_ref.dtype
    segt = segt_ref[...]                                   # (H, C) bf16
    px_c = jnp.dot(p_x.reshape(bt * hwp, num_heads).astype(bf), segt,
                   preferred_element_type=f32).reshape(bt, hwp, c)
    attn = jnp.sum(px_c * v_x, axis=1)                     # (Bt, C)
    attn = attn + jnp.dot(p_m.astype(bf), segt, preferred_element_type=f32) * v_m

    # Output projection; lane-dense (Bt, D) store.
    out = jnp.dot(attn.astype(wc_ref.dtype), wc_ref[...],
                  preferred_element_type=f32) + bc_ref[...]
    o_ref[...] = out.astype(o_ref.dtype)


def _vmem_limit_bytes():
    """Generation-aware scoped-VMEM request: leave headroom on v7x (64 MiB physical
    per TensorCore), use most of the 128 MiB on v5e/v6e, stay conservative otherwise."""
    try:
        kind = jax.devices()[0].device_kind.lower()
    except Exception:  # pragma: no cover - backend query failure
        kind = ""
    if "v7" in kind:
        return 48 << 20
    if "v5" in kind or "v6" in kind:
        return 100 << 20
    return 32 << 20


def _pick_block_batch(n, hwp, c, *, vmem_budget, const_bytes):
    """Largest divisor of n whose per-step activation working set plus the resident
    constants fits the VMEM budget, capped at n//2 so the grid has >=2 steps."""
    # Rough per-(row*channel) bytes: x bf16 double-buffered (4) + fused kv f32 (8)
    # + k/v with pos (8) + q*k product (4) + prob expansion (4) = 28.
    act_bytes_per_elem = 28
    budget = max(vmem_budget - const_bytes, vmem_budget // 4)
    cap = max(1, n // 2)
    pick = 1
    for bb in range(1, cap + 1):
        if n % bb:
            continue
        if bb * hwp * c * act_bytes_per_elem > budget:
            break
        pick = bb
    return pick


def _const_spec(shape, single_buffer):
    """BlockSpec for a grid-invariant operand (weights / folded pos terms / biases)."""
    n = len(shape)
    index_map = lambda b, _n=n: (0,) * _n
    if single_buffer:
        # Constant index_map => never re-fetched; single-buffering halves its VMEM
        # residency (matters at CLIP-scale C on v7x's 64 MiB VMEM).
        return pl.BlockSpec(shape, index_map, pipeline_mode=pl.Buffered(buffer_count=1))
    return pl.BlockSpec(shape, index_map)


def attention_pool2d(x_nchw, params, *, num_heads, block_batch=None,
                     single_buffer_weights=True):
    """Pallas forward of AttentionPool2d.
    params = (pos, wq, bq, wk, bk, wv, bv, wc, bc); weights are laid out for x @ W
    (i.e. the transpose of nn.Linear.weight)."""
    pos, wq, bq, wk, bk, wv, bv, wc, bc = params
    N, C, H, W = x_nchw.shape
    HW = H * W
    HWp = ((HW + 7) // 8) * 8          # pad seq to a sublane multiple -> free reshapes
    D = wc.shape[1]
    assert C % num_heads == 0, "embed_dim must be divisible by num_heads"
    hd = C // num_heads
    scale = hd ** -0.5

    f32, bf16 = jnp.float32, jnp.bfloat16

    # NCHW -> (N, HWp, C); under jit the transpose/cast/pad fuse into one pass over x.
    x_seq = jnp.transpose(x_nchw.reshape(N, C, HW), (0, 2, 1)).astype(bf16)
    if HWp != HW:
        x_seq = jnp.pad(x_seq, ((0, 0), (0, HWp - HW), (0, 0)))

    # Fold positional embedding, biases and the attention scale through the linear
    # projections once (f32). K and V are fused along the output dim.
    posf = pos.astype(f32)
    w_kv = jnp.concatenate([wk, wv], axis=1)                 # (C, 2C)
    b_kv = jnp.concatenate([bk, bv])                         # (2C,)
    posq0 = (posf[0:1] @ wq + bq) * scale                    # (1, C)  q(token 0), scaled
    poskv0 = posf[0:1] @ w_kv + b_kv                         # (1, 2C) k|v(mean token)
    poskvx = posf[1:] @ w_kv + b_kv                          # (HW, 2C) k|v(spatial)
    if HWp != HW:
        poskvx = jnp.pad(poskvx, ((0, HWp - HW), (0, 0)))    # padded keys masked in-kernel

    # One-hot head-segment matrices: seg[c, h] = 1 iff channel c belongs to head h.
    # Score reduction stays f32; probability expansion uses bf16 (exact one-hot).
    head_id = jnp.arange(C, dtype=jnp.int32) // hd
    seg = (head_id[:, None] == jnp.arange(num_heads, dtype=jnp.int32)[None, :]).astype(f32)
    segt = seg.T.astype(bf16)

    wq_b = (wq * scale).astype(bf16)
    wkv_b = w_kv.astype(bf16)
    wc_b = wc.astype(bf16)
    bc_f = bc.astype(f32).reshape(1, D)

    # Resident constant footprint (per buffer copy) for the block_batch budget.
    const_bytes = ((wq_b.size + wkv_b.size + wc_b.size + segt.size) * 2
                   + (posq0.size + poskv0.size + poskvx.size + bc_f.size + seg.size) * 4)
    buf_copies = 1 if single_buffer_weights else 2
    vmem_limit = _vmem_limit_bytes()

    if block_batch is None:
        block_batch = _pick_block_batch(N, HWp, C, vmem_budget=vmem_limit,
                                        const_bytes=const_bytes * buf_copies)
    assert N % block_batch == 0, (N, block_batch)
    grid = (N // block_batch,)

    kernel = functools.partial(_attention_pool_kernel, num_heads=num_heads, hw_valid=HW)
    sb = single_buffer_weights
    out = pl.pallas_call(
        kernel,
        out_shape=jax.ShapeDtypeStruct((N, D), f32),
        grid=grid,
        in_specs=[
            # x is streamed per step; default double-buffering is enough (compute-bound).
            pl.BlockSpec((block_batch, HWp, C), lambda b: (b, 0, 0)),
            _const_spec((C, C), sb),            # wq (scale folded)
            _const_spec((C, 2 * C), sb),        # wk|wv fused
            _const_spec((C, D), sb),            # wc
            _const_spec((1, C), sb),            # posq0 (scale folded)
            _const_spec((1, 2 * C), sb),        # posk0|posv0
            _const_spec((HWp, 2 * C), sb),      # poskx|posvx
            _const_spec((1, D), sb),            # bc
            _const_spec((C, num_heads), sb),    # seg  (f32, score reduction)
            _const_spec((num_heads, C), sb),    # segT (bf16, prob expansion)
        ],
        out_specs=pl.BlockSpec((block_batch, D), lambda b: (b, 0)),
        compiler_params=pltpu.CompilerParams(
            dimension_semantics=("parallel",),   # grid >= 2 -> both v7x TCs busy
            vmem_limit_bytes=vmem_limit),
    )(x_seq, wq_b, wkv_b, wc_b, posq0, poskv0, poskvx, bc_f, seg, segt)
    return out                                   # (N, D) f32


def reference_jax(x_nchw, params, num_heads):
    """Pure-JAX f32 mirror of the PyTorch forward, for validation."""
    pos, wq, bq, wk, bk, wv, bv, wc, bc = params
    N, C, H, W = x_nchw.shape
    x = jnp.transpose(x_nchw.reshape(N, C, H * W), (2, 0, 1))        # (HW, N, C)
    x = jnp.concatenate([x.mean(axis=0, keepdims=True), x], axis=0)  # (S, N, C)
    x = x + pos[:, None, :]
    S = x.shape[0]
    hd = C // num_heads

    q = x @ wq + bq
    k = x @ wk + bk
    v = x @ wv + bv

    def split(t):   # (S, N, C) -> (N, heads, S, hd)
        return t.reshape(S, N, num_heads, hd).transpose(1, 2, 0, 3)

    qh, kh, vh = split(q), split(k), split(v)
    scores = (qh * (hd ** -0.5)) @ kh.transpose(0, 1, 3, 2)          # (N, heads, S, S)
    p = jax.nn.softmax(scores, axis=-1)
    o = p @ vh                                                       # (N, heads, S, hd)
    o = o.transpose(2, 0, 1, 3).reshape(S, N, C)
    o = o @ wc + bc
    return o[0]


if __name__ == "__main__":
    # Small, module-consistent shapes. N=16 -> block_batch caps at 8 -> grid=(2,), so
    # the batch-tiled projections get 128 MXU rows and both v7x TensorCores are used.
    batch = 16
    spacial_dim = 4          # H = W = 4 -> HW = 16 (already a multiple of 8), S = 17
    embed_dim = 64
    num_heads = 4
    output_dim = 128

    key = jax.random.PRNGKey(0)
    ks = jax.random.split(key, 10)

    pos = (jax.random.normal(ks[0], (spacial_dim ** 2 + 1, embed_dim), jnp.float32)
           / embed_dim ** 0.5)
    wq = jax.random.normal(ks[1], (embed_dim, embed_dim), jnp.float32) * 0.1
    bq = jax.random.normal(ks[2], (embed_dim,), jnp.float32) * 0.1
    wk = jax.random.normal(ks[3], (embed_dim, embed_dim), jnp.float32) * 0.1
    bk = jax.random.normal(ks[4], (embed_dim,), jnp.float32) * 0.1
    wv = jax.random.normal(ks[5], (embed_dim, embed_dim), jnp.float32) * 0.1
    bv = jax.random.normal(ks[6], (embed_dim,), jnp.float32) * 0.1
    wc = jax.random.normal(ks[7], (embed_dim, output_dim), jnp.float32) * 0.1
    bc = jax.random.normal(ks[8], (output_dim,), jnp.float32) * 0.1
    params = (pos, wq, bq, wk, bk, wv, bv, wc, bc)

    x = jax.random.normal(ks[9], (batch, embed_dim, spacial_dim, spacial_dim),
                          jnp.float32)

    def run(single_buffer):
        fn = jax.jit(functools.partial(attention_pool2d, num_heads=num_heads,
                                       single_buffer_weights=single_buffer))
        return jax.block_until_ready(fn(x, params))

    try:
        out = run(True)    # preferred: single-buffered resident constants
    except Exception:
        # This JAX build rejects pipeline_mode / Buffered(1) on TPU BlockSpecs.
        # Fall back to default buffering, re-deriving block_batch with the constants
        # counted twice so we never overshoot VMEM; a genuine kernel bug would fail
        # here too and propagate instead of being masked.
        out = run(False)

    ref = jax.block_until_ready(reference_jax(x, params, num_heads))
    assert out.shape == (batch, output_dim), out.shape
    # bf16 weights/activations + approx reciprocal in-kernel vs f32 reference.
    assert jnp.allclose(out, ref, atol=3e-2, rtol=3e-2), (
        "mismatch vs JAX reference, max abs err = "
        f"{float(jnp.max(jnp.abs(out - ref)))}")

    print("KERNEL_OK")
</pallas_src>

<mosaic_0001>
module attributes {stable_mosaic.version = 11 : i64} {
  func.func @_attention_pool_kernel(%arg0: i32, %arg1: memref<8x16x64xbf16, #tpu.memory_space<vmem>>, %arg2: memref<64x64xbf16, #tpu.memory_space<vmem>>, %arg3: memref<64x128xbf16, #tpu.memory_space<vmem>>, %arg4: memref<64x128xbf16, #tpu.memory_space<vmem>>, %arg5: memref<1x64xf32, #tpu.memory_space<vmem>>, %arg6: memref<1x128xf32, #tpu.memory_space<vmem>>, %arg7: memref<16x128xf32, #tpu.memory_space<vmem>>, %arg8: memref<1x128xf32, #tpu.memory_space<vmem>>, %arg9: memref<64x4xf32, #tpu.memory_space<vmem>>, %arg10: memref<4x64xbf16, #tpu.memory_space<vmem>>, %arg11: memref<8x128xf32, #tpu.memory_space<vmem>>) attributes {dimension_semantics = [#tpu.dimension_semantics<parallel>], iteration_bounds = array<i64: 2>, scalar_prefetch = 0 : i64, scratch_operands = 0 : i64, tpu.core_type = #tpu.core_type<tc>, window_params = [{transform_indices = @transform_0, window_bounds = array<i64: 8, 16, 64>}, {pipeline_mode = #tpu.pipeline_mode<synchronous>, transform_indices = @transform_1, window_bounds = array<i64: 64, 64>}, {pipeline_mode = #tpu.pipeline_mode<synchronous>, transform_indices = @transform_2, window_bounds = array<i64: 64, 128>}, {pipeline_mode = #tpu.pipeline_mode<synchronous>, transform_indices = @transform_3, window_bounds = array<i64: 64, 128>}, {pipeline_mode = #tpu.pipeline_mode<synchronous>, transform_indices = @transform_4, window_bounds = array<i64: 1, 64>}, {pipeline_mode = #tpu.pipeline_mode<synchronous>, transform_indices = @transform_5, window_bounds = array<i64: 1, 128>}, {pipeline_mode = #tpu.pipeline_mode<synchronous>, transform_indices = @transform_6, window_bounds = array<i64: 16, 128>}, {pipeline_mode = #tpu.pipeline_mode<synchronous>, transform_indices = @transform_7, window_bounds = array<i64: 1, 128>}, {pipeline_mode = #tpu.pipeline_mode<synchronous>, transform_indices = @transform_8, window_bounds = array<i64: 64, 4>}, {pipeline_mode = #tpu.pipeline_mode<synchronous>, transform_indices = @transform_9, window_bounds = array<i64: 4, 64>}, {transform_indices = @transform_10, window_bounds = array<i64: 8, 128>}]} {
    %c0 = arith.constant 0 : index
    %c0_0 = arith.constant 0 : index
    %c0_1 = arith.constant 0 : index
    %0 = vector.load %arg1[%c0, %c0_0, %c0_1] : memref<8x16x64xbf16, #tpu.memory_space<vmem>>, vector<8x16x64xbf16>
    %1 = vector.shape_cast %0 : vector<8x16x64xbf16> to vector<128x64xbf16>
    %c0_2 = arith.constant 0 : index
    %c0_3 = arith.constant 0 : index
    %2 = vector.load %arg3[%c0_2, %c0_3] : memref<64x128xbf16, #tpu.memory_space<vmem>>, vector<64x128xbf16>
    %cst = arith.constant dense<0.000000e+00> : vector<128x128xf32>
    %3 = tpu.matmul %1, %2, %cst {dimension_numbers = #tpu.dot_dimension_numbers<[1], [0], [0], [1], [0, 0, 1, 1], [], []>} : vector<128x64xbf16>, vector<64x128xbf16>, vector<128x128xf32> -> vector<128x128xf32>
    %4 = vector.shape_cast %3 : vector<128x128xf32> to vector<8x16x128xf32>
    %c0_4 = arith.constant 0 : index
    %c0_5 = arith.constant 0 : index
    %5 = vector.load %arg7[%c0_4, %c0_5] : memref<16x128xf32, #tpu.memory_space<vmem>>, vector<16x128xf32>
    %6 = vector.shape_cast %5 : vector<16x128xf32> to vector<1x16x128xf32>
    %7 = vector.broadcast %6 : vector<1x16x128xf32> to vector<8x16x128xf32>
    %8 = arith.addf %4, %7 : vector<8x16x128xf32>
    %9 = vector.extract_strided_slice %8 {offsets = [0, 0, 0], sizes = [8, 16, 64], strides = [1, 1, 1]} : vector<8x16x128xf32> to vector<8x16x64xf32>
    %10 = vector.extract_strided_slice %8 {offsets = [0, 0, 64], sizes = [8, 16, 64], strides = [1, 1, 1]} : vector<8x16x128xf32> to vector<8x16x64xf32>
    %11 = vector.shape_cast %3 : vector<128x128xf32> to vector<8x16x128xf32>
    %cst_6 = arith.constant dense<0.000000e+00> : vector<8x128xf32>
    %12 = vector.multi_reduction <add>, %11, %cst_6 [1] : vector<8x16x128xf32> to vector<8x128xf32>
    %cst_7 = arith.constant 6.250000e-02 : f32
    %13 = vector.broadcast %cst_7 : f32 to vector<8x128xf32>
    %14 = arith.mulf %12, %13 : vector<8x128xf32>
    %c0_8 = arith.constant 0 : index
    %c0_9 = arith.constant 0 : index
    %15 = vector.load %arg6[%c0_8, %c0_9] : memref<1x128xf32, #tpu.memory_space<vmem>>, vector<1x128xf32>
    %16 = vector.broadcast %15 : vector<1x128xf32> to vector<8x128xf32>
    %17 = arith.addf %14, %16 : vector<8x128xf32>
    %18 = vector.extract_strided_slice %17 {offsets = [0, 0], sizes = [8, 64], strides = [1, 1]} : vector<8x128xf32> to vector<8x64xf32>
    %19 = vector.extract_strided_slice %17 {offsets = [0, 64], sizes = [8, 64], strides = [1, 1]} : vector<8x128xf32> to vector<8x64xf32>
    %20 = arith.extf %0 : vector<8x16x64xbf16> to vector<8x16x64xf32>
    %cst_10 = arith.constant dense<0.000000e+00> : vector<8x64xf32>
    %21 = vector.multi_reduction <add>, %20, %cst_10 [1] : vector<8x16x64xf32> to vector<8x64xf32>
    %cst_11 = arith.constant 6.250000e-02 : f32
    %22 = vector.broadcast %cst_11 : f32 to vector<8x64xf32>
    %23 = arith.mulf %21, %22 : vector<8x64xf32>
    %24 = arith.truncf %23 : vector<8x64xf32> to vector<8x64xbf16>
    %c0_12 = arith.constant 0 : index
    %c0_13 = arith.constant 0 : index
    %25 = vector.load %arg2[%c0_12, %c0_13] : memref<64x64xbf16, #tpu.memory_space<vmem>>, vector<64x64xbf16>
    %cst_14 = arith.constant dense<0.000000e+00> : vector<8x64xf32>
    %26 = tpu.matmul %24, %25, %cst_14 {dimension_numbers = #tpu.dot_dimension_numbers<[1], [0], [0], [1], [0, 0, 1, 1], [], []>} : vector<8x64xbf16>, vector<64x64xbf16>, vector<8x64xf32> -> vector<8x64xf32>
    %c0_15 = arith.constant 0 : index
    %c0_16 = arith.constant 0 : index
    %27 = vector.load %arg5[%c0_15, %c0_16] : memref<1x64xf32, #tpu.memory_space<vmem>>, vector<1x64xf32>
    %28 = vector.broadcast %27 : vector<1x64xf32> to vector<8x64xf32>
    %29 = arith.addf %26, %28 : vector<8x64xf32>
    %c0_17 = arith.constant 0 : index
    %c0_18 = arith.constant 0 : index
    %30 = vector.load %arg9[%c0_17, %c0_18] : memref<64x4xf32, #tpu.memory_space<vmem>>, vector<64x4xf32>
    %31 = vector.shape_cast %29 : vector<8x64xf32> to vector<8x1x64xf32>
    %32 = vector.broadcast %31 : vector<8x1x64xf32> to vector<8x16x64xf32>
    %33 = arith.mulf %32, %9 : vector<8x16x64xf32>
    %34 = vector.shape_cast %33 : vector<8x16x64xf32> to vector<128x64xf32>
    %cst_19 = arith.constant dense<0.000000e+00> : vector<128x4xf32>
    %35 = tpu.matmul %34, %30, %cst_19 {dimension_numbers = #tpu.dot_dimension_numbers<[1], [0], [0], [1], [0, 0, 1, 1], [], []>} : vector<128x64xf32>, vector<64x4xf32>, vector<128x4xf32> -> vector<128x4xf32>
    %36 = vector.shape_cast %35 : vector<128x4xf32> to vector<8x16x4xf32>
    %37 = arith.mulf %29, %18 : vector<8x64xf32>
    %cst_20 = arith.constant dense<0.000000e+00> : vector<8x4xf32>
    %38 = tpu.matmul %37, %30, %cst_20 {dimension_numbers = #tpu.dot_dimension_numbers<[1], [0], [0], [1], [0, 0, 1, 1], [], []>} : vector<8x64xf32>, vector<64x4xf32>, vector<8x4xf32> -> vector<8x4xf32>
    %cst_21 = arith.constant dense<0xFF800000> : vector<8x4xf32>
    %39 = vector.multi_reduction <maximumf>, %36, %cst_21 [1] : vector<8x16x4xf32> to vector<8x4xf32>
    %40 = arith.maximumf %39, %38 : vector<8x4xf32>
    %41 = vector.shape_cast %40 : vector<8x4xf32> to vector<8x1x4xf32>
    %42 = vector.broadcast %41 : vector<8x1x4xf32> to vector<8x16x4xf32>
    %43 = arith.subf %36, %42 : vector<8x16x4xf32>
    %44 = math.exp %43 : vector<8x16x4xf32>
    %45 = arith.subf %38, %40 : vector<8x4xf32>
    %46 = math.exp %45 : vector<8x4xf32>
    %cst_22 = arith.constant dense<0.000000e+00> : vector<8x4xf32>
    %47 = vector.multi_reduction <add>, %44, %cst_22 [1] : vector<8x16x4xf32> to vector<8x4xf32>
    %48 = arith.addf %47, %46 : vector<8x4xf32>
    %49 = tpu.reciprocal %48 {approx = true} : vector<8x4xf32> -> vector<8x4xf32>
    %50 = vector.shape_cast %49 : vector<8x4xf32> to vector<8x1x4xf32>
    %51 = vector.broadcast %50 : vector<8x1x4xf32> to vector<8x16x4xf32>
    %52 = arith.mulf %44, %51 : vector<8x16x4xf32>
    %53 = arith.mulf %46, %49 : vector<8x4xf32>
    %c0_23 = arith.constant 0 : index
    %c0_24 = arith.constant 0 : index
    %54 = vector.load %arg10[%c0_23, %c0_24] : memref<4x64xbf16, #tpu.memory_space<vmem>>, vector<4x64xbf16>
    %55 = vector.shape_cast %52 : vector<8x16x4xf32> to vector<128x4xf32>
    %56 = arith.truncf %55 : vector<128x4xf32> to vector<128x4xbf16>
    %cst_25 = arith.constant dense<0.000000e+00> : vector<128x64xf32>
    %57 = tpu.matmul %56, %54, %cst_25 {dimension_numbers = #tpu.dot_dimension_numbers<[1], [0], [0], [1], [0, 0, 1, 1], [], []>} : vector<128x4xbf16>, vector<4x64xbf16>, vector<128x64xf32> -> vector<128x64xf32>
    %58 = vector.shape_cast %57 : vector<128x64xf32> to vector<8x16x64xf32>
    %59 = arith.mulf %58, %10 : vector<8x16x64xf32>
    %cst_26 = arith.constant dense<0.000000e+00> : vector<8x64xf32>
    %60 = vector.multi_reduction <add>, %59, %cst_26 [1] : vector<8x16x64xf32> to vector<8x64xf32>
    %61 = arith.truncf %53 : vector<8x4xf32> to vector<8x4xbf16>
    %cst_27 = arith.constant dense<0.000000e+00> : vector<8x64xf32>
    %62 = tpu.matmul %61, %54, %cst_27 {dimension_numbers = #tpu.dot_dimension_numbers<[1], [0], [0], [1], [0, 0, 1, 1], [], []>} : vector<8x4xbf16>, vector<4x64xbf16>, vector<8x64xf32> -> vector<8x64xf32>
    %63 = arith.mulf %62, %19 : vector<8x64xf32>
    %64 = arith.addf %60, %63 : vector<8x64xf32>
    %65 = arith.truncf %64 : vector<8x64xf32> to vector<8x64xbf16>
    %c0_28 = arith.constant 0 : index
    %c0_29 = arith.constant 0 : index
    %66 = vector.load %arg4[%c0_28, %c0_29] : memref<64x128xbf16, #tpu.memory_space<vmem>>, vector<64x128xbf16>
    %cst_30 = arith.constant dense<0.000000e+00> : vector<8x128xf32>
    %67 = tpu.matmul %65, %66, %cst_30 {dimension_numbers = #tpu.dot_dimension_numbers<[1], [0], [0], [1], [0, 0, 1, 1], [], []>} : vector<8x64xbf16>, vector<64x128xbf16>, vector<8x128xf32> -> vector<8x128xf32>
    %c0_31 = arith.constant 0 : index
    %c0_32 = arith.constant 0 : index
    %68 = vector.load %arg8[%c0_31, %c0_32] : memref<1x128xf32, #tpu.memory_space<vmem>>, vector<1x128xf32>
    %69 = vector.broadcast %68 : vector<1x128xf32> to vector<8x128xf32>
    %70 = arith.addf %67, %69 : vector<8x128xf32>
    %c0_33 = arith.constant 0 : index
    %c0_34 = arith.constant 0 : index
    %71 = vector.load %arg11[%c0_33, %c0_34] : memref<8x128xf32, #tpu.memory_space<vmem>>, vector<8x128xf32>
    tpu.vector_store %arg11[%c0_33, %c0_34], %70 {strides = array<i32>} : memref<8x128xf32, #tpu.memory_space<vmem>>, vector<8x128xf32>,
    return
  }
  func.func @transform_0(%arg0: i32) -> (i32, i32, i32) {
    %c0_i32 = arith.constant 0 : i32
    %c0_i32_0 = arith.constant 0 : i32
    %c0_i32_1 = arith.constant 0 : i32
    return %arg0, %c0_i32, %c0_i32_0 : i32, i32, i32
  }
  func.func @transform_1(%arg0: i32) -> (i32, i32) {
    %c0_i32 = arith.constant 0 : i32
    %c0_i32_0 = arith.constant 0 : i32
    %c0_i32_1 = arith.constant 0 : i32
    return %c0_i32, %c0_i32_0 : i32, i32
  }
  func.func @transform_2(%arg0: i32) -> (i32, i32) {
    %c0_i32 = arith.constant 0 : i32
    %c0_i32_0 = arith.constant 0 : i32
    %c0_i32_1 = arith.constant 0 : i32
    return %c0_i32, %c0_i32_0 : i32, i32
  }
  func.func @transform_3(%arg0: i32) -> (i32, i32) {
    %c0_i32 = arith.constant 0 : i32
    %c0_i32_0 = arith.constant 0 : i32
    %c0_i32_1 = arith.constant 0 : i32
    return %c0_i32, %c0_i32_0 : i32, i32
  }
  func.func @transform_4(%arg0: i32) -> (i32, i32) {
    %c0_i32 = arith.constant 0 : i32
    %c0_i32_0 = arith.constant 0 : i32
    %c0_i32_1 = arith.constant 0 : i32
    return %c0_i32, %c0_i32_0 : i32, i32
  }
  func.func @transform_5(%arg0: i32) -> (i32, i32) {
    %c0_i32 = arith.constant 0 : i32
    %c0_i32_0 = arith.constant 0 : i32
    %c0_i32_1 = arith.constant 0 : i32
    return %c0_i32, %c0_i32_0 : i32, i32
  }
  func.func @transform_6(%arg0: i32) -> (i32, i32) {
    %c0_i32 = arith.constant 0 : i32
    %c0_i32_0 = arith.constant 0 : i32
    %c0_i32_1 = arith.constant 0 : i32
    return %c0_i32, %c0_i32_0 : i32, i32
  }
  func.func @transform_7(%arg0: i32) -> (i32, i32) {
    %c0_i32 = arith.constant 0 : i32
    %c0_i32_0 = arith.constant 0 : i32
    %c0_i32_1 = arith.constant 0 : i32
    return %c0_i32, %c0_i32_0 : i32, i32
  }
  func.func @transform_8(%arg0: i32) -> (i32, i32) {
    %c0_i32 = arith.constant 0 : i32
    %c0_i32_0 = arith.constant 0 : i32
    %c0_i32_1 = arith.constant 0 : i32
    return %c0_i32, %c0_i32_0 : i32, i32
  }
  func.func @transform_9(%arg0: i32) -> (i32, i32) {
    %c0_i32 = arith.constant 0 : i32
    %c0_i32_0 = arith.constant 0 : i32
    %c0_i32_1 = arith.constant 0 : i32
    return %c0_i32, %c0_i32_0 : i32, i32
  }
  func.func @transform_10(%arg0: i32) -> (i32, i32) {
    %c0_i32 = arith.constant 0 : i32
    %c0_i32_0 = arith.constant 0 : i32
    return %arg0, %c0_i32 : i32, i32
  }
}

module attributes {stable_mosaic.version = 11 : i64} {
  func.func @_attention_pool_kernel(%arg0: i32, %arg1: memref<8x16x64xbf16, #tpu.memory_space<vmem>>, %arg2: memref<64x64xbf16, #tpu.memory_space<vmem>>, %arg3: memref<64x128xbf16, #tpu.memory_space<vmem>>, %arg4: memref<64x128xbf16, #tpu.memory_space<vmem>>, %arg5: memref<1x64xf32, #tpu.memory_space<vmem>>, %arg6: memref<1x128xf32, #tpu.memory_space<vmem>>, %arg7: memref<16x128xf32, #tpu.memory_space<vmem>>, %arg8: memref<1x128xf32, #tpu.memory_space<vmem>>, %arg9: memref<64x4xf32, #tpu.memory_space<vmem>>, %arg10: memref<4x64xbf16, #tpu.memory_space<vmem>>, %arg11: memref<8x128xf32, #tpu.memory_space<vmem>>) attributes {dimension_semantics = [#tpu.dimension_semantics<parallel>], iteration_bounds = array<i64: 2>, scalar_prefetch = 0 : i64, scratch_operands = 0 : i64, tpu.core_type = #tpu.core_type<tc>, window_params = [{transform_indices = @transform_0, window_bounds = array<i64: 8, 16, 64>}, {pipeline_mode = #tpu.pipeline_mode<synchronous>, transform_indices = @transform_1, window_bounds = array<i64: 64, 64>}, {pipeline_mode = #tpu.pipeline_mode<synchronous>, transform_indices = @transform_2, window_bounds = array<i64: 64, 128>}, {pipeline_mode = #tpu.pipeline_mode<synchronous>, transform_indices = @transform_3, window_bounds = array<i64: 64, 128>}, {pipeline_mode = #tpu.pipeline_mode<synchronous>, transform_indices = @transform_4, window_bounds = array<i64: 1, 64>}, {pipeline_mode = #tpu.pipeline_mode<synchronous>, transform_indices = @transform_5, window_bounds = array<i64: 1, 128>}, {pipeline_mode = #tpu.pipeline_mode<synchronous>, transform_indices = @transform_6, window_bounds = array<i64: 16, 128>}, {pipeline_mode = #tpu.pipeline_mode<synchronous>, transform_indices = @transform_7, window_bounds = array<i64: 1, 128>}, {pipeline_mode = #tpu.pipeline_mode<synchronous>, transform_indices = @transform_8, window_bounds = array<i64: 64, 4>}, {pipeline_mode = #tpu.pipeline_mode<synchronous>, transform_indices = @transform_9, window_bounds = array<i64: 4, 64>}, {transform_indices = @transform_10, window_bounds = array<i64: 8, 128>}]} {
    %c0 = arith.constant 0 : index
    %c0_0 = arith.constant 0 : index
    %c0_1 = arith.constant 0 : index
    %0 = vector.load %arg1[%c0, %c0_0, %c0_1] : memref<8x16x64xbf16, #tpu.memory_space<vmem>>, vector<8x16x64xbf16>
    %1 = vector.shape_cast %0 : vector<8x16x64xbf16> to vector<128x64xbf16>
    %c0_2 = arith.constant 0 : index
    %c0_3 = arith.constant 0 : index
    %2 = vector.load %arg3[%c0_2, %c0_3] : memref<64x128xbf16, #tpu.memory_space<vmem>>, vector<64x128xbf16>
    %cst = arith.constant dense<0.000000e+00> : vector<128x128xf32>
    %3 = tpu.matmul %1, %2, %cst {dimension_numbers = #tpu.dot_dimension_numbers<[1], [0], [0], [1], [0, 0, 1, 1], [], []>} : vector<128x64xbf16>, vector<64x128xbf16>, vector<128x128xf32> -> vector<128x128xf32>
    %4 = vector.shape_cast %3 : vector<128x128xf32> to vector<8x16x128xf32>
    %c0_4 = arith.constant 0 : index
    %c0_5 = arith.constant 0 : index
    %5 = vector.load %arg7[%c0_4, %c0_5] : memref<16x128xf32, #tpu.memory_space<vmem>>, vector<16x128xf32>
    %6 = vector.shape_cast %5 : vector<16x128xf32> to vector<1x16x128xf32>
    %7 = vector.broadcast %6 : vector<1x16x128xf32> to vector<8x16x128xf32>
    %8 = arith.addf %4, %7 : vector<8x16x128xf32>
    %9 = vector.extract_strided_slice %8 {offsets = [0, 0, 0], sizes = [8, 16, 64], strides = [1, 1, 1]} : vector<8x16x128xf32> to vector<8x16x64xf32>
    %10 = vector.extract_strided_slice %8 {offsets = [0, 0, 64], sizes = [8, 16, 64], strides = [1, 1, 1]} : vector<8x16x128xf32> to vector<8x16x64xf32>
    %11 = vector.shape_cast %3 : vector<128x128xf32> to vector<8x16x128xf32>
    %cst_6 = arith.constant dense<0.000000e+00> : vector<8x128xf32>
    %12 = vector.multi_reduction <add>, %11, %cst_6 [1] : vector<8x16x128xf32> to vector<8x128xf32>
    %cst_7 = arith.constant 6.250000e-02 : f32
    %13 = vector.broadcast %cst_7 : f32 to vector<8x128xf32>
    %14 = arith.mulf %12, %13 : vector<8x128xf32>
    %c0_8 = arith.constant 0 : index
    %c0_9 = arith.constant 0 : index
    %15 = vector.load %arg6[%c0_8, %c0_9] : memref<1x128xf32, #tpu.memory_space<vmem>>, vector<1x128xf32>
    %16 = vector.broadcast %15 : vector<1x128xf32> to vector<8x128xf32>
    %17 = arith.addf %14, %16 : vector<8x128xf32>
    %18 = vector.extract_strided_slice %17 {offsets = [0, 0], sizes = [8, 64], strides = [1, 1]} : vector<8x128xf32> to vector<8x64xf32>
    %19 = vector.extract_strided_slice %17 {offsets = [0, 64], sizes = [8, 64], strides = [1, 1]} : vector<8x128xf32> to vector<8x64xf32>
    %20 = arith.extf %0 : vector<8x16x64xbf16> to vector<8x16x64xf32>
    %cst_10 = arith.constant dense<0.000000e+00> : vector<8x64xf32>
    %21 = vector.multi_reduction <add>, %20, %cst_10 [1] : vector<8x16x64xf32> to vector<8x64xf32>
    %cst_11 = arith.constant 6.250000e-02 : f32
    %22 = vector.broadcast %cst_11 : f32 to vector<8x64xf32>
    %23 = arith.mulf %21, %22 : vector<8x64xf32>
    %24 = arith.truncf %23 : vector<8x64xf32> to vector<8x64xbf16>
    %c0_12 = arith.constant 0 : index
    %c0_13 = arith.constant 0 : index
    %25 = vector.load %arg2[%c0_12, %c0_13] : memref<64x64xbf16, #tpu.memory_space<vmem>>, vector<64x64xbf16>
    %cst_14 = arith.constant dense<0.000000e+00> : vector<8x64xf32>
    %26 = tpu.matmul %24, %25, %cst_14 {dimension_numbers = #tpu.dot_dimension_numbers<[1], [0], [0], [1], [0, 0, 1, 1], [], []>} : vector<8x64xbf16>, vector<64x64xbf16>, vector<8x64xf32> -> vector<8x64xf32>
    %c0_15 = arith.constant 0 : index
    %c0_16 = arith.constant 0 : index
    %27 = vector.load %arg5[%c0_15, %c0_16] : memref<1x64xf32, #tpu.memory_space<vmem>>, vector<1x64xf32>
    %28 = vector.broadcast %27 : vector<1x64xf32> to vector<8x64xf32>
    %29 = arith.addf %26, %28 : vector<8x64xf32>
    %c0_17 = arith.constant 0 : index
    %c0_18 = arith.constant 0 : index
    %30 = vector.load %arg9[%c0_17, %c0_18] : memref<64x4xf32, #tpu.memory_space<vmem>>, vector<64x4xf32>
    %31 = vector.shape_cast %29 : vector<8x64xf32> to vector<8x1x64xf32>
    %32 = vector.broadcast %31 : vector<8x1x64xf32> to vector<8x16x64xf32>
    %33 = arith.mulf %32, %9 : vector<8x16x64xf32>
    %34 = vector.shape_cast %33 : vector<8x16x64xf32> to vector<128x64xf32>
    %cst_19 = arith.constant dense<0.000000e+00> : vector<128x4xf32>
    %35 = tpu.matmul %34, %30, %cst_19 {dimension_numbers = #tpu.dot_dimension_numbers<[1], [0], [0], [1], [0, 0, 1, 1], [], []>} : vector<128x64xf32>, vector<64x4xf32>, vector<128x4xf32> -> vector<128x4xf32>
    %36 = vector.shape_cast %35 : vector<128x4xf32> to vector<8x16x4xf32>
    %37 = arith.mulf %29, %18 : vector<8x64xf32>
    %cst_20 = arith.constant dense<0.000000e+00> : vector<8x4xf32>
    %38 = tpu.matmul %37, %30, %cst_20 {dimension_numbers = #tpu.dot_dimension_numbers<[1], [0], [0], [1], [0, 0, 1, 1], [], []>} : vector<8x64xf32>, vector<64x4xf32>, vector<8x4xf32> -> vector<8x4xf32>
    %cst_21 = arith.constant dense<0xFF800000> : vector<8x4xf32>
    %39 = vector.multi_reduction <maximumf>, %36, %cst_21 [1] : vector<8x16x4xf32> to vector<8x4xf32>
    %40 = arith.maximumf %39, %38 : vector<8x4xf32>
    %41 = vector.shape_cast %40 : vector<8x4xf32> to vector<8x1x4xf32>
    %42 = vector.broadcast %41 : vector<8x1x4xf32> to vector<8x16x4xf32>
    %43 = arith.subf %36, %42 : vector<8x16x4xf32>
    %44 = math.exp %43 : vector<8x16x4xf32>
    %45 = arith.subf %38, %40 : vector<8x4xf32>
    %46 = math.exp %45 : vector<8x4xf32>
    %cst_22 = arith.constant dense<0.000000e+00> : vector<8x4xf32>
    %47 = vector.multi_reduction <add>, %44, %cst_22 [1] : vector<8x16x4xf32> to vector<8x4xf32>
    %48 = arith.addf %47, %46 : vector<8x4xf32>
    %49 = tpu.reciprocal %48 {approx = true} : vector<8x4xf32> -> vector<8x4xf32>
    %50 = vector.shape_cast %49 : vector<8x4xf32> to vector<8x1x4xf32>
    %51 = vector.broadcast %50 : vector<8x1x4xf32> to vector<8x16x4xf32>
    %52 = arith.mulf %44, %51 : vector<8x16x4xf32>
    %53 = arith.mulf %46, %49 : vector<8x4xf32>
    %c0_23 = arith.constant 0 : index
    %c0_24 = arith.constant 0 : index
    %54 = vector.load %arg10[%c0_23, %c0_24] : memref<4x64xbf16, #tpu.memory_space<vmem>>, vector<4x64xbf16>
    %55 = vector.shape_cast %52 : vector<8x16x4xf32> to vector<128x4xf32>
    %56 = arith.truncf %55 : vector<128x4xf32> to vector<128x4xbf16>
    %cst_25 = arith.constant dense<0.000000e+00> : vector<128x64xf32>
    %57 = tpu.matmul %56, %54, %cst_25 {dimension_numbers = #tpu.dot_dimension_numbers<[1], [0], [0], [1], [0, 0, 1, 1], [], []>} : vector<128x4xbf16>, vector<4x64xbf16>, vector<128x64xf32> -> vector<128x64xf32>
    %58 = vector.shape_cast %57 : vector<128x64xf32> to vector<8x16x64xf32>
    %59 = arith.mulf %58, %10 : vector<8x16x64xf32>
    %cst_26 = arith.constant dense<0.000000e+00> : vector<8x64xf32>
    %60 = vector.multi_reduction <add>, %59, %cst_26 [1] : vector<8x16x64xf32> to vector<8x64xf32>
    %61 = arith.truncf %53 : vector<8x4xf32> to vector<8x4xbf16>
    %cst_27 = arith.constant dense<0.000000e+00> : vector<8x64xf32>
    %62 = tpu.matmul %61, %54, %cst_27 {dimension_numbers = #tpu.dot_dimension_numbers<[1], [0], [0], [1], [0, 0, 1, 1], [], []>} : vector<8x4xbf16>, vector<4x64xbf16>, vector<8x64xf32> -> vector<8x64xf32>
    %63 = arith.mulf %62, %19 : vector<8x64xf32>
    %64 = arith.addf %60, %63 : vector<8x64xf32>
    %65 = arith.truncf %64 : vector<8x64xf32> to vector<8x64xbf16>
    %c0_28 = arith.constant 0 : index
    %c0_29 = arith.constant 0 : index
    %66 = vector.load %arg4[%c0_28, %c0_29] : memref<64x128xbf16, #tpu.memory_space<vmem>>, vector<64x128xbf16>
    %cst_30 = arith.constant dense<0.000000e+00> : vector<8x128xf32>
    %67 = tpu.matmul %65, %66, %cst_30 {dimension_numbers = #tpu.dot_dimension_numbers<[1], [0], [0], [1], [0, 0, 1, 1], [], []>} : vector<8x64xbf16>, vector<64x128xbf16>, vector<8x128xf32> -> vector<8x128xf32>
    %c0_31 = arith.constant 0 : index
    %c0_32 = arith.constant 0 : index
    %68 = vector.load %arg8[%c0_31, %c0_32] : memref<1x128xf32, #tpu.memory_space<vmem>>, vector<1x128xf32>
    %69 = vector.broadcast %68 : vector<1x128xf32> to vector<8x128xf32>
    %70 = arith.addf %67, %69 : vector<8x128xf32>
    %c0_33 = arith.constant 0 : index
    %c0_34 = arith.constant 0 : index
    %71 = vector.load %arg11[%c0_33, %c0_34] : memref<8x128xf32, #tpu.memory_space<vmem>>, vector<8x128xf32>
    tpu.vector_store %arg11[%c0_33, %c0_34], %70 {strides = array<i32>} : memref<8x128xf32, #tpu.memory_space<vmem>>, vector<8x128xf32>,
    return
  }
  func.func @transform_0(%arg0: i32) -> (i32, i32, i32) {
    %c0_i32 = arith.constant 0 : i32
    %c0_i32_0 = arith.constant 0 : i32
    %c0_i32_1 = arith.constant 0 : i32
    return %arg0, %c0_i32, %c0_i32_0 : i32, i32, i32
  }
  func.func @transform_1(%arg0: i32) -> (i32, i32) {
    %c0_i32 = arith.constant 0 : i32
    %c0_i32_0 = arith.constant 0 : i32
    %c0_i32_1 = arith.constant 0 : i32
    return %c0_i32, %c0_i32_0 : i32, i32
  }
  func.func @transform_2(%arg0: i32) -> (i32, i32) {
    %c0_i32 = arith.constant 0 : i32
    %c0_i32_0 = arith.constant 0 : i32
    %c0_i32_1 = arith.constant 0 : i32
    return %c0_i32, %c0_i32_0 : i32, i32
  }
  func.func @transform_3(%arg0: i32) -> (i32, i32) {
    %c0_i32 = arith.constant 0 : i32
    %c0_i32_0 = arith.constant 0 : i32
    %c0_i32_1 = arith.constant 0 : i32
    return %c0_i32, %c0_i32_0 : i32, i32
  }
  func.func @transform_4(%arg0: i32) -> (i32, i32) {
    %c0_i32 = arith.constant 0 : i32
    %c0_i32_0 = arith.constant 0 : i32
    %c0_i32_1 = arith.constant 0 : i32
    return %c0_i32, %c0_i32_0 : i32, i32
  }
  func.func @transform_5(%arg0: i32) -> (i32, i32) {
    %c0_i32 = arith.constant 0 : i32
    %c0_i32_0 = arith.constant 0 : i32
    %c0_i32_1 = arith.constant 0 : i32
    return %c0_i32, %c0_i32_0 : i32, i32
  }
  func.func @transform_6(%arg0: i32) -> (i32, i32) {
    %c0_i32 = arith.constant 0 : i32
    %c0_i32_0 = arith.constant 0 : i32
    %c0_i32_1 = arith.constant 0 : i32
    return %c0_i32, %c0_i32_0 : i32, i32
  }
  func.func @transform_7(%arg0: i32) -> (i32, i32) {
    %c0_i32 = arith.constant 0 : i32
    %c0_i32_0 = arith.constant 0 : i32
    %c0_i32_1 = arith.constant 0 : i32
    return %c0_i32, %c0_i32_0 : i32, i32
  }
  func.func @transform_8(%arg0: i32) -> (i32, i32) {
    %c0_i32 = arith.constant 0 : i32
    %c0_i32_0 = arith.constant 0 : i32
    %c0_i32_1 = arith.constant 0 : i32
    return %c0_i32, %c0_i32_0 : i32, i32
  }
  func.func @transform_9(%arg0: i32) -> (i32, i32) {
    %c0_i32 = arith.constant 0 : i32
    %c0_i32_0 = arith.constant 0 : i32
    %c0_i32_1 = arith.constant 0 : i32
    return %c0_i32, %c0_i32_0 : i32, i32
  }
  func.func @transform_10(%arg0: i32) -> (i32, i32) {
    %c0_i32 = arith.constant 0 : i32
    %c0_i32_0 = arith.constant 0 : i32
    return %arg0, %c0_i32 : i32, i32
  }
}

</mosaic_0001>

<llo_original>
// kernel: attention_pool2d.1
$region0: #{attention_pool2d.1}
  #allocation0 [shape = 'u32[]', space=smem, size = 0x4, offset = 0x4, fixed_abs, tag = 'smem constant byte address 0x4 - core index']
  #allocation1 [shape = 'u32[72,128]{1,0:T(1,128)}', space=vmem, size = 0x9000, scoped, tag = 'internal scratch']
  %s0 = inlined_call_operand.vmem [shape: bf16[16,16,64], index: 0, kind: input, shape index: {}]
  %s1 = inlined_call_operand.vmem [shape: bf16[64,64], index: 1, kind: input, shape index: {}]
  %s2 = inlined_call_operand.vmem [shape: bf16[64,128], index: 2, kind: input, shape index: {}]
  %s3 = inlined_call_operand.vmem [shape: bf16[64,128], index: 3, kind: input, shape index: {}]
  %s4 = inlined_call_operand.vmem [shape: f32[1,64], index: 4, kind: input, shape index: {}]
  %s5 = inlined_call_operand.vmem [shape: f32[1,128], index: 5, kind: input, shape index: {}]
  %s6 = inlined_call_operand.vmem [shape: f32[16,128], index: 6, kind: input, shape index: {}]
  %s7 = inlined_call_operand.vmem [shape: f32[1,128], index: 7, kind: input, shape index: {}]
  %s8 = inlined_call_operand.vmem [shape: f32[64,4], index: 8, kind: input, shape index: {}]
  %s9 = inlined_call_operand.vmem [shape: bf16[4,64], index: 9, kind: input, shape index: {}]
  %s10 = inlined_call_operand.hbm [shape: f32[16,128], index: 10, kind: output, shape index: {}]
  %s11 = sld [smem:[#allocation0]]
  $region73: #{attention_pool2d.1} parent=0
    _
  %s13 = ssub.s32 1, %s11
  %s14 = scalar_select 0, %s13, %s11
  $region1: #{attention_pool2d.1} parent=0
    #allocation2 [shape = 'u8[8192]{0}', space=vmem, size = 0x2000, scoped, tag = 'output window, operand 0']
    #allocation3 [shape = 's32[2]{0}', space=sflag, size = 0x8, scoped, tag = 'scoped memory for attention_pool2d.1']
    %15 = vsyncpa [#allocation3], 0
    %s16 = scalar_lea.sflag [#allocation3], 1
    %17 = vsyncpa %s16, 0
    loop: start=0, step=1, limit=4
    $region2: #{attention_pool2d.1} parent=1 // loop_pre_header
      _
    $region3: #{attention_pool2d.1} parent=1 // loop_header
      %s19 = sphi 0, %s23
      %p20 = scmp.ge.s32.totalorder %s19, 4
      %s29 = sphi 0, %s31
      %s32 = sphi 0, %s29
      %s33 = sphi 0, %s32
      %s49 = sphi 0, %s33
      %s53 = sphi 0, %s53
      %s55 = sphi 0, %s53
      %s56 = sphi 0, %s55
      %s70 = sphi 0, %s56
      %s74 = sphi 0, %s74
      %s76 = sphi 0, %s74
      %s77 = sphi 0, %s76
      %s91 = sphi 0, %s77
      %s95 = sphi 0, %s95
      %s97 = sphi 0, %s95
      %s98 = sphi 0, %s97
      %s112 = sphi 0, %s98
      %s116 = sphi 0, %s116
      %s118 = sphi 0, %s116
      %s119 = sphi 0, %s118
      %s133 = sphi 0, %s119
      %s137 = sphi 0, %s137
      %s139 = sphi 0, %s137
      %s140 = sphi 0, %s139
      %s154 = sphi 0, %s140
      %s158 = sphi 0, %s158
      %s160 = sphi 0, %s158
      %s161 = sphi 0, %s160
      %s175 = sphi 0, %s161
      %s179 = sphi 0, %s179
      %s181 = sphi 0, %s179
      %s182 = sphi 0, %s181
      %s196 = sphi 0, %s182
      %s200 = sphi 0, %s200
      %s202 = sphi 0, %s200
      %s203 = sphi 0, %s202
      %s217 = sphi 0, %s203
      %s221 = sphi 0, %s221
      %s223 = sphi 0, %s221
      %s224 = sphi 0, %s223
      %s238 = sphi 0, %s224
      %s244 = sphi 0, %s246
      %s247 = sphi 0, %s244
      %s248 = sphi 0, %s247
      %s264 = sphi 0, %s248
    $region4: #{attention_pool2d.1} parent=1 // loop_header_branch
      %22 = sbr.rel (%p20) target = $region8
    $region5: #{attention_pool2d.1} parent=1 // loop_body
      %s24 = ssub.s32 %s19, 1
      %s25 = ssub.s32 %s19, 2
      %s26 = sadd.s32 %s19, 1
      %s27 = ssub.s32 %s19, %s26
      %p28 = scmp.eq.s32.totalorder %s27, 0
      %s30 = sadd.s32 %s29, 1
      %s31 = scalar_select %p28, %s29, %s30
      %p34 = pneg %p28
      %p35 = scmp.eq.s32.totalorder %s19, 1
      %p36 = por %p34, %p35
      %p37 = scmp.ne.s32.totalorder %s29, %s32
      %p38 = scmp.eq.s32.totalorder %s19, 0
      %p39 = por %p37, %p38
      %p40 = scmp.ne.s32.totalorder %s29, %s32
      %p41 = scmp.eq.s32.totalorder %s24, 1
      %p42 = por %p40, %p41
      %p43 = scmp.ne.s32.totalorder %s32, %s33
      %p44 = scmp.eq.s32.totalorder %s24, 0
      %p45 = por %p43, %p44
      %p46 = scmp.ne.s32.totalorder %s32, %s33
      %p47 = scmp.eq.s32.totalorder %s25, 1
      %p48 = por %p46, %p47
      %p50 = scmp.ne.s32.totalorder %s33, %s49
      %p51 = scmp.eq.s32.totalorder %s25, 0
      %p52 = por %p50, %p51
      %s54 = sadd.s32 %s53, 1
      %p57 = scmp.eq.s32.totalorder %s19, 1
      %p58 = scmp.ne.s32.totalorder %s53, %s55
      %p59 = scmp.eq.s32.totalorder %s19, 0
      %p60 = por %p58, %p59
      %p61 = scmp.ne.s32.totalorder %s53, %s55
      %p62 = scmp.eq.s32.totalorder %s24, 1
      %p63 = por %p61, %p62
      %p64 = scmp.ne.s32.totalorder %s55, %s56
      %p65 = scmp.eq.s32.totalorder %s24, 0
      %p66 = por %p64, %p65
      %p67 = scmp.ne.s32.totalorder %s55, %s56
      %p68 = scmp.eq.s32.totalorder %s25, 1
      %p69 = por %p67, %p68
      %p71 = scmp.ne.s32.totalorder %s56, %s70
      %p72 = scmp.eq.s32.totalorder %s25, 0
      %p73 = por %p71, %p72
      %s75 = sadd.s32 %s74, 1
      %p78 = scmp.eq.s32.totalorder %s19, 1
      %p79 = scmp.ne.s32.totalorder %s74, %s76
      %p80 = scmp.eq.s32.totalorder %s19, 0
      %p81 = por %p79, %p80
      %p82 = scmp.ne.s32.totalorder %s74, %s76
      %p83 = scmp.eq.s32.totalorder %s24, 1
      %p84 = por %p82, %p83
      %p85 = scmp.ne.s32.totalorder %s76, %s77
      %p86 = scmp.eq.s32.totalorder %s24, 0
      %p87 = por %p85, %p86
      %p88 = scmp.ne.s32.totalorder %s76, %s77
      %p89 = scmp.eq.s32.totalorder %s25, 1
      %p90 = por %p88, %p89
      %p92 = scmp.ne.s32.totalorder %s77, %s91
      %p93 = scmp.eq.s32.totalorder %s25, 0
      %p94 = por %p92, %p93
      %s96 = sadd.s32 %s95, 1
      %p99 = scmp.eq.s32.totalorder %s19, 1
      %p100 = scmp.ne.s32.totalorder %s95, %s97
      %p101 = scmp.eq.s32.totalorder %s19, 0
      %p102 = por %p100, %p101
      %p103 = scmp.ne.s32.totalorder %s95, %s97
      %p104 = scmp.eq.s32.totalorder %s24, 1
      %p105 = por %p103, %p104
      %p106 = scmp.ne.s32.totalorder %s97, %s98
      %p107 = scmp.eq.s32.totalorder %s24, 0
      %p108 = por %p106, %p107
      %p109 = scmp.ne.s32.totalorder %s97, %s98
      %p110 = scmp.eq.s32.totalorder %s25, 1
      %p111 = por %p109, %p110
      %p113 = scmp.ne.s32.totalorder %s98, %s112
      %p114 = scmp.eq.s32.totalorder %s25, 0
      %p115 = por %p113, %p114
      %s117 = sadd.s32 %s116, 1
      %p120 = scmp.eq.s32.totalorder %s19, 1
      %p121 = scmp.ne.s32.totalorder %s116, %s118
      %p122 = scmp.eq.s32.totalorder %s19, 0
      %p123 = por %p121, %p122
      %p124 = scmp.ne.s32.totalorder %s116, %s118
      %p125 = scmp.eq.s32.totalorder %s24, 1
      %p126 = por %p124, %p125
      %p127 = scmp.ne.s32.totalorder %s118, %s119
      %p128 = scmp.eq.s32.totalorder %s24, 0
      %p129 = por %p127, %p128
      %p130 = scmp.ne.s32.totalorder %s118, %s119
      %p131 = scmp.eq.s32.totalorder %s25, 1
      %p132 = por %p130, %p131
      %p134 = scmp.ne.s32.totalorder %s119, %s133
      %p135 = scmp.eq.s32.totalorder %s25, 0
      %p136 = por %p134, %p135
      %s138 = sadd.s32 %s137, 1
      %p141 = scmp.eq.s32.totalorder %s19, 1
      %p142 = scmp.ne.s32.totalorder %s137, %s139
      %p143 = scmp.eq.s32.totalorder %s19, 0
      %p144 = por %p142, %p143
      %p145 = scmp.ne.s32.totalorder %s137, %s139
      %p146 = scmp.eq.s32.totalorder %s24, 1
      %p147 = por %p145, %p146
      %p148 = scmp.ne.s32.totalorder %s139, %s140
      %p149 = scmp.eq.s32.totalorder %s24, 0
      %p150 = por %p148, %p149
      %p151 = scmp.ne.s32.totalorder %s139, %s140
      %p152 = scmp.eq.s32.totalorder %s25, 1
      %p153 = por %p151, %p152
      %p155 = scmp.ne.s32.totalorder %s140, %s154
      %p156 = scmp.eq.s32.totalorder %s25, 0
      %p157 = por %p155, %p156
      %s159 = sadd.s32 %s158, 1
      %p162 = scmp.eq.s32.totalorder %s19, 1
      %p163 = scmp.ne.s32.totalorder %s158, %s160
      %p164 = scmp.eq.s32.totalorder %s19, 0
      %p165 = por %p163, %p164
      %p166 = scmp.ne.s32.totalorder %s158, %s160
      %p167 = scmp.eq.s32.totalorder %s24, 1
      %p168 = por %p166, %p167
      %p169 = scmp.ne.s32.totalorder %s160, %s161
      %p170 = scmp.eq.s32.totalorder %s24, 0
      %p171 = por %p169, %p170
      %p172 = scmp.ne.s32.totalorder %s160, %s161
      %p173 = scmp.eq.s32.totalorder %s25, 1
      %p174 = por %p172, %p173
      %p176 = scmp.ne.s32.totalorder %s161, %s175
      %p177 = scmp.eq.s32.totalorder %s25, 0
      %p178 = por %p176, %p177
      %s180 = sadd.s32 %s179, 1
      %p183 = scmp.eq.s32.totalorder %s19, 1
      %p184 = scmp.ne.s32.totalorder %s179, %s181
      %p185 = scmp.eq.s32.totalorder %s19, 0
      %p186 = por %p184, %p185
      %p187 = scmp.ne.s32.totalorder %s179, %s181
      %p188 = scmp.eq.s32.totalorder %s24, 1
      %p189 = por %p187, %p188
      %p190 = scmp.ne.s32.totalorder %s181, %s182
      %p191 = scmp.eq.s32.totalorder %s24, 0
      %p192 = por %p190, %p191
      %p193 = scmp.ne.s32.totalorder %s181, %s182
      %p194 = scmp.eq.s32.totalorder %s25, 1
      %p195 = por %p193, %p194
      %p197 = scmp.ne.s32.totalorder %s182, %s196
      %p198 = scmp.eq.s32.totalorder %s25, 0
      %p199 = por %p197, %p198
      %s201 = sadd.s32 %s200, 1
      %p204 = scmp.eq.s32.totalorder %s19, 1
      %p205 = scmp.ne.s32.totalorder %s200, %s202
      %p206 = scmp.eq.s32.totalorder %s19, 0
      %p207 = por %p205, %p206
      %p208 = scmp.ne.s32.totalorder %s200, %s202
      %p209 = scmp.eq.s32.totalorder %s24, 1
      %p210 = por %p208, %p209
      %p211 = scmp.ne.s32.totalorder %s202, %s203
      %p212 = scmp.eq.s32.totalorder %s24, 0
      %p213 = por %p211, %p212
      %p214 = scmp.ne.s32.totalorder %s202, %s203
      %p215 = scmp.eq.s32.totalorder %s25, 1
      %p216 = por %p214, %p215
      %p218 = scmp.ne.s32.totalorder %s203, %s217
      %p219 = scmp.eq.s32.totalorder %s25, 0
      %p220 = por %p218, %p219
      %s222 = sadd.s32 %s221, 1
      %p225 = scmp.eq.s32.totalorder %s19, 1
      %p226 = scmp.ne.s32.totalorder %s221, %s223
      %p227 = scmp.eq.s32.totalorder %s19, 0
      %p228 = por %p226, %p227
      %p229 = scmp.ne.s32.totalorder %s221, %s223
      %p230 = scmp.eq.s32.totalorder %s24, 1
      %p231 = por %p229, %p230
      %p232 = scmp.ne.s32.totalorder %s223, %s224
      %p233 = scmp.eq.s32.totalorder %s24, 0
      %p234 = por %p232, %p233
      %p235 = scmp.ne.s32.totalorder %s223, %s224
      %p236 = scmp.eq.s32.totalorder %s25, 1
      %p237 = por %p235, %p236
      %p239 = scmp.ne.s32.totalorder %s224, %s238
      %p240 = scmp.eq.s32.totalorder %s25, 0
      %p241 = por %p239, %p240
      %s242 = ssub.s32 %s19, %s26
      %p243 = scmp.eq.s32.totalorder %s242, 0
      %s245 = sadd.s32 %s244, 1
      %s246 = scalar_select %p243, %s244, %s245
      %p249 = pneg %p243
      %p250 = scmp.eq.s32.totalorder %s19, 1
      %p251 = por %p249, %p250
      %p252 = scmp.ne.s32.totalorder %s244, %s247
      %p253 = scmp.eq.s32.totalorder %s19, 0
      %p254 = por %p252, %p253
      %p255 = scmp.ne.s32.totalorder %s244, %s247
      %p256 = scmp.eq.s32.totalorder %s24, 1
      %p257 = por %p255, %p256
      %p258 = scmp.ne.s32.totalorder %s247, %s248
      %p259 = scmp.eq.s32.totalorder %s24, 0
      %p260 = por %p258, %p259
      %p261 = scmp.ne.s32.totalorder %s247, %s248
      %p262 = scmp.eq.s32.totalorder %s25, 1
      %p263 = por %p261, %p262
      %p265 = scmp.ne.s32.totalorder %s248, %s264
      %p266 = scmp.eq.s32.totalorder %s25, 0
      %p267 = por %p265, %p266
      %p268 = scmp.le.s32.totalorder 1, %s19
      %p269 = scmp.lt.s32.totalorder %s19, 3
      %p270 = pnand %p268, %p269
      %p271 = pneg %p270
      // Predicated region
      $region9: #{attention_pool2d.1} parent=5 // pred_check
        _
      $region10: #{attention_pool2d.1} parent=5 // pred_check_branch
        %273 = sbr.rel (%p270) target = $region12
      $region11: #{attention_pool2d.1} parent=5 // pred_region
        %s274 = ssub.s32 %s19, 1
        // Predicated region
        $region13: #{attention_pool2d.1} parent=11 // pred_check
          %p275 = pneg %p66
        $region14: #{attention_pool2d.1} parent=11 // pred_check_branch
          %277 = sbr.rel (%p275) target = $region16
        $region15: #{attention_pool2d.1} parent=11 // pred_region
          _
        $region16: #{attention_pool2d.1} parent=11 // pred_fallthru
          _
        // Predicated region
        $region17: #{attention_pool2d.1} parent=11 // pred_check
          %p278 = pneg %p87
        $region18: #{attention_pool2d.1} parent=11 // pred_check_branch
          %280 = sbr.rel (%p278) target = $region20
        $region19: #{attention_pool2d.1} parent=11 // pred_region
          _
        $region20: #{attention_pool2d.1} parent=11 // pred_fallthru
          _
        // Predicated region
        $region21: #{attention_pool2d.1} parent=11 // pred_check
          %p281 = pneg %p108
        $region22: #{attention_pool2d.1} parent=11 // pred_check_branch
          %283 = sbr.rel (%p281) target = $region24
        $region23: #{attention_pool2d.1} parent=11 // pred_region
          _
        $region24: #{attention_pool2d.1} parent=11 // pred_fallthru
          _
        // Predicated region
        $region25: #{attention_pool2d.1} parent=11 // pred_check
          %p284 = pneg %p129
        $region26: #{attention_pool2d.1} parent=11 // pred_check_branch
          %286 = sbr.rel (%p284) target = $region28
        $region27: #{attention_pool2d.1} parent=11 // pred_region
          _
        $region28: #{attention_pool2d.1} parent=11 // pred_fallthru
          _
        // Predicated region
        $region29: #{attention_pool2d.1} parent=11 // pred_check
          %p287 = pneg %p150
        $region30: #{attention_pool2d.1} parent=11 // pred_check_branch
          %289 = sbr.rel (%p287) target = $region32
        $region31: #{attention_pool2d.1} parent=11 // pred_region
          _
        $region32: #{attention_pool2d.1} parent=11 // pred_fallthru
          _
        // Predicated region
        $region33: #{attention_pool2d.1} parent=11 // pred_check
          %p290 = pneg %p171
        $region34: #{attention_pool2d.1} parent=11 // pred_check_branch
          %292 = sbr.rel (%p290) target = $region36
        $region35: #{attention_pool2d.1} parent=11 // pred_region
          _
        $region36: #{attention_pool2d.1} parent=11 // pred_fallthru
          _
        // Predicated region
        $region37: #{attention_pool2d.1} parent=11 // pred_check
          %p293 = pneg %p192
        $region38: #{attention_pool2d.1} parent=11 // pred_check_branch
          %295 = sbr.rel (%p293) target = $region40
        $region39: #{attention_pool2d.1} parent=11 // pred_region
          _
        $region40: #{attention_pool2d.1} parent=11 // pred_fallthru
          _
        // Predicated region
        $region41: #{attention_pool2d.1} parent=11 // pred_check
          %p296 = pneg %p213
        $region42: #{attention_pool2d.1} parent=11 // pred_check_branch
          %298 = sbr.rel (%p296) target = $region44
        $region43: #{attention_pool2d.1} parent=11 // pred_region
          _
        $region44: #{attention_pool2d.1} parent=11 // pred_fallthru
          _
        // Predicated region
        $region45: #{attention_pool2d.1} parent=11 // pred_check
          %p299 = pneg %p234
        $region46: #{attention_pool2d.1} parent=11 // pred_check_branch
          %301 = sbr.rel (%p299) target = $region48
        $region47: #{attention_pool2d.1} parent=11 // pred_region
          _
        $region48: #{attention_pool2d.1} parent=11 // pred_fallthru
          _
      $region12: #{attention_pool2d.1} parent=5 // pred_fallthru
        _
      %p302 = scmp.lt.s32.totalorder %s19, 2
      // Predicated region
      $region49: #{attention_pool2d.1} parent=5 // pred_check
        %p303 = pneg %p302
      $region50: #{attention_pool2d.1} parent=5 // pred_check_branch
        %305 = sbr.rel (%p303) target = $region52
      $region51: #{attention_pool2d.1} parent=5 // pred_region
        // Predicated region
        $region53: #{attention_pool2d.1} parent=51 // pred_check
          %p306 = pneg %p39
        $region54: #{attention_pool2d.1} parent=51 // pred_check_branch
          %308 = sbr.rel (%p306) target = $region56
        $region55: #{attention_pool2d.1} parent=51 // pred_region
          %s309 = smul.u32 8, %s19
          %p310 = scmp.lt.s32.totalorder %s309, 15
          %s311 = scalar_select %p310, %s309, 15
          %s312 = smul.addr %s311, 2
          %s313 = smul.addr %s312, 4
          %s314 = scalar_lea.vmem %s0, %s313
          %s315 = smul.u32 8, %s19
        $region56: #{attention_pool2d.1} parent=51 // pred_fallthru
          _
      $region52: #{attention_pool2d.1} parent=5 // pred_fallthru
        _
      %p316 = scmp.le.s32.totalorder 1, %s19
      %p317 = scmp.lt.s32.totalorder %s19, 3
      %p318 = pnand %p316, %p317
      %p319 = pneg %p318
      // Predicated region
      $region57: #{attention_pool2d.1} parent=5 // pred_check
        _
      $region58: #{attention_pool2d.1} parent=5 // pred_check_branch
        %321 = sbr.rel (%p318) target = $region60
      $region59: #{attention_pool2d.1} parent=5 // pred_region
        %s322 = ssub.s32 %s19, 1
        %s323 = smul.u32 8, %s24
        %p324 = scmp.lt.s32.totalorder %s323, 15
        %s325 = scalar_select %p324, %s323, 15
        %s326 = smul.addr %s325, 2
        %s327 = smul.addr %s326, 4
        %s328 = scalar_lea.vmem %s0, %s327
        %p329 = pneg %p45
        %p330 = pneg %p42
        %p331 = pneg %p66
        %p332 = pneg %p63
        %p333 = pneg %p87
        %p334 = pneg %p84
        %p335 = pneg %p108
        %p336 = pneg %p105
        %p337 = pneg %p129
        %p338 = pneg %p126
        %p339 = pneg %p150
        %p340 = pneg %p147
        %p341 = pneg %p171
        %p342 = pneg %p168
        %p343 = pneg %p192
        %p344 = pneg %p189
        %p345 = pneg %p213
        %p346 = pneg %p210
        %p347 = pneg %p234
        %p348 = pneg %p231
        %p349 = pneg %p260
        %p350 = pneg %p257
        %s351 = sand.u32 %s247, 1
        %s352 = scalar_lea.sflag [#allocation3], %s351
        %s353 = sand.u32 %s247, 1
        %s354 = smul.addr %s353, 8
        %s355 = scalar_lea.vmem [#allocation2], %s354
        %s356 = smul.u32 8, %s24
        %p357 = scmp.lt.s32.totalorder %s356, 15
        %s358 = scalar_select %p357, %s356, 15
        %s359 = smul.addr %s358, 2
        %s360 = smul.addr %s359, 4
        %s361 = scalar_lea.vmem %s0, %s360
        %s362 = smul.u32 8, %s24
        %v364 = vld [vmem:[%s361] sm:$0xf]
        %v365 = vld [vmem:[%s361 + $0x4] sm:$0xf]
        %v366 = vld [vmem:[%s361 + $0x8] sm:$0xf]
        %v367 = vld [vmem:[%s361 + $0xc] sm:$0xf]
        %v368 = vld [vmem:[%s361 + $0x10] sm:$0xf]
        %v369 = vld [vmem:[%s361 + $0x14] sm:$0xf]
        %v370 = vld [vmem:[%s361 + $0x18] sm:$0xf]
        %v371 = vld [vmem:[%s361 + $0x1c] sm:$0xf]
        %v372 = vld [vmem:[%s361 + $0x20] sm:$0xf]
        %v373 = vld [vmem:[%s361 + $0x24] sm:$0xf]
        %v374 = vld [vmem:[%s361 + $0x28] sm:$0xf]
        %v375 = vld [vmem:[%s361 + $0x2c] sm:$0xf]
        %v376 = vld [vmem:[%s361 + $0x30] sm:$0xf]
        %v377 = vld [vmem:[%s361 + $0x34] sm:$0xf]
        %v378 = vld [vmem:[%s361 + $0x38] sm:$0xf]
        %v379 = vld [vmem:[%s361 + $0x3c] sm:$0xf]
        %v380 = vld [vmem:[%s2] sm:$0xf]
        %v381 = vld [vmem:[%s2 + $0x4] sm:$0xf]
        %v382 = vld [vmem:[%s2 + $0x8] sm:$0xf]
        %v383 = vld [vmem:[%s2 + $0xc] sm:$0xf]
        %v384 = vld [vmem:[%s2 + $0x10] sm:$0xf]
        %v385 = vld [vmem:[%s2 + $0x14] sm:$0xf]
        %v386 = vld [vmem:[%s2 + $0x18] sm:$0xf]
        %v387 = vld [vmem:[%s2 + $0x1c] sm:$0xf]
        %v404 = vunpack.c.l.b16 %v364
        %v405 = vunpack.c.l.b16 %v365
        %v406 = vunpack.c.l.b16 %v366
        %v407 = vunpack.c.l.b16 %v367
        %v408 = vunpack.c.l.b16 %v368
        %v409 = vunpack.c.l.b16 %v369
        %v410 = vunpack.c.l.b16 %v370
        %v411 = vunpack.c.l.b16 %v371
        %v412 = vunpack.c.l.b16 %v372
        %v413 = vunpack.c.l.b16 %v373
        %v414 = vunpack.c.l.b16 %v374
        %v415 = vunpack.c.l.b16 %v375
        %v416 = vunpack.c.l.b16 %v376
        %v417 = vunpack.c.l.b16 %v377
        %v418 = vunpack.c.l.b16 %v378
        %v419 = vunpack.c.l.b16 %v379
        %v420 = vpack.c.b16 %v405, %v404
        %v421 = vpack.c.b16 %v407, %v406
        %v422 = vpack.c.b16 %v409, %v408
        %v423 = vpack.c.b16 %v411, %v410
        %v424 = vpack.c.b16 %v413, %v412
        %v425 = vpack.c.b16 %v415, %v414
        %v426 = vpack.c.b16 %v417, %v416
        %v427 = vpack.c.b16 %v419, %v418
        %v436 = vunpack.c.l.b16 %v380
        %v437 = vunpack.c.l.b16 %v381
        %v438 = vunpack.c.l.b16 %v382
        %v439 = vunpack.c.l.b16 %v383
        %v440 = vunpack.c.l.b16 %v384
        %v441 = vunpack.c.l.b16 %v385
        %v442 = vunpack.c.l.b16 %v386
        %v443 = vunpack.c.l.b16 %v387
        %v444 = vpack.c.b16 %v437, %v436
        %v445 = vpack.c.b16 %v439, %v438
        %v446 = vpack.c.b16 %v441, %v440
        %v447 = vpack.c.b16 %v443, %v442
        %vm452 = vcmask 523264
        %v454 = vsel %vm452, %v420, 0
        %v457 = vsel %vm452, %v421, 0
        %v460 = vsel %vm452, %v422, 0
        %v463 = vsel %vm452, %v423, 0
        %v466 = vsel %vm452, %v424, 0
        %v469 = vsel %vm452, %v425, 0
        %v472 = vsel %vm452, %v426, 0
        %v475 = vsel %vm452, %v427, 0
        %477 = vmatpush.bf16.msra.mxu0 0
        %478 = vmatpush.bf16.msra.mxu0 0
        %479 = vmatpush.bf16.msra.mxu0 0
        %480 = vmatpush.bf16.msra.mxu0 0
        %481 = vmatpush.bf16.msra.mxu0 %v447
        %482 = vmatpush.bf16.msra.mxu0 %v446
        %483 = vmatpush.bf16.msra.mxu0 %v445
        %484 = vmatpush.bf16.msra.mxu0 %v444
        %485 = vmatmul.bf16.gmra.mxu0 %v454
        %v486 = vpop.f32.mrf.mxu0
        %v487 = vadd.f32 0.0, %v486
        %v488 = vpop.f32.mrf.mxu0
        %v489 = vadd.f32 0.0, %v488
        %490 = vmatmul.bf16.gmra.mxu0 %v457
        %v491 = vpop.f32.mrf.mxu0
        %v492 = vadd.f32 0.0, %v491
        %v493 = vpop.f32.mrf.mxu0
        %v494 = vadd.f32 0.0, %v493
        %495 = vmatmul.bf16.gmra.mxu0 %v460
        %v496 = vpop.f32.mrf.mxu0
        %v497 = vadd.f32 0.0, %v496
        %v498 = vpop.f32.mrf.mxu0
        %v499 = vadd.f32 0.0, %v498
        %500 = vmatmul.bf16.gmra.mxu0 %v463
        %v501 = vpop.f32.mrf.mxu0
        %v502 = vadd.f32 0.0, %v501
        %v503 = vpop.f32.mrf.mxu0
        %v504 = vadd.f32 0.0, %v503
        %505 = vmatmul.bf16.gmra.mxu0 %v466
        %v506 = vpop.f32.mrf.mxu0
        %v507 = vadd.f32 0.0, %v506
        %v508 = vpop.f32.mrf.mxu0
        %v509 = vadd.f32 0.0, %v508
        %510 = vmatmul.bf16.gmra.mxu0 %v469
        %v511 = vpop.f32.mrf.mxu0
        %v512 = vadd.f32 0.0, %v511
        %v513 = vpop.f32.mrf.mxu0
        %v514 = vadd.f32 0.0, %v513
        %515 = vmatmul.bf16.gmra.mxu0 %v472
        %v516 = vpop.f32.mrf.mxu0
        %v517 = vadd.f32 0.0, %v516
        %v518 = vpop.f32.mrf.mxu0
        %v519 = vadd.f32 0.0, %v518
        %520 = vmatmul.bf16.gmra.mxu0 %v475
        %v521 = vpop.f32.mrf.mxu0
        %v522 = vadd.f32 0.0, %v521
        %v523 = vpop.f32.mrf.mxu0
        %v524 = vadd.f32 0.0, %v523
        %525 = vdwg.mxu0
        %v526 = vld [vmem:[%s6] sm:$0xff]
        %v527 = vld [vmem:[%s6 + $0x8] sm:$0xff]
        %v528 = vadd.f32 %v487, %v526
        %v529 = vadd.f32 %v489, %v527
        %v530 = vadd.f32 %v492, %v526
        %v531 = vadd.f32 %v494, %v527
        %v532 = vadd.f32 %v497, %v526
        %v533 = vadd.f32 %v499, %v527
        %v534 = vadd.f32 %v502, %v526
        %v535 = vadd.f32 %v504, %v527
        %v536 = vadd.f32 %v507, %v526
        %v537 = vadd.f32 %v509, %v527
        %v538 = vadd.f32 %v512, %v526
        %v539 = vadd.f32 %v514, %v527
        %v540 = vadd.f32 %v517, %v526
        %v541 = vadd.f32 %v519, %v527
        %v542 = vadd.f32 %v522, %v526
        %v543 = vadd.f32 %v524, %v527
        %v544 = vadd.f32 %v487, %v489
        %v545 = vrot.slane %v544, 4
        %v546 = vadd.f32 %v544, %v545
        %v547 = vrot.slane %v546, 2
        %v548 = vadd.f32 %v546, %v547
        %v549 = vrot.slane %v548, 1
        %v550 = vadd.f32 %v548, %v549
        %v551 = vadd.f32 %v492, %v494
        %v552 = vrot.slane %v551, 4
        %v553 = vadd.f32 %v551, %v552
        %v554 = vrot.slane %v553, 2
        %v555 = vadd.f32 %v553, %v554
        %v556 = vrot.slane %v555, 1
        %v557 = vadd.f32 %v555, %v556
        %v558 = vadd.f32 %v497, %v499
        %v559 = vrot.slane %v558, 4
        %v560 = vadd.f32 %v558, %v559
        %v561 = vrot.slane %v560, 2
        %v562 = vadd.f32 %v560, %v561
        %v563 = vrot.slane %v562, 1
        %v564 = vadd.f32 %v562, %v563
        %v565 = vadd.f32 %v502, %v504
        %v566 = vrot.slane %v565, 4
        %v567 = vadd.f32 %v565, %v566
        %v568 = vrot.slane %v567, 2
        %v569 = vadd.f32 %v567, %v568
        %v570 = vrot.slane %v569, 1
        %v571 = vadd.f32 %v569, %v570
        %v572 = vadd.f32 %v507, %v509
        %v573 = vrot.slane %v572, 4
        %v574 = vadd.f32 %v572, %v573
        %v575 = vrot.slane %v574, 2
        %v576 = vadd.f32 %v574, %v575
        %v577 = vrot.slane %v576, 1
        %v578 = vadd.f32 %v576, %v577
        %v579 = vadd.f32 %v512, %v514
        %v580 = vrot.slane %v579, 4
        %v581 = vadd.f32 %v579, %v580
        %v582 = vrot.slane %v581, 2
        %v583 = vadd.f32 %v581, %v582
        %v584 = vrot.slane %v583, 1
        %v585 = vadd.f32 %v583, %v584
        %v586 = vadd.f32 %v517, %v519
        %v587 = vrot.slane %v586, 4
        %v588 = vadd.f32 %v586, %v587
        %v589 = vrot.slane %v588, 2
        %v590 = vadd.f32 %v588, %v589
        %v591 = vrot.slane %v590, 1
        %v592 = vadd.f32 %v590, %v591
        %v593 = vadd.f32 %v522, %v524
        %v594 = vrot.slane %v593, 4
        %v595 = vadd.f32 %v593, %v594
        %v596 = vrot.slane %v595, 2
        %v597 = vadd.f32 %v595, %v596
        %v598 = vrot.slane %v597, 1
        %v599 = vadd.f32 %v597, %v598
        %v600 = vmul.f32 %v550, 0.0625
        %v601 = vmul.f32 %v557, 0.0625
        %v602 = vmul.f32 %v564, 0.0625
        %v603 = vmul.f32 %v571, 0.0625
        %v604 = vmul.f32 %v578, 0.0625
        %v605 = vmul.f32 %v585, 0.0625
        %v606 = vmul.f32 %v592, 0.0625
        %v607 = vmul.f32 %v599, 0.0625
        %v608 = vld [vmem:[%s5] sm:$0x1]
        %v610 = vperm.slane %v608, 0
        %v612 = vadd.f32 %v600, %v610
        %v613 = vadd.f32 %v601, %v610
        %v614 = vadd.f32 %v602, %v610
        %v615 = vadd.f32 %v603, %v610
        %v616 = vadd.f32 %v604, %v610
        %v617 = vadd.f32 %v605, %v610
        %v618 = vadd.f32 %v606, %v610
        %v619 = vadd.f32 %v607, %v610
        %v620 = vunpack.c.l.bf16 %v364
        %v621 = vunpack.c.l.bf16 %v365
        %v622 = vunpack.c.l.bf16 %v366
        %v623 = vunpack.c.l.bf16 %v367
        %v624 = vunpack.c.l.bf16 %v368
        %v625 = vunpack.c.l.bf16 %v369
        %v626 = vunpack.c.l.bf16 %v370
        %v627 = vunpack.c.l.bf16 %v371
        %v628 = vunpack.c.l.bf16 %v372
        %v629 = vunpack.c.l.bf16 %v373
        %v630 = vunpack.c.l.bf16 %v374
        %v631 = vunpack.c.l.bf16 %v375
        %v632 = vunpack.c.l.bf16 %v376
        %v633 = vunpack.c.l.bf16 %v377
        %v634 = vunpack.c.l.bf16 %v378
        %v635 = vunpack.c.l.bf16 %v379
        %v636 = vsel %vm452, %v620, 0.0
        %v637 = vsel %vm452, %v621, 0.0
        %v638 = vadd.f32 %v636, %v637
        %v639 = vrot.slane %v638, 4
        %v640 = vadd.f32 %v638, %v639
        %v641 = vrot.slane %v640, 2
        %v642 = vadd.f32 %v640, %v641
        %v643 = vrot.slane %v642, 1
        %v644 = vadd.f32 %v642, %v643
        %v645 = vsel %vm452, %v622, 0.0
        %v646 = vsel %vm452, %v623, 0.0
        %v647 = vadd.f32 %v645, %v646
        %v648 = vrot.slane %v647, 4
        %v649 = vadd.f32 %v647, %v648
        %v650 = vrot.slane %v649, 2
        %v651 = vadd.f32 %v649, %v650
        %v652 = vrot.slane %v651, 1
        %v653 = vadd.f32 %v651, %v652
        %v654 = vsel %vm452, %v624, 0.0
        %v655 = vsel %vm452, %v625, 0.0
        %v656 = vadd.f32 %v654, %v655
        %v657 = vrot.slane %v656, 4
        %v658 = vadd.f32 %v656, %v657
        %v659 = vrot.slane %v658, 2
        %v660 = vadd.f32 %v658, %v659
        %v661 = vrot.slane %v660, 1
        %v662 = vadd.f32 %v660, %v661
        %v663 = vsel %vm452, %v626, 0.0
        %v664 = vsel %vm452, %v627, 0.0
        %v665 = vadd.f32 %v663, %v664
        %v666 = vrot.slane %v665, 4
        %v667 = vadd.f32 %v665, %v666
        %v668 = vrot.slane %v667, 2
        %v669 = vadd.f32 %v667, %v668
        %v670 = vrot.slane %v669, 1
        %v671 = vadd.f32 %v669, %v670
        %v672 = vsel %vm452, %v628, 0.0
        %v673 = vsel %vm452, %v629, 0.0
        %v674 = vadd.f32 %v672, %v673
        %v675 = vrot.slane %v674, 4
        %v676 = vadd.f32 %v674, %v675
        %v677 = vrot.slane %v676, 2
        %v678 = vadd.f32 %v676, %v677
        %v679 = vrot.slane %v678, 1
        %v680 = vadd.f32 %v678, %v679
        %v681 = vsel %vm452, %v630, 0.0
        %v682 = vsel %vm452, %v631, 0.0
        %v683 = vadd.f32 %v681, %v682
        %v684 = vrot.slane %v683, 4
        %v685 = vadd.f32 %v683, %v684
        %v686 = vrot.slane %v685, 2
        %v687 = vadd.f32 %v685, %v686
        %v688 = vrot.slane %v687, 1
        %v689 = vadd.f32 %v687, %v688
        %v690 = vsel %vm452, %v632, 0.0
        %v691 = vsel %vm452, %v633, 0.0
        %v692 = vadd.f32 %v690, %v691
        %v693 = vrot.slane %v692, 4
        %v694 = vadd.f32 %v692, %v693
        %v695 = vrot.slane %v694, 2
        %v696 = vadd.f32 %v694, %v695
        %v697 = vrot.slane %v696, 1
        %v698 = vadd.f32 %v696, %v697
        %v699 = vsel %vm452, %v634, 0.0
        %v700 = vsel %vm452, %v635, 0.0
        %v701 = vadd.f32 %v699, %v700
        %v702 = vrot.slane %v701, 4
        %v703 = vadd.f32 %v701, %v702
        %v704 = vrot.slane %v703, 2
        %v705 = vadd.f32 %v703, %v704
        %v706 = vrot.slane %v705, 1
        %v707 = vadd.f32 %v705, %v706
        %v708 = vmul.f32 %v644, 0.0625
        %v709 = vmul.f32 %v653, 0.0625
        %v710 = vmul.f32 %v662, 0.0625
        %v711 = vmul.f32 %v671, 0.0625
        %v712 = vmul.f32 %v680, 0.0625
        %v713 = vmul.f32 %v689, 0.0625
        %v714 = vmul.f32 %v698, 0.0625
        %v715 = vmul.f32 %v707, 0.0625
        %v716 = vpack.c.bf16 %v708, %v708
        %v717 = vpack.c.bf16 %v709, %v709
        %v718 = vpack.c.bf16 %v710, %v710
        %v719 = vpack.c.bf16 %v711, %v711
        %v720 = vpack.c.bf16 %v712, %v712
        %v721 = vpack.c.bf16 %v713, %v713
        %v722 = vpack.c.bf16 %v714, %v714
        %v723 = vpack.c.bf16 %v715, %v715
        %v724 = vld [vmem:[%s1] sm:$0xf]
        %v725 = vld [vmem:[%s1 + $0x4] sm:$0xf]
        %v726 = vld [vmem:[%s1 + $0x8] sm:$0xf]
        %v727 = vld [vmem:[%s1 + $0xc] sm:$0xf]
        %v728 = vld [vmem:[%s1 + $0x10] sm:$0xf]
        %v729 = vld [vmem:[%s1 + $0x14] sm:$0xf]
        %v730 = vld [vmem:[%s1 + $0x18] sm:$0xf]
        %v731 = vld [vmem:[%s1 + $0x1c] sm:$0xf]
        %v732 = vld [vmem:[%s4] sm:$0x1]
        %v734 = vperm.slane %v732, 0
        %v744 = vunpack.c.l.b16 %v716
        %v745 = vunpack.c.l.b16 %v717
        %v746 = vunpack.c.l.b16 %v718
        %v747 = vunpack.c.l.b16 %v719
        %v748 = vunpack.c.l.b16 %v720
        %v749 = vunpack.c.l.b16 %v721
        %v750 = vunpack.c.l.b16 %v722
        %v751 = vunpack.c.l.b16 %v723
        %vm752 = vcmask 1041409
        %v753 = vsel %vm752, %v745, %v744
        %vm754 = vcmask 1042434
        %v755 = vsel %vm754, %v746, %v753
        %vm756 = vcmask 1043459
        %v757 = vsel %vm756, %v747, %v755
        %vm758 = vcmask 1044484
        %v759 = vsel %vm758, %v748, %v757
        %vm760 = vcmask 1045509
        %v761 = vsel %vm760, %v749, %v759
        %vm762 = vcmask 1046534
        %v763 = vsel %vm762, %v750, %v761
        %vm764 = vcmask 1047559
        %v765 = vsel %vm764, %v751, %v763
        %v766 = vpack.c.b16 %v765, %v765
        %v775 = vunpack.c.l.b16 %v724
        %v776 = vunpack.c.l.b16 %v725
        %v777 = vunpack.c.l.b16 %v726
        %v778 = vunpack.c.l.b16 %v727
        %v779 = vunpack.c.l.b16 %v728
        %v780 = vunpack.c.l.b16 %v729
        %v781 = vunpack.c.l.b16 %v730
        %v782 = vunpack.c.l.b16 %v731
        %v783 = vpack.c.b16 %v776, %v775
        %v784 = vpack.c.b16 %v778, %v777
        %v785 = vpack.c.b16 %v780, %v779
        %v786 = vpack.c.b16 %v782, %v781
        %v792 = vsel %vm452, %v766, 0
        %794 = vmatpush.bf16.msra.mxu0 0
        %795 = vmatpush.bf16.msra.mxu0 0
        %796 = vmatpush.bf16.msra.mxu0 0
        %797 = vmatpush.bf16.msra.mxu0 0
        %798 = vmatpush.bf16.msra.mxu0 %v786
        %799 = vmatpush.bf16.msra.mxu0 %v785
        %800 = vmatpush.bf16.msra.mxu0 %v784
        %801 = vmatpush.bf16.msra.mxu0 %v783
        %802 = vmatmul.bf16.gmra.mxu0 %v792
        %v803 = vpop.f32.mrf.mxu0
        %v804 = vadd.f32 %v734, %v803
        %v805 = vpop.f32.mrf.mxu0
        %806 = vdwg.mxu0
        %v807 = vld [vmem:[%s8] sm:$0xff]
        %v808 = vld [vmem:[%s8 + $0x8] sm:$0xff]
        %v809 = vld [vmem:[%s8 + $0x10] sm:$0xff]
        %v810 = vld [vmem:[%s8 + $0x18] sm:$0xff]
        %v811 = vld [vmem:[%s8 + $0x20] sm:$0xff]
        %v812 = vld [vmem:[%s8 + $0x28] sm:$0xff]
        %v813 = vld [vmem:[%s8 + $0x30] sm:$0xff]
        %v814 = vld [vmem:[%s8 + $0x38] sm:$0xff]
        %v816 = vrot.slane %v804, 1
        %v817 = vrot.slane %v804, 2
        %v818 = vrot.slane %v804, 3
        %v819 = vrot.slane %v804, 4
        %v820 = vrot.slane %v804, 5
        %v821 = vrot.slane %v804, 6
        %v822 = vrot.slane %v804, 7
        %v823 = vperm.slane %v804, 0
        %v824 = vperm.slane %v816, 0
        %v825 = vperm.slane %v817, 0
        %v826 = vperm.slane %v818, 0
        %v827 = vperm.slane %v819, 0
        %v828 = vperm.slane %v820, 0
        %v829 = vperm.slane %v821, 0
        %v830 = vperm.slane %v822, 0
        %v839 = vmul.f32 %v823, %v528
        %v840 = vmul.f32 %v823, %v529
        %v841 = vmul.f32 %v824, %v530
        %v842 = vmul.f32 %v824, %v531
        %v843 = vmul.f32 %v825, %v532
        %v844 = vmul.f32 %v825, %v533
        %v845 = vmul.f32 %v826, %v534
        %v846 = vmul.f32 %v826, %v535
        %v847 = vmul.f32 %v827, %v536
        %v848 = vmul.f32 %v827, %v537
        %v849 = vmul.f32 %v828, %v538
        %v850 = vmul.f32 %v828, %v539
        %v851 = vmul.f32 %v829, %v540
        %v852 = vmul.f32 %v829, %v541
        %v853 = vmul.f32 %v830, %v542
        %v854 = vmul.f32 %v830, %v543
        %v856 = vsel %vm452, %v839, 0
        %v859 = vsel %vm452, %v840, 0
        %v862 = vsel %vm452, %v841, 0
        %v865 = vsel %vm452, %v842, 0
        %v868 = vsel %vm452, %v843, 0
        %v871 = vsel %vm452, %v844, 0
        %v874 = vsel %vm452, %v845, 0
        %v877 = vsel %vm452, %v846, 0
        %v880 = vsel %vm452, %v847, 0
        %v883 = vsel %vm452, %v848, 0
        %v886 = vsel %vm452, %v849, 0
        %v889 = vsel %vm452, %v850, 0
        %v892 = vsel %vm452, %v851, 0
        %v895 = vsel %vm452, %v852, 0
        %v898 = vsel %vm452, %v853, 0
        %v901 = vsel %vm452, %v854, 0
        %903 = vmatpush.msra.mxu0 0.0
        %904 = vmatpush.msra.mxu0 0.0
        %905 = vmatpush.msra.mxu0 0.0
        %906 = vmatpush.msra.mxu0 0.0
        %907 = vmatpush.msra.mxu0 0.0
        %908 = vmatpush.msra.mxu0 0.0
        %909 = vmatpush.msra.mxu0 0.0
        %910 = vmatpush.msra.mxu0 0.0
        %911 = vmatpush.msra.mxu0 %v814
        %912 = vmatpush.msra.mxu0 %v813
        %913 = vmatpush.msra.mxu0 %v812
        %914 = vmatpush.msra.mxu0 %v811
        %915 = vmatpush.msra.mxu0 %v810
        %916 = vmatpush.msra.mxu0 %v809
        %917 = vmatpush.msra.mxu0 %v808
        %918 = vmatpush.msra.mxu0 %v807
        %919 = vmatmul.f32.gmra.mxu0 %v856
        %v920 = vpop.f32.mrf.mxu0
        %v921 = vadd.f32 0.0, %v920
        %922 = vmatmul.f32.gmra.mxu0 %v859
        %v923 = vpop.f32.mrf.mxu0
        %v924 = vadd.f32 0.0, %v923
        %925 = vmatmul.f32.gmra.mxu0 %v862
        %v926 = vpop.f32.mrf.mxu0
        %v927 = vadd.f32 0.0, %v926
        %928 = vmatmul.f32.gmra.mxu0 %v865
        %v929 = vpop.f32.mrf.mxu0
        %v930 = vadd.f32 0.0, %v929
        %931 = vmatmul.f32.gmra.mxu0 %v868
        %v932 = vpop.f32.mrf.mxu0
        %v933 = vadd.f32 0.0, %v932
        %934 = vmatmul.f32.gmra.mxu0 %v871
        %v935 = vpop.f32.mrf.mxu0
        %v936 = vadd.f32 0.0, %v935
        %937 = vmatmul.f32.gmra.mxu0 %v874
        %v938 = vpop.f32.mrf.mxu0
        %v939 = vadd.f32 0.0, %v938
        %940 = vmatmul.f32.gmra.mxu0 %v877
        %v941 = vpop.f32.mrf.mxu0
        %v942 = vadd.f32 0.0, %v941
        %943 = vmatmul.f32.gmra.mxu0 %v880
        %v944 = vpop.f32.mrf.mxu0
        %v945 = vadd.f32 0.0, %v944
        %946 = vmatmul.f32.gmra.mxu0 %v883
        %v947 = vpop.f32.mrf.mxu0
        %v948 = vadd.f32 0.0, %v947
        %949 = vmatmul.f32.gmra.mxu0 %v886
        %v950 = vpop.f32.mrf.mxu0
        %v951 = vadd.f32 0.0, %v950
        %952 = vmatmul.f32.gmra.mxu0 %v889
        %v953 = vpop.f32.mrf.mxu0
        %v954 = vadd.f32 0.0, %v953
        %955 = vmatmul.f32.gmra.mxu0 %v892
        %v956 = vpop.f32.mrf.mxu0
        %v957 = vadd.f32 0.0, %v956
        %958 = vmatmul.f32.gmra.mxu0 %v895
        %v959 = vpop.f32.mrf.mxu0
        %v960 = vadd.f32 0.0, %v959
        %961 = vmatmul.f32.gmra.mxu0 %v898
        %v962 = vpop.f32.mrf.mxu0
        %v963 = vadd.f32 0.0, %v962
        %964 = vmatmul.f32.gmra.mxu0 %v901
        %v965 = vpop.f32.mrf.mxu0
        %v966 = vadd.f32 0.0, %v965
        %967 = vdwg.mxu0
        %v976 = vrot.slane %v613, 7
        %v977 = vsel %vm752, %v976, %v612
        %v978 = vrot.slane %v614, 6
        %v979 = vsel %vm754, %v978, %v977
        %v980 = vrot.slane %v615, 5
        %v981 = vsel %vm756, %v980, %v979
        %v982 = vrot.slane %v616, 4
        %v983 = vsel %vm758, %v982, %v981
        %v984 = vrot.slane %v617, 3
        %v985 = vsel %vm760, %v984, %v983
        %v986 = vrot.slane %v618, 2
        %v987 = vsel %vm762, %v986, %v985
        %v988 = vrot.slane %v619, 1
        %v989 = vsel %vm764, %v988, %v987
        %v991 = vmul.f32 %v804, %v989
        %v993 = vsel %vm452, %v991, 0
        %995 = vmatpush.msra.mxu0 0.0
        %996 = vmatpush.msra.mxu0 0.0
        %997 = vmatpush.msra.mxu0 0.0
        %998 = vmatpush.msra.mxu0 0.0
        %999 = vmatpush.msra.mxu0 0.0
        %1000 = vmatpush.msra.mxu0 0.0
        %1001 = vmatpush.msra.mxu0 0.0
        %1002 = vmatpush.msra.mxu0 0.0
        %1003 = vmatpush.msra.mxu0 %v814
        %1004 = vmatpush.msra.mxu0 %v813
        %1005 = vmatpush.msra.mxu0 %v812
        %1006 = vmatpush.msra.mxu0 %v811
        %1007 = vmatpush.msra.mxu0 %v810
        %1008 = vmatpush.msra.mxu0 %v809
        %1009 = vmatpush.msra.mxu0 %v808
        %1010 = vmatpush.msra.mxu0 %v807
        %1011 = vmatmul.f32.gmra.mxu0 %v993
        %v1012 = vpop.f32.mrf.mxu0
        %v1013 = vadd.f32 0.0, %v1012
        %1014 = vdwg.mxu0
        %vm1015 = vcmask 31744
        %v1016 = vsel %vm1015, %v921, -inf
        %v1017 = vsel %vm1015, %v924, -inf
        %v1018 = vmax.f32 %v1016, %v1017
        %v1019 = vrot.slane %v1018, 4
        %v1020 = vmax.f32 %v1018, %v1019
        %v1021 = vrot.slane %v1020, 2
        %v1022 = vmax.f32 %v1020, %v1021
        %v1023 = vrot.slane %v1022, 1
        %v1024 = vmax.f32 %v1022, %v1023
        %v1025 = vsel %vm1015, %v927, -inf
        %v1026 = vsel %vm1015, %v930, -inf
        %v1027 = vmax.f32 %v1025, %v1026
        %v1028 = vrot.slane %v1027, 4
        %v1029 = vmax.f32 %v1027, %v1028
        %v1030 = vrot.slane %v1029, 2
        %v1031 = vmax.f32 %v1029, %v1030
        %v1032 = vrot.slane %v1031, 1
        %v1033 = vmax.f32 %v1031, %v1032
        %v1034 = vsel %vm1015, %v933, -inf
        %v1035 = vsel %vm1015, %v936, -inf
        %v1036 = vmax.f32 %v1034, %v1035
        %v1037 = vrot.slane %v1036, 4
        %v1038 = vmax.f32 %v1036, %v1037
        %v1039 = vrot.slane %v1038, 2
        %v1040 = vmax.f32 %v1038, %v1039
        %v1041 = vrot.slane %v1040, 1
        %v1042 = vmax.f32 %v1040, %v1041
        %v1043 = vsel %vm1015, %v939, -inf
        %v1044 = vsel %vm1015, %v942, -inf
        %v1045 = vmax.f32 %v1043, %v1044
        %v1046 = vrot.slane %v1045, 4
        %v1047 = vmax.f32 %v1045, %v1046
        %v1048 = vrot.slane %v1047, 2
        %v1049 = vmax.f32 %v1047, %v1048
        %v1050 = vrot.slane %v1049, 1
        %v1051 = vmax.f32 %v1049, %v1050
        %v1052 = vsel %vm1015, %v945, -inf
        %v1053 = vsel %vm1015, %v948, -inf
        %v1054 = vmax.f32 %v1052, %v1053
        %v1055 = vrot.slane %v1054, 4
        %v1056 = vmax.f32 %v1054, %v1055
        %v1057 = vrot.slane %v1056, 2
        %v1058 = vmax.f32 %v1056, %v1057
        %v1059 = vrot.slane %v1058, 1
        %v1060 = vmax.f32 %v1058, %v1059
        %v1061 = vsel %vm1015, %v951, -inf
        %v1062 = vsel %vm1015, %v954, -inf
        %v1063 = vmax.f32 %v1061, %v1062
        %v1064 = vrot.slane %v1063, 4
        %v1065 = vmax.f32 %v1063, %v1064
        %v1066 = vrot.slane %v1065, 2
        %v1067 = vmax.f32 %v1065, %v1066
        %v1068 = vrot.slane %v1067, 1
        %v1069 = vmax.f32 %v1067, %v1068
        %v1070 = vsel %vm1015, %v957, -inf
        %v1071 = vsel %vm1015, %v960, -inf
        %v1072 = vmax.f32 %v1070, %v1071
        %v1073 = vrot.slane %v1072, 4
        %v1074 = vmax.f32 %v1072, %v1073
        %v1075 = vrot.slane %v1074, 2
        %v1076 = vmax.f32 %v1074, %v1075
        %v1077 = vrot.slane %v1076, 1
        %v1078 = vmax.f32 %v1076, %v1077
        %v1079 = vsel %vm1015, %v963, -inf
        %v1080 = vsel %vm1015, %v966, -inf
        %v1081 = vmax.f32 %v1079, %v1080
        %v1082 = vrot.slane %v1081, 4
        %v1083 = vmax.f32 %v1081, %v1082
        %v1084 = vrot.slane %v1083, 2
        %v1085 = vmax.f32 %v1083, %v1084
        %v1086 = vrot.slane %v1085, 1
        %v1087 = vmax.f32 %v1085, %v1086
        %v1089 = vrot.slane %v1013, 1
        %v1090 = vrot.slane %v1013, 2
        %v1091 = vrot.slane %v1013, 3
        %v1092 = vrot.slane %v1013, 4
        %v1093 = vrot.slane %v1013, 5
        %v1094 = vrot.slane %v1013, 6
        %v1095 = vrot.slane %v1013, 7
        %v1104 = vmax.f32 %v1024, %v1013
        %v1105 = vmax.f32 %v1033, %v1089
        %v1106 = vmax.f32 %v1042, %v1090
        %v1107 = vmax.f32 %v1051, %v1091
        %v1108 = vmax.f32 %v1060, %v1092
        %v1109 = vmax.f32 %v1069, %v1093
        %v1110 = vmax.f32 %v1078, %v1094
        %v1111 = vmax.f32 %v1087, %v1095
        %v1112 = vperm.slane %v1104, 0
        %v1113 = vperm.slane %v1105, 0
        %v1114 = vperm.slane %v1106, 0
        %v1115 = vperm.slane %v1107, 0
        %v1116 = vperm.slane %v1108, 0
        %v1117 = vperm.slane %v1109, 0
        %v1118 = vperm.slane %v1110, 0
        %v1119 = vperm.slane %v1111, 0
        %v1120 = vsub.f32 %v921, %v1112
        %v1121 = vsub.f32 %v924, %v1112
        %v1122 = vsub.f32 %v927, %v1113
        %v1123 = vsub.f32 %v930, %v1113
        %v1124 = vsub.f32 %v933, %v1114
        %v1125 = vsub.f32 %v936, %v1114
        %v1126 = vsub.f32 %v939, %v1115
        %v1127 = vsub.f32 %v942, %v1115
        %v1128 = vsub.f32 %v945, %v1116
        %v1129 = vsub.f32 %v948, %v1116
        %v1130 = vsub.f32 %v951, %v1117
        %v1131 = vsub.f32 %v954, %v1117
        %v1132 = vsub.f32 %v957, %v1118
        %v1133 = vsub.f32 %v960, %v1118
        %v1134 = vsub.f32 %v963, %v1119
        %v1135 = vsub.f32 %v966, %v1119
        %v1136 = vmul.f32 %v1120, 1.442695
        %v1137 = vpow.pop %v1136
        %v1138 = vmul.f32 %v1121, 1.442695
        %v1139 = vpow.pop %v1138
        %v1140 = vmul.f32 %v1122, 1.442695
        %v1141 = vpow.pop %v1140
        %v1142 = vmul.f32 %v1123, 1.442695
        %v1143 = vpow.pop %v1142
        %v1144 = vmul.f32 %v1124, 1.442695
        %v1145 = vpow.pop %v1144
        %v1146 = vmul.f32 %v1125, 1.442695
        %v1147 = vpow.pop %v1146
        %v1148 = vmul.f32 %v1126, 1.442695
        %v1149 = vpow.pop %v1148
        %v1150 = vmul.f32 %v1127, 1.442695
        %v1151 = vpow.pop %v1150
        %v1152 = vmul.f32 %v1128, 1.442695
        %v1153 = vpow.pop %v1152
        %v1154 = vmul.f32 %v1129, 1.442695
        %v1155 = vpow.pop %v1154
        %v1156 = vmul.f32 %v1130, 1.442695
        %v1157 = vpow.pop %v1156
        %v1158 = vmul.f32 %v1131, 1.442695
        %v1159 = vpow.pop %v1158
        %v1160 = vmul.f32 %v1132, 1.442695
        %v1161 = vpow.pop %v1160
        %v1162 = vmul.f32 %v1133, 1.442695
        %v1163 = vpow.pop %v1162
        %v1164 = vmul.f32 %v1134, 1.442695
        %v1165 = vpow.pop %v1164
        %v1166 = vmul.f32 %v1135, 1.442695
        %v1167 = vpow.pop %v1166
        %v1176 = vrot.slane %v1105, 7
        %v1177 = vsel %vm752, %v1176, %v1104
        %v1178 = vrot.slane %v1106, 6
        %v1179 = vsel %vm754, %v1178, %v1177
        %v1180 = vrot.slane %v1107, 5
        %v1181 = vsel %vm756, %v1180, %v1179
        %v1182 = vrot.slane %v1108, 4
        %v1183 = vsel %vm758, %v1182, %v1181
        %v1184 = vrot.slane %v1109, 3
        %v1185 = vsel %vm760, %v1184, %v1183
        %v1186 = vrot.slane %v1110, 2
        %v1187 = vsel %vm762, %v1186, %v1185
        %v1188 = vrot.slane %v1111, 1
        %v1189 = vsel %vm764, %v1188, %v1187
        %v1191 = vsub.f32 %v1013, %v1189
        %v1192 = vmul.f32 %v1191, 1.442695
        %v1193 = vpow.pop %v1192
        %v1194 = vsel %vm1015, %v1137, 0.0
        %v1195 = vsel %vm1015, %v1139, 0.0
        %v1196 = vadd.f32 %v1194, %v1195
        %v1197 = vrot.slane %v1196, 4
        %v1198 = vadd.f32 %v1196, %v1197
        %v1199 = vrot.slane %v1198, 2
        %v1200 = vadd.f32 %v1198, %v1199
        %v1201 = vrot.slane %v1200, 1
        %v1202 = vadd.f32 %v1200, %v1201
        %v1203 = vsel %vm1015, %v1141, 0.0
        %v1204 = vsel %vm1015, %v1143, 0.0
        %v1205 = vadd.f32 %v1203, %v1204
        %v1206 = vrot.slane %v1205, 4
        %v1207 = vadd.f32 %v1205, %v1206
        %v1208 = vrot.slane %v1207, 2
        %v1209 = vadd.f32 %v1207, %v1208
        %v1210 = vrot.slane %v1209, 1
        %v1211 = vadd.f32 %v1209, %v1210
        %v1212 = vsel %vm1015, %v1145, 0.0
        %v1213 = vsel %vm1015, %v1147, 0.0
        %v1214 = vadd.f32 %v1212, %v1213
        %v1215 = vrot.slane %v1214, 4
        %v1216 = vadd.f32 %v1214, %v1215
        %v1217 = vrot.slane %v1216, 2
        %v1218 = vadd.f32 %v1216, %v1217
        %v1219 = vrot.slane %v1218, 1
        %v1220 = vadd.f32 %v1218, %v1219
        %v1221 = vsel %vm1015, %v1149, 0.0
        %v1222 = vsel %vm1015, %v1151, 0.0
        %v1223 = vadd.f32 %v1221, %v1222
        %v1224 = vrot.slane %v1223, 4
        %v1225 = vadd.f32 %v1223, %v1224
        %v1226 = vrot.slane %v1225, 2
        %v1227 = vadd.f32 %v1225, %v1226
        %v1228 = vrot.slane %v1227, 1
        %v1229 = vadd.f32 %v1227, %v1228
        %v1230 = vsel %vm1015, %v1153, 0.0
        %v1231 = vsel %vm1015, %v1155, 0.0
        %v1232 = vadd.f32 %v1230, %v1231
        %v1233 = vrot.slane %v1232, 4
        %v1234 = vadd.f32 %v1232, %v1233
        %v1235 = vrot.slane %v1234, 2
        %v1236 = vadd.f32 %v1234, %v1235
        %v1237 = vrot.slane %v1236, 1
        %v1238 = vadd.f32 %v1236, %v1237
        %v1239 = vsel %vm1015, %v1157, 0.0
        %v1240 = vsel %vm1015, %v1159, 0.0
        %v1241 = vadd.f32 %v1239, %v1240
        %v1242 = vrot.slane %v1241, 4
        %v1243 = vadd.f32 %v1241, %v1242
        %v1244 = vrot.slane %v1243, 2
        %v1245 = vadd.f32 %v1243, %v1244
        %v1246 = vrot.slane %v1245, 1
        %v1247 = vadd.f32 %v1245, %v1246
        %v1248 = vsel %vm1015, %v1161, 0.0
        %v1249 = vsel %vm1015, %v1163, 0.0
        %v1250 = vadd.f32 %v1248, %v1249
        %v1251 = vrot.slane %v1250, 4
        %v1252 = vadd.f32 %v1250, %v1251
        %v1253 = vrot.slane %v1252, 2
        %v1254 = vadd.f32 %v1252, %v1253
        %v1255 = vrot.slane %v1254, 1
        %v1256 = vadd.f32 %v1254, %v1255
        %v1257 = vsel %vm1015, %v1165, 0.0
        %v1258 = vsel %vm1015, %v1167, 0.0
        %v1259 = vadd.f32 %v1257, %v1258
        %v1260 = vrot.slane %v1259, 4
        %v1261 = vadd.f32 %v1259, %v1260
        %v1262 = vrot.slane %v1261, 2
        %v1263 = vadd.f32 %v1261, %v1262
        %v1264 = vrot.slane %v1263, 1
        %v1265 = vadd.f32 %v1263, %v1264
        %v1267 = vrot.slane %v1193, 1
        %v1268 = vrot.slane %v1193, 2
        %v1269 = vrot.slane %v1193, 3
        %v1270 = vrot.slane %v1193, 4
        %v1271 = vrot.slane %v1193, 5
        %v1272 = vrot.slane %v1193, 6
        %v1273 = vrot.slane %v1193, 7
        %v1282 = vadd.f32 %v1202, %v1193
        %v1283 = vadd.f32 %v1211, %v1267
        %v1284 = vadd.f32 %v1220, %v1268
        %v1285 = vadd.f32 %v1229, %v1269
        %v1286 = vadd.f32 %v1238, %v1270
        %v1287 = vadd.f32 %v1247, %v1271
        %v1288 = vadd.f32 %v1256, %v1272
        %v1289 = vadd.f32 %v1265, %v1273
        %v1290 = vrcp.pop %v1282
        %v1291 = vrcp.pop %v1283
        %v1292 = vrcp.pop %v1284
        %v1293 = vrcp.pop %v1285
        %v1294 = vrcp.pop %v1286
        %v1295 = vrcp.pop %v1287
        %v1296 = vrcp.pop %v1288
        %v1297 = vrcp.pop %v1289
        %v1298 = vperm.slane %v1290, 0
        %v1299 = vperm.slane %v1291, 0
        %v1300 = vperm.slane %v1292, 0
        %v1301 = vperm.slane %v1293, 0
        %v1302 = vperm.slane %v1294, 0
        %v1303 = vperm.slane %v1295, 0
        %v1304 = vperm.slane %v1296, 0
        %v1305 = vperm.slane %v1297, 0
        %v1306 = vmul.f32 %v1137, %v1298
        %v1307 = vmul.f32 %v1139, %v1298
        %v1308 = vmul.f32 %v1141, %v1299
        %v1309 = vmul.f32 %v1143, %v1299
        %v1310 = vmul.f32 %v1145, %v1300
        %v1311 = vmul.f32 %v1147, %v1300
        %v1312 = vmul.f32 %v1149, %v1301
        %v1313 = vmul.f32 %v1151, %v1301
        %v1314 = vmul.f32 %v1153, %v1302
        %v1315 = vmul.f32 %v1155, %v1302
        %v1316 = vmul.f32 %v1157, %v1303
        %v1317 = vmul.f32 %v1159, %v1303
        %v1318 = vmul.f32 %v1161, %v1304
        %v1319 = vmul.f32 %v1163, %v1304
        %v1320 = vmul.f32 %v1165, %v1305
        %v1321 = vmul.f32 %v1167, %v1305
        %v1330 = vrot.slane %v1291, 7
        %v1331 = vsel %vm752, %v1330, %v1290
        %v1332 = vrot.slane %v1292, 6
        %v1333 = vsel %vm754, %v1332, %v1331
        %v1334 = vrot.slane %v1293, 5
        %v1335 = vsel %vm756, %v1334, %v1333
        %v1336 = vrot.slane %v1294, 4
        %v1337 = vsel %vm758, %v1336, %v1335
        %v1338 = vrot.slane %v1295, 3
        %v1339 = vsel %vm760, %v1338, %v1337
        %v1340 = vrot.slane %v1296, 2
        %v1341 = vsel %vm762, %v1340, %v1339
        %v1342 = vrot.slane %v1297, 1
        %v1343 = vsel %vm764, %v1342, %v1341
        %v1345 = vmul.f32 %v1193, %v1343
        %v1346 = vld [vmem:[%s9] sm:$0x3]
        %v1347 = vpack.c.bf16 %v1307, %v1306
        %v1348 = vpack.c.bf16 %v1309, %v1308
        %v1349 = vpack.c.bf16 %v1311, %v1310
        %v1350 = vpack.c.bf16 %v1313, %v1312
        %v1351 = vpack.c.bf16 %v1315, %v1314
        %v1352 = vpack.c.bf16 %v1317, %v1316
        %v1353 = vpack.c.bf16 %v1319, %v1318
        %v1354 = vpack.c.bf16 %v1321, %v1320
        %v1356 = vsel %vm1015, %v1347, 0
        %v1359 = vsel %vm1015, %v1348, 0
        %v1362 = vsel %vm1015, %v1349, 0
        %v1365 = vsel %vm1015, %v1350, 0
        %v1368 = vsel %vm1015, %v1351, 0
        %v1371 = vsel %vm1015, %v1352, 0
        %v1374 = vsel %vm1015, %v1353, 0
        %v1377 = vsel %vm1015, %v1354, 0
        %vm1379 = vcmask 1041408
        %v1381 = vsel %vm1379, %v1346, 0
        %1383 = vmatpush.bf16.msra.mxu0 0
        %1384 = vmatpush.bf16.msra.mxu0 0
        %1385 = vmatpush.bf16.msra.mxu0 0
        %1386 = vmatpush.bf16.msra.mxu0 0
        %1387 = vmatpush.bf16.msra.mxu0 0
        %1388 = vmatpush.bf16.msra.mxu0 0
        %1389 = vmatpush.bf16.msra.mxu0 0
        %1390 = vmatpush.bf16.msra.mxu0 %v1381
        %1391 = vmatmul.bf16.gmra.mxu0 %v1356
        %v1392 = vpop.f32.mrf.mxu0
        %v1393 = vadd.f32 0.0, %v1392
        %v1394 = vpop.f32.mrf.mxu0
        %v1395 = vadd.f32 0.0, %v1394
        %1396 = vmatmul.bf16.gmra.mxu0 %v1359
        %v1397 = vpop.f32.mrf.mxu0
        %v1398 = vadd.f32 0.0, %v1397
        %v1399 = vpop.f32.mrf.mxu0
        %v1400 = vadd.f32 0.0, %v1399
        %1401 = vmatmul.bf16.gmra.mxu0 %v1362
        %v1402 = vpop.f32.mrf.mxu0
        %v1403 = vadd.f32 0.0, %v1402
        %v1404 = vpop.f32.mrf.mxu0
        %v1405 = vadd.f32 0.0, %v1404
        %1406 = vmatmul.bf16.gmra.mxu0 %v1365
        %v1407 = vpop.f32.mrf.mxu0
        %v1408 = vadd.f32 0.0, %v1407
        %v1409 = vpop.f32.mrf.mxu0
        %v1410 = vadd.f32 0.0, %v1409
        %1411 = vmatmul.bf16.gmra.mxu0 %v1368
        %v1412 = vpop.f32.mrf.mxu0
        %v1413 = vadd.f32 0.0, %v1412
        %v1414 = vpop.f32.mrf.mxu0
        %v1415 = vadd.f32 0.0, %v1414
        %1416 = vmatmul.bf16.gmra.mxu0 %v1371
        %v1417 = vpop.f32.mrf.mxu0
        %v1418 = vadd.f32 0.0, %v1417
        %v1419 = vpop.f32.mrf.mxu0
        %v1420 = vadd.f32 0.0, %v1419
        %1421 = vmatmul.bf16.gmra.mxu0 %v1374
        %v1422 = vpop.f32.mrf.mxu0
        %v1423 = vadd.f32 0.0, %v1422
        %v1424 = vpop.f32.mrf.mxu0
        %v1425 = vadd.f32 0.0, %v1424
        %1426 = vmatmul.bf16.gmra.mxu0 %v1377
        %v1427 = vpop.f32.mrf.mxu0
        %v1428 = vadd.f32 0.0, %v1427
        %v1429 = vpop.f32.mrf.mxu0
        %v1430 = vadd.f32 0.0, %v1429
        %1431 = vdwg.mxu0
        %1448 = vrot.lane.b32.xlu0 %v528, 64
        %v1449 = vpop.permute.xlu0 %1448
        %1450 = vrot.lane.b32.xlu0 %v529, 64
        %v1451 = vpop.permute.xlu0 %1450
        %1452 = vrot.lane.b32.xlu0 %v530, 64
        %v1453 = vpop.permute.xlu0 %1452
        %1454 = vrot.lane.b32.xlu0 %v531, 64
        %v1455 = vpop.permute.xlu0 %1454
        %1456 = vrot.lane.b32.xlu0 %v532, 64
        %v1457 = vpop.permute.xlu0 %1456
        %1458 = vrot.lane.b32.xlu0 %v533, 64
        %v1459 = vpop.permute.xlu0 %1458
        %1460 = vrot.lane.b32.xlu0 %v534, 64
        %v1461 = vpop.permute.xlu0 %1460
        %1462 = vrot.lane.b32.xlu0 %v535, 64
        %v1463 = vpop.permute.xlu0 %1462
        %1464 = vrot.lane.b32.xlu0 %v536, 64
        %v1465 = vpop.permute.xlu0 %1464
        %1466 = vrot.lane.b32.xlu0 %v537, 64
        %v1467 = vpop.permute.xlu0 %1466
        %1468 = vrot.lane.b32.xlu0 %v538, 64
        %v1469 = vpop.permute.xlu0 %1468
        %1470 = vrot.lane.b32.xlu0 %v539, 64
        %v1471 = vpop.permute.xlu0 %1470
        %1472 = vrot.lane.b32.xlu0 %v540, 64
        %v1473 = vpop.permute.xlu0 %1472
        %1474 = vrot.lane.b32.xlu0 %v541, 64
        %v1475 = vpop.permute.xlu0 %1474
        %1476 = vrot.lane.b32.xlu0 %v542, 64
        %v1477 = vpop.permute.xlu0 %1476
        %1478 = vrot.lane.b32.xlu0 %v543, 64
        %v1479 = vpop.permute.xlu0 %1478
        %v1496 = vmul.f32 %v1393, %v1449
        %v1497 = vmul.f32 %v1395, %v1451
        %v1498 = vmul.f32 %v1398, %v1453
        %v1499 = vmul.f32 %v1400, %v1455
        %v1500 = vmul.f32 %v1403, %v1457
        %v1501 = vmul.f32 %v1405, %v1459
        %v1502 = vmul.f32 %v1408, %v1461
        %v1503 = vmul.f32 %v1410, %v1463
        %v1504 = vmul.f32 %v1413, %v1465
        %v1505 = vmul.f32 %v1415, %v1467
        %v1506 = vmul.f32 %v1418, %v1469
        %v1507 = vmul.f32 %v1420, %v1471
        %v1508 = vmul.f32 %v1423, %v1473
        %v1509 = vmul.f32 %v1425, %v1475
        %v1510 = vmul.f32 %v1428, %v1477
        %v1511 = vmul.f32 %v1430, %v1479
        %v1512 = vsel %vm452, %v1496, 0.0
        %v1513 = vsel %vm452, %v1497, 0.0
        %v1514 = vadd.f32 %v1512, %v1513
        %v1515 = vrot.slane %v1514, 4
        %v1516 = vadd.f32 %v1514, %v1515
        %v1517 = vrot.slane %v1516, 2
        %v1518 = vadd.f32 %v1516, %v1517
        %v1519 = vrot.slane %v1518, 1
        %v1520 = vadd.f32 %v1518, %v1519
        %v1521 = vsel %vm452, %v1498, 0.0
        %v1522 = vsel %vm452, %v1499, 0.0
        %v1523 = vadd.f32 %v1521, %v1522
        %v1524 = vrot.slane %v1523, 4
        %v1525 = vadd.f32 %v1523, %v1524
        %v1526 = vrot.slane %v1525, 2
        %v1527 = vadd.f32 %v1525, %v1526
        %v1528 = vrot.slane %v1527, 1
        %v1529 = vadd.f32 %v1527, %v1528
        %v1530 = vsel %vm452, %v1500, 0.0
        %v1531 = vsel %vm452, %v1501, 0.0
        %v1532 = vadd.f32 %v1530, %v1531
        %v1533 = vrot.slane %v1532, 4
        %v1534 = vadd.f32 %v1532, %v1533
        %v1535 = vrot.slane %v1534, 2
        %v1536 = vadd.f32 %v1534, %v1535
        %v1537 = vrot.slane %v1536, 1
        %v1538 = vadd.f32 %v1536, %v1537
        %v1539 = vsel %vm452, %v1502, 0.0
        %v1540 = vsel %vm452, %v1503, 0.0
        %v1541 = vadd.f32 %v1539, %v1540
        %v1542 = vrot.slane %v1541, 4
        %v1543 = vadd.f32 %v1541, %v1542
        %v1544 = vrot.slane %v1543, 2
        %v1545 = vadd.f32 %v1543, %v1544
        %v1546 = vrot.slane %v1545, 1
        %v1547 = vadd.f32 %v1545, %v1546
        %v1548 = vsel %vm452, %v1504, 0.0
        %v1549 = vsel %vm452, %v1505, 0.0
        %v1550 = vadd.f32 %v1548, %v1549
        %v1551 = vrot.slane %v1550, 4
        %v1552 = vadd.f32 %v1550, %v1551
        %v1553 = vrot.slane %v1552, 2
        %v1554 = vadd.f32 %v1552, %v1553
        %v1555 = vrot.slane %v1554, 1
        %v1556 = vadd.f32 %v1554, %v1555
        %v1557 = vsel %vm452, %v1506, 0.0
        %v1558 = vsel %vm452, %v1507, 0.0
        %v1559 = vadd.f32 %v1557, %v1558
        %v1560 = vrot.slane %v1559, 4
        %v1561 = vadd.f32 %v1559, %v1560
        %v1562 = vrot.slane %v1561, 2
        %v1563 = vadd.f32 %v1561, %v1562
        %v1564 = vrot.slane %v1563, 1
        %v1565 = vadd.f32 %v1563, %v1564
        %v1566 = vsel %vm452, %v1508, 0.0
        %v1567 = vsel %vm452, %v1509, 0.0
        %v1568 = vadd.f32 %v1566, %v1567
        %v1569 = vrot.slane %v1568, 4
        %v1570 = vadd.f32 %v1568, %v1569
        %v1571 = vrot.slane %v1570, 2
        %v1572 = vadd.f32 %v1570, %v1571
        %v1573 = vrot.slane %v1572, 1
        %v1574 = vadd.f32 %v1572, %v1573
        %v1575 = vsel %vm452, %v1510, 0.0
        %v1576 = vsel %vm452, %v1511, 0.0
        %v1577 = vadd.f32 %v1575, %v1576
        %v1578 = vrot.slane %v1577, 4
        %v1579 = vadd.f32 %v1577, %v1578
        %v1580 = vrot.slane %v1579, 2
        %v1581 = vadd.f32 %v1579, %v1580
        %v1582 = vrot.slane %v1581, 1
        %v1583 = vadd.f32 %v1581, %v1582
        %v1584 = vpack.c.bf16 %v1345, %v1345
        %v1586 = vsel %vm1015, %v1584, 0
        %1588 = vmatpush.bf16.msra.mxu0 0
        %1589 = vmatpush.bf16.msra.mxu0 0
        %1590 = vmatpush.bf16.msra.mxu0 0
        %1591 = vmatpush.bf16.msra.mxu0 0
        %1592 = vmatpush.bf16.msra.mxu0 0
        %1593 = vmatpush.bf16.msra.mxu0 0
        %1594 = vmatpush.bf16.msra.mxu0 0
        %1595 = vmatpush.bf16.msra.mxu0 %v1381
        %1596 = vmatmul.bf16.gmra.mxu0 %v1586
        %v1597 = vpop.f32.mrf.mxu0
        %v1598 = vadd.f32 0.0, %v1597
        %v1599 = vpop.f32.mrf.mxu0
        %1600 = vdwg.mxu0
        %1601 = vrot.lane.b32.xlu0 %v989, 64
        %v1602 = vpop.permute.xlu0 %1601
        %v1604 = vmul.f32 %v1598, %v1602
        %v1606 = vrot.slane %v1604, 1
        %v1607 = vrot.slane %v1604, 2
        %v1608 = vrot.slane %v1604, 3
        %v1609 = vrot.slane %v1604, 4
        %v1610 = vrot.slane %v1604, 5
        %v1611 = vrot.slane %v1604, 6
        %v1612 = vrot.slane %v1604, 7
        %v1621 = vadd.f32 %v1520, %v1604
        %v1622 = vadd.f32 %v1529, %v1606
        %v1623 = vadd.f32 %v1538, %v1607
        %v1624 = vadd.f32 %v1547, %v1608
        %v1625 = vadd.f32 %v1556, %v1609
        %v1626 = vadd.f32 %v1565, %v1610
        %v1627 = vadd.f32 %v1574, %v1611
        %v1628 = vadd.f32 %v1583, %v1612
        %v1629 = vpack.c.bf16 %v1621, %v1621
        %v1630 = vpack.c.bf16 %v1622, %v1622
        %v1631 = vpack.c.bf16 %v1623, %v1623
        %v1632 = vpack.c.bf16 %v1624, %v1624
        %v1633 = vpack.c.bf16 %v1625, %v1625
        %v1634 = vpack.c.bf16 %v1626, %v1626
        %v1635 = vpack.c.bf16 %v1627, %v1627
        %v1636 = vpack.c.bf16 %v1628, %v1628
        %v1637 = vld [vmem:[%s3] sm:$0xf]
        %v1638 = vld [vmem:[%s3 + $0x4] sm:$0xf]
        %v1639 = vld [vmem:[%s3 + $0x8] sm:$0xf]
        %v1640 = vld [vmem:[%s3 + $0xc] sm:$0xf]
        %v1641 = vld [vmem:[%s3 + $0x10] sm:$0xf]
        %v1642 = vld [vmem:[%s3 + $0x14] sm:$0xf]
        %v1643 = vld [vmem:[%s3 + $0x18] sm:$0xf]
        %v1644 = vld [vmem:[%s3 + $0x1c] sm:$0xf]
        %v1645 = vld [vmem:[%s7] sm:$0x1]
        %v1647 = vperm.slane %v1645, 0
        %v1657 = vunpack.c.l.b16 %v1629
        %v1658 = vunpack.c.l.b16 %v1630
        %v1659 = vunpack.c.l.b16 %v1631
        %v1660 = vunpack.c.l.b16 %v1632
        %v1661 = vunpack.c.l.b16 %v1633
        %v1662 = vunpack.c.l.b16 %v1634
        %v1663 = vunpack.c.l.b16 %v1635
        %v1664 = vunpack.c.l.b16 %v1636
        %v1665 = vrot.slane %v1658, 7
        %v1666 = vsel %vm752, %v1665, %v1657
        %v1667 = vrot.slane %v1659, 6
        %v1668 = vsel %vm754, %v1667, %v1666
        %v1669 = vrot.slane %v1660, 5
        %v1670 = vsel %vm756, %v1669, %v1668
        %v1671 = vrot.slane %v1661, 4
        %v1672 = vsel %vm758, %v1671, %v1670
        %v1673 = vrot.slane %v1662, 3
        %v1674 = vsel %vm760, %v1673, %v1672
        %v1675 = vrot.slane %v1663, 2
        %v1676 = vsel %vm762, %v1675, %v1674
        %v1677 = vrot.slane %v1664, 1
        %v1678 = vsel %vm764, %v1677, %v1676
        %v1679 = vpack.c.b16 %v1678, %v1678
        %v1688 = vunpack.c.l.b16 %v1637
        %v1689 = vunpack.c.l.b16 %v1638
        %v1690 = vunpack.c.l.b16 %v1639
        %v1691 = vunpack.c.l.b16 %v1640
        %v1692 = vunpack.c.l.b16 %v1641
        %v1693 = vunpack.c.l.b16 %v1642
        %v1694 = vunpack.c.l.b16 %v1643
        %v1695 = vunpack.c.l.b16 %v1644
        %v1696 = vpack.c.b16 %v1689, %v1688
        %v1697 = vpack.c.b16 %v1691, %v1690
        %v1698 = vpack.c.b16 %v1693, %v1692
        %v1699 = vpack.c.b16 %v1695, %v1694
        %v1705 = vsel %vm452, %v1679, 0
        %1707 = vmatpush.bf16.msra.mxu0 0
        %1708 = vmatpush.bf16.msra.mxu0 0
        %1709 = vmatpush.bf16.msra.mxu0 0
        %1710 = vmatpush.bf16.msra.mxu0 0
        %1711 = vmatpush.bf16.msra.mxu0 %v1699
        %1712 = vmatpush.bf16.msra.mxu0 %v1698
        %1713 = vmatpush.bf16.msra.mxu0 %v1697
        %1714 = vmatpush.bf16.msra.mxu0 %v1696
        %1715 = vmatmul.bf16.gmra.mxu0 %v1705
        %v1716 = vpop.f32.mrf.mxu0
        %v1717 = vadd.f32 %v1647, %v1716
        %v1718 = vpop.f32.mrf.mxu0
        %1719 = vdwg.mxu0
        %1720 = vst [vmem:[%s355] sm:$0xff] %v1717
        %s1721 = sand.u32 %s247, 1
        %s1722 = scalar_lea.sflag [#allocation3], %s1721
        %s1723 = sand.u32 %s247, 1
        %s1724 = smul.addr %s1723, 8
        %s1725 = scalar_lea.vmem [#allocation2], %s1724
        // Predicated region
        $region61: #{attention_pool2d.1} parent=59 // pred_check
          %p1726 = pneg %p257
        $region62: #{attention_pool2d.1} parent=59 // pred_check_branch
          %1728 = sbr.rel (%p1726) target = $region64
        $region63: #{attention_pool2d.1} parent=59 // pred_region
          %1730 = vsyncadd %s1722, 0
          %s1731 = smul.addr %s24, 8
          %s1732 = scalar_lea.hbm %s10, %s1731
          %s1734 = sshll.u32 %s1725, 4
          %s1735 = int_to_ptr.vmem [resolvable:$true] %s1734
          %s1736 = sshll.u32 %s1732, 4
          %s1737 = int_to_ptr.hbm [resolvable:$true] %s1736
          %1739 = dma.vmem_to_hbm [thread:$0]  %s1735, 128, %s1737, %s1722
        $region64: #{attention_pool2d.1} parent=59 // pred_fallthru
          _
      $region60: #{attention_pool2d.1} parent=5 // pred_fallthru
        _
      %p1740 = scmp.le.s32.totalorder 2, %s19
      // Predicated region
      $region65: #{attention_pool2d.1} parent=5 // pred_check
        %p1741 = pneg %p1740
      $region66: #{attention_pool2d.1} parent=5 // pred_check_branch
        %1743 = sbr.rel (%p1741) target = $region68
      $region67: #{attention_pool2d.1} parent=5 // pred_region
        %s1744 = ssub.s32 %s19, 2
        // Predicated region
        $region69: #{attention_pool2d.1} parent=67 // pred_check
          %p1745 = pneg %p263
        $region70: #{attention_pool2d.1} parent=67 // pred_check_branch
          %1747 = sbr.rel (%p1745) target = $region72
        $region71: #{attention_pool2d.1} parent=67 // pred_region
          %s1748 = sand.u32 %s248, 1
          %s1749 = scalar_lea.sflag [#allocation3], %s1748
          %s1750 = sand.u32 %s248, 1
          %s1751 = smul.addr %s1750, 8
          %s1752 = scalar_lea.vmem [#allocation2], %s1751
          %1754 = dma.done %s1749, 128
        $region72: #{attention_pool2d.1} parent=67 // pred_fallthru
          _
      $region68: #{attention_pool2d.1} parent=5 // pred_fallthru
        _
    $region6: #{attention_pool2d.1} parent=1 // loop_footer
      %s23 = sadd.s32 1, %s19
    $region7: #{attention_pool2d.1} parent=1 // loop_footer_branch
      %18 = sbr.rel target = $region3
    $region8: #{attention_pool2d.1} parent=1 // loop_exit
      _
    %1755 = vsyncpa [#allocation3], 1
    %s1756 = scalar_lea.sflag [#allocation3], 1
    %1757 = vsyncpa %s1756, 1

// kernel: attention_pool2d.1
$region0: #{attention_pool2d.1}
  #allocation0 [shape = 'u32[]', space=smem, size = 0x4, offset = 0x4, fixed_abs, tag = 'smem constant byte address 0x4 - core index']
  #allocation1 [shape = 'u32[72,128]{1,0:T(1,128)}', space=vmem, size = 0x9000, scoped, tag = 'internal scratch']
  %s0 = inlined_call_operand.vmem [shape: bf16[16,16,64], index: 0, kind: input, shape index: {}]
  %s1 = inlined_call_operand.vmem [shape: bf16[64,64], index: 1, kind: input, shape index: {}]
  %s2 = inlined_call_operand.vmem [shape: bf16[64,128], index: 2, kind: input, shape index: {}]
  %s3 = inlined_call_operand.vmem [shape: bf16[64,128], index: 3, kind: input, shape index: {}]
  %s4 = inlined_call_operand.vmem [shape: f32[1,64], index: 4, kind: input, shape index: {}]
  %s5 = inlined_call_operand.vmem [shape: f32[1,128], index: 5, kind: input, shape index: {}]
  %s6 = inlined_call_operand.vmem [shape: f32[16,128], index: 6, kind: input, shape index: {}]
  %s7 = inlined_call_operand.vmem [shape: f32[1,128], index: 7, kind: input, shape index: {}]
  %s8 = inlined_call_operand.vmem [shape: f32[64,4], index: 8, kind: input, shape index: {}]
  %s9 = inlined_call_operand.vmem [shape: bf16[4,64], index: 9, kind: input, shape index: {}]
  %s10 = inlined_call_operand.hbm [shape: f32[16,128], index: 10, kind: output, shape index: {}]
  %s11 = sld [smem:[#allocation0]]
  $region73: #{attention_pool2d.1} parent=0
    _
  %s13 = ssub.s32 1, %s11
  %s14 = scalar_select 0, %s13, %s11
  $region1: #{attention_pool2d.1} parent=0
    #allocation2 [shape = 'u8[8192]{0}', space=vmem, size = 0x2000, scoped, tag = 'output window, operand 0']
    #allocation3 [shape = 's32[2]{0}', space=sflag, size = 0x8, scoped, tag = 'scoped memory for attention_pool2d.1']
    %15 = vsyncpa [#allocation3], 0
    %s16 = scalar_lea.sflag [#allocation3], 1
    %17 = vsyncpa %s16, 0
    loop: start=0, step=1, limit=4
    $region2: #{attention_pool2d.1} parent=1 // loop_pre_header
      _
    $region3: #{attention_pool2d.1} parent=1 // loop_header
      %s19 = sphi 0, %s23
      %p20 = scmp.ge.s32.totalorder %s19, 4
      %s29 = sphi 0, %s31
      %s32 = sphi 0, %s29
      %s33 = sphi 0, %s32
      %s49 = sphi 0, %s33
      %s53 = sphi 0, %s53
      %s55 = sphi 0, %s53
      %s56 = sphi 0, %s55
      %s70 = sphi 0, %s56
      %s74 = sphi 0, %s74
      %s76 = sphi 0, %s74
      %s77 = sphi 0, %s76
      %s91 = sphi 0, %s77
      %s95 = sphi 0, %s95
      %s97 = sphi 0, %s95
      %s98 = sphi 0, %s97
      %s112 = sphi 0, %s98
      %s116 = sphi 0, %s116
      %s118 = sphi 0, %s116
      %s119 = sphi 0, %s118
      %s133 = sphi 0, %s119
      %s137 = sphi 0, %s137
      %s139 = sphi 0, %s137
      %s140 = sphi 0, %s139
      %s154 = sphi 0, %s140
      %s158 = sphi 0, %s158
      %s160 = sphi 0, %s158
      %s161 = sphi 0, %s160
      %s175 = sphi 0, %s161
      %s179 = sphi 0, %s179
      %s181 = sphi 0, %s179
      %s182 = sphi 0, %s181
      %s196 = sphi 0, %s182
      %s200 = sphi 0, %s200
      %s202 = sphi 0, %s200
      %s203 = sphi 0, %s202
      %s217 = sphi 0, %s203
      %s221 = sphi 0, %s221
      %s223 = sphi 0, %s221
      %s224 = sphi 0, %s223
      %s238 = sphi 0, %s224
      %s244 = sphi 0, %s246
      %s247 = sphi 0, %s244
      %s248 = sphi 0, %s247
      %s264 = sphi 0, %s248
    $region4: #{attention_pool2d.1} parent=1 // loop_header_branch
      %22 = sbr.rel (%p20) target = $region8
    $region5: #{attention_pool2d.1} parent=1 // loop_body
      %s24 = ssub.s32 %s19, 1
      %s25 = ssub.s32 %s19, 2
      %s26 = sadd.s32 %s19, 1
      %s27 = ssub.s32 %s19, %s26
      %p28 = scmp.eq.s32.totalorder %s27, 0
      %s30 = sadd.s32 %s29, 1
      %s31 = scalar_select %p28, %s29, %s30
      %p34 = pneg %p28
      %p35 = scmp.eq.s32.totalorder %s19, 1
      %p36 = por %p34, %p35
      %p37 = scmp.ne.s32.totalorder %s29, %s32
      %p38 = scmp.eq.s32.totalorder %s19, 0
      %p39 = por %p37, %p38
      %p40 = scmp.ne.s32.totalorder %s29, %s32
      %p41 = scmp.eq.s32.totalorder %s24, 1
      %p42 = por %p40, %p41
      %p43 = scmp.ne.s32.totalorder %s32, %s33
      %p44 = scmp.eq.s32.totalorder %s24, 0
      %p45 = por %p43, %p44
      %p46 = scmp.ne.s32.totalorder %s32, %s33
      %p47 = scmp.eq.s32.totalorder %s25, 1
      %p48 = por %p46, %p47
      %p50 = scmp.ne.s32.totalorder %s33, %s49
      %p51 = scmp.eq.s32.totalorder %s25, 0
      %p52 = por %p50, %p51
      %s54 = sadd.s32 %s53, 1
      %p57 = scmp.eq.s32.totalorder %s19, 1
      %p58 = scmp.ne.s32.totalorder %s53, %s55
      %p59 = scmp.eq.s32.totalorder %s19, 0
      %p60 = por %p58, %p59
      %p61 = scmp.ne.s32.totalorder %s53, %s55
      %p62 = scmp.eq.s32.totalorder %s24, 1
      %p63 = por %p61, %p62
      %p64 = scmp.ne.s32.totalorder %s55, %s56
      %p65 = scmp.eq.s32.totalorder %s24, 0
      %p66 = por %p64, %p65
      %p67 = scmp.ne.s32.totalorder %s55, %s56
      %p68 = scmp.eq.s32.totalorder %s25, 1
      %p69 = por %p67, %p68
      %p71 = scmp.ne.s32.totalorder %s56, %s70
      %p72 = scmp.eq.s32.totalorder %s25, 0
      %p73 = por %p71, %p72
      %s75 = sadd.s32 %s74, 1
      %p78 = scmp.eq.s32.totalorder %s19, 1
      %p79 = scmp.ne.s32.totalorder %s74, %s76
      %p80 = scmp.eq.s32.totalorder %s19, 0
      %p81 = por %p79, %p80
      %p82 = scmp.ne.s32.totalorder %s74, %s76
      %p83 = scmp.eq.s32.totalorder %s24, 1
      %p84 = por %p82, %p83
      %p85 = scmp.ne.s32.totalorder %s76, %s77
      %p86 = scmp.eq.s32.totalorder %s24, 0
      %p87 = por %p85, %p86
      %p88 = scmp.ne.s32.totalorder %s76, %s77
      %p89 = scmp.eq.s32.totalorder %s25, 1
      %p90 = por %p88, %p89
      %p92 = scmp.ne.s32.totalorder %s77, %s91
      %p93 = scmp.eq.s32.totalorder %s25, 0
      %p94 = por %p92, %p93
      %s96 = sadd.s32 %s95, 1
      %p99 = scmp.eq.s32.totalorder %s19, 1
      %p100 = scmp.ne.s32.totalorder %s95, %s97
      %p101 = scmp.eq.s32.totalorder %s19, 0
      %p102 = por %p100, %p101
      %p103 = scmp.ne.s32.totalorder %s95, %s97
      %p104 = scmp.eq.s32.totalorder %s24, 1
      %p105 = por %p103, %p104
      %p106 = scmp.ne.s32.totalorder %s97, %s98
      %p107 = scmp.eq.s32.totalorder %s24, 0
      %p108 = por %p106, %p107
      %p109 = scmp.ne.s32.totalorder %s97, %s98
      %p110 = scmp.eq.s32.totalorder %s25, 1
      %p111 = por %p109, %p110
      %p113 = scmp.ne.s32.totalorder %s98, %s112
      %p114 = scmp.eq.s32.totalorder %s25, 0
      %p115 = por %p113, %p114
      %s117 = sadd.s32 %s116, 1
      %p120 = scmp.eq.s32.totalorder %s19, 1
      %p121 = scmp.ne.s32.totalorder %s116, %s118
      %p122 = scmp.eq.s32.totalorder %s19, 0
      %p123 = por %p121, %p122
      %p124 = scmp.ne.s32.totalorder %s116, %s118
      %p125 = scmp.eq.s32.totalorder %s24, 1
      %p126 = por %p124, %p125
      %p127 = scmp.ne.s32.totalorder %s118, %s119
      %p128 = scmp.eq.s32.totalorder %s24, 0
      %p129 = por %p127, %p128
      %p130 = scmp.ne.s32.totalorder %s118, %s119
      %p131 = scmp.eq.s32.totalorder %s25, 1
      %p132 = por %p130, %p131
      %p134 = scmp.ne.s32.totalorder %s119, %s133
      %p135 = scmp.eq.s32.totalorder %s25, 0
      %p136 = por %p134, %p135
      %s138 = sadd.s32 %s137, 1
      %p141 = scmp.eq.s32.totalorder %s19, 1
      %p142 = scmp.ne.s32.totalorder %s137, %s139
      %p143 = scmp.eq.s32.totalorder %s19, 0
      %p144 = por %p142, %p143
      %p145 = scmp.ne.s32.totalorder %s137, %s139
      %p146 = scmp.eq.s32.totalorder %s24, 1
      %p147 = por %p145, %p146
      %p148 = scmp.ne.s32.totalorder %s139, %s140
      %p149 = scmp.eq.s32.totalorder %s24, 0
      %p150 = por %p148, %p149
      %p151 = scmp.ne.s32.totalorder %s139, %s140
      %p152 = scmp.eq.s32.totalorder %s25, 1
      %p153 = por %p151, %p152
      %p155 = scmp.ne.s32.totalorder %s140, %s154
      %p156 = scmp.eq.s32.totalorder %s25, 0
      %p157 = por %p155, %p156
      %s159 = sadd.s32 %s158, 1
      %p162 = scmp.eq.s32.totalorder %s19, 1
      %p163 = scmp.ne.s32.totalorder %s158, %s160
      %p164 = scmp.eq.s32.totalorder %s19, 0
      %p165 = por %p163, %p164
      %p166 = scmp.ne.s32.totalorder %s158, %s160
      %p167 = scmp.eq.s32.totalorder %s24, 1
      %p168 = por %p166, %p167
      %p169 = scmp.ne.s32.totalorder %s160, %s161
      %p170 = scmp.eq.s32.totalorder %s24, 0
      %p171 = por %p169, %p170
      %p172 = scmp.ne.s32.totalorder %s160, %s161
      %p173 = scmp.eq.s32.totalorder %s25, 1
      %p174 = por %p172, %p173
      %p176 = scmp.ne.s32.totalorder %s161, %s175
      %p177 = scmp.eq.s32.totalorder %s25, 0
      %p178 = por %p176, %p177
      %s180 = sadd.s32 %s179, 1
      %p183 = scmp.eq.s32.totalorder %s19, 1
      %p184 = scmp.ne.s32.totalorder %s179, %s181
      %p185 = scmp.eq.s32.totalorder %s19, 0
      %p186 = por %p184, %p185
      %p187 = scmp.ne.s32.totalorder %s179, %s181
      %p188 = scmp.eq.s32.totalorder %s24, 1
      %p189 = por %p187, %p188
      %p190 = scmp.ne.s32.totalorder %s181, %s182
      %p191 = scmp.eq.s32.totalorder %s24, 0
      %p192 = por %p190, %p191
      %p193 = scmp.ne.s32.totalorder %s181, %s182
      %p194 = scmp.eq.s32.totalorder %s25, 1
      %p195 = por %p193, %p194
      %p197 = scmp.ne.s32.totalorder %s182, %s196
      %p198 = scmp.eq.s32.totalorder %s25, 0
      %p199 = por %p197, %p198
      %s201 = sadd.s32 %s200, 1
      %p204 = scmp.eq.s32.totalorder %s19, 1
      %p205 = scmp.ne.s32.totalorder %s200, %s202
      %p206 = scmp.eq.s32.totalorder %s19, 0
      %p207 = por %p205, %p206
      %p208 = scmp.ne.s32.totalorder %s200, %s202
      %p209 = scmp.eq.s32.totalorder %s24, 1
      %p210 = por %p208, %p209
      %p211 = scmp.ne.s32.totalorder %s202, %s203
      %p212 = scmp.eq.s32.totalorder %s24, 0
      %p213 = por %p211, %p212
      %p214 = scmp.ne.s32.totalorder %s202, %s203
      %p215 = scmp.eq.s32.totalorder %s25, 1
      %p216 = por %p214, %p215
      %p218 = scmp.ne.s32.totalorder %s203, %s217
      %p219 = scmp.eq.s32.totalorder %s25, 0
      %p220 = por %p218, %p219
      %s222 = sadd.s32 %s221, 1
      %p225 = scmp.eq.s32.totalorder %s19, 1
      %p226 = scmp.ne.s32.totalorder %s221, %s223
      %p227 = scmp.eq.s32.totalorder %s19, 0
      %p228 = por %p226, %p227
      %p229 = scmp.ne.s32.totalorder %s221, %s223
      %p230 = scmp.eq.s32.totalorder %s24, 1
      %p231 = por %p229, %p230
      %p232 = scmp.ne.s32.totalorder %s223, %s224
      %p233 = scmp.eq.s32.totalorder %s24, 0
      %p234 = por %p232, %p233
      %p235 = scmp.ne.s32.totalorder %s223, %s224
      %p236 = scmp.eq.s32.totalorder %s25, 1
      %p237 = por %p235, %p236
      %p239 = scmp.ne.s32.totalorder %s224, %s238
      %p240 = scmp.eq.s32.totalorder %s25, 0
      %p241 = por %p239, %p240
      %s242 = ssub.s32 %s19, %s26
      %p243 = scmp.eq.s32.totalorder %s242, 0
      %s245 = sadd.s32 %s244, 1
      %s246 = scalar_select %p243, %s244, %s245
      %p249 = pneg %p243
      %p250 = scmp.eq.s32.totalorder %s19, 1
      %p251 = por %p249, %p250
      %p252 = scmp.ne.s32.totalorder %s244, %s247
      %p253 = scmp.eq.s32.totalorder %s19, 0
      %p254 = por %p252, %p253
      %p255 = scmp.ne.s32.totalorder %s244, %s247
      %p256 = scmp.eq.s32.totalorder %s24, 1
      %p257 = por %p255, %p256
      %p258 = scmp.ne.s32.totalorder %s247, %s248
      %p259 = scmp.eq.s32.totalorder %s24, 0
      %p260 = por %p258, %p259
      %p261 = scmp.ne.s32.totalorder %s247, %s248
      %p262 = scmp.eq.s32.totalorder %s25, 1
      %p263 = por %p261, %p262
      %p265 = scmp.ne.s32.totalorder %s248, %s264
      %p266 = scmp.eq.s32.totalorder %s25, 0
      %p267 = por %p265, %p266
      %p268 = scmp.le.s32.totalorder 1, %s19
      %p269 = scmp.lt.s32.totalorder %s19, 3
      %p270 = pnand %p268, %p269
      %p271 = pneg %p270
      // Predicated region
      $region9: #{attention_pool2d.1} parent=5 // pred_check
        _
      $region10: #{attention_pool2d.1} parent=5 // pred_check_branch
        %273 = sbr.rel (%p270) target = $region12
      $region11: #{attention_pool2d.1} parent=5 // pred_region
        %s274 = ssub.s32 %s19, 1
        // Predicated region
        $region13: #{attention_pool2d.1} parent=11 // pred_check
          %p275 = pneg %p66
        $region14: #{attention_pool2d.1} parent=11 // pred_check_branch
          %277 = sbr.rel (%p275) target = $region16
        $region15: #{attention_pool2d.1} parent=11 // pred_region
          _
        $region16: #{attention_pool2d.1} parent=11 // pred_fallthru
          _
        // Predicated region
        $region17: #{attention_pool2d.1} parent=11 // pred_check
          %p278 = pneg %p87
        $region18: #{attention_pool2d.1} parent=11 // pred_check_branch
          %280 = sbr.rel (%p278) target = $region20
        $region19: #{attention_pool2d.1} parent=11 // pred_region
          _
        $region20: #{attention_pool2d.1} parent=11 // pred_fallthru
          _
        // Predicated region
        $region21: #{attention_pool2d.1} parent=11 // pred_check
          %p281 = pneg %p108
        $region22: #{attention_pool2d.1} parent=11 // pred_check_branch
          %283 = sbr.rel (%p281) target = $region24
        $region23: #{attention_pool2d.1} parent=11 // pred_region
          _
        $region24: #{attention_pool2d.1} parent=11 // pred_fallthru
          _
        // Predicated region
        $region25: #{attention_pool2d.1} parent=11 // pred_check
          %p284 = pneg %p129
        $region26: #{attention_pool2d.1} parent=11 // pred_check_branch
          %286 = sbr.rel (%p284) target = $region28
        $region27: #{attention_pool2d.1} parent=11 // pred_region
          _
        $region28: #{attention_pool2d.1} parent=11 // pred_fallthru
          _
        // Predicated region
        $region29: #{attention_pool2d.1} parent=11 // pred_check
          %p287 = pneg %p150
        $region30: #{attention_pool2d.1} parent=11 // pred_check_branch
          %289 = sbr.rel (%p287) target = $region32
        $region31: #{attention_pool2d.1} parent=11 // pred_region
          _
        $region32: #{attention_pool2d.1} parent=11 // pred_fallthru
          _
        // Predicated region
        $region33: #{attention_pool2d.1} parent=11 // pred_check
          %p290 = pneg %p171
        $region34: #{attention_pool2d.1} parent=11 // pred_check_branch
          %292 = sbr.rel (%p290) target = $region36
        $region35: #{attention_pool2d.1} parent=11 // pred_region
          _
        $region36: #{attention_pool2d.1} parent=11 // pred_fallthru
          _
        // Predicated region
        $region37: #{attention_pool2d.1} parent=11 // pred_check
          %p293 = pneg %p192
        $region38: #{attention_pool2d.1} parent=11 // pred_check_branch
          %295 = sbr.rel (%p293) target = $region40
        $region39: #{attention_pool2d.1} parent=11 // pred_region
          _
        $region40: #{attention_pool2d.1} parent=11 // pred_fallthru
          _
        // Predicated region
        $region41: #{attention_pool2d.1} parent=11 // pred_check
          %p296 = pneg %p213
        $region42: #{attention_pool2d.1} parent=11 // pred_check_branch
          %298 = sbr.rel (%p296) target = $region44
        $region43: #{attention_pool2d.1} parent=11 // pred_region
          _
        $region44: #{attention_pool2d.1} parent=11 // pred_fallthru
          _
        // Predicated region
        $region45: #{attention_pool2d.1} parent=11 // pred_check
          %p299 = pneg %p234
        $region46: #{attention_pool2d.1} parent=11 // pred_check_branch
          %301 = sbr.rel (%p299) target = $region48
        $region47: #{attention_pool2d.1} parent=11 // pred_region
          _
        $region48: #{attention_pool2d.1} parent=11 // pred_fallthru
          _
      $region12: #{attention_pool2d.1} parent=5 // pred_fallthru
        _
      %p302 = scmp.lt.s32.totalorder %s19, 2
      // Predicated region
      $region49: #{attention_pool2d.1} parent=5 // pred_check
        %p303 = pneg %p302
      $region50: #{attention_pool2d.1} parent=5 // pred_check_branch
        %305 = sbr.rel (%p303) target = $region52
      $region51: #{attention_pool2d.1} parent=5 // pred_region
        // Predicated region
        $region53: #{attention_pool2d.1} parent=51 // pred_check
          %p306 = pneg %p39
        $region54: #{attention_pool2d.1} parent=51 // pred_check_branch
          %308 = sbr.rel (%p306) target = $region56
        $region55: #{attention_pool2d.1} parent=51 // pred_region
          %s309 = smul.u32 8, %s19
          %p310 = scmp.lt.s32.totalorder %s309, 15
          %s311 = scalar_select %p310, %s309, 15
          %s312 = smul.addr %s311, 2
          %s313 = smul.addr %s312, 4
          %s314 = scalar_lea.vmem %s0, %s313
          %s315 = smul.u32 8, %s19
        $region56: #{attention_pool2d.1} parent=51 // pred_fallthru
          _
      $region52: #{attention_pool2d.1} parent=5 // pred_fallthru
        _
      %p316 = scmp.le.s32.totalorder 1, %s19
      %p317 = scmp.lt.s32.totalorder %s19, 3
      %p318 = pnand %p316, %p317
      %p319 = pneg %p318
      // Predicated region
      $region57: #{attention_pool2d.1} parent=5 // pred_check
        _
      $region58: #{attention_pool2d.1} parent=5 // pred_check_branch
        %321 = sbr.rel (%p318) target = $region60
      $region59: #{attention_pool2d.1} parent=5 // pred_region
        %s322 = ssub.s32 %s19, 1
        %s323 = smul.u32 8, %s24
        %p324 = scmp.lt.s32.totalorder %s323, 15
        %s325 = scalar_select %p324, %s323, 15
        %s326 = smul.addr %s325, 2
        %s327 = smul.addr %s326, 4
        %s328 = scalar_lea.vmem %s0, %s327
        %p329 = pneg %p45
        %p330 = pneg %p42
        %p331 = pneg %p66
        %p332 = pneg %p63
        %p333 = pneg %p87
        %p334 = pneg %p84
        %p335 = pneg %p108
        %p336 = pneg %p105
        %p337 = pneg %p129
        %p338 = pneg %p126
        %p339 = pneg %p150
        %p340 = pneg %p147
        %p341 = pneg %p171
        %p342 = pneg %p168
        %p343 = pneg %p192
        %p344 = pneg %p189
        %p345 = pneg %p213
        %p346 = pneg %p210
        %p347 = pneg %p234
        %p348 = pneg %p231
        %p349 = pneg %p260
        %p350 = pneg %p257
        %s351 = sand.u32 %s247, 1
        %s352 = scalar_lea.sflag [#allocation3], %s351
        %s353 = sand.u32 %s247, 1
        %s354 = smul.addr %s353, 8
        %s355 = scalar_lea.vmem [#allocation2], %s354
        %s356 = smul.u32 8, %s24
        %p357 = scmp.lt.s32.totalorder %s356, 15
        %s358 = scalar_select %p357, %s356, 15
        %s359 = smul.addr %s358, 2
        %s360 = smul.addr %s359, 4
        %s361 = scalar_lea.vmem %s0, %s360
        %s362 = smul.u32 8, %s24
        %v364 = vld [vmem:[%s361] sm:$0xf]
        %v365 = vld [vmem:[%s361 + $0x4] sm:$0xf]
        %v366 = vld [vmem:[%s361 + $0x8] sm:$0xf]
        %v367 = vld [vmem:[%s361 + $0xc] sm:$0xf]
        %v368 = vld [vmem:[%s361 + $0x10] sm:$0xf]
        %v369 = vld [vmem:[%s361 + $0x14] sm:$0xf]
        %v370 = vld [vmem:[%s361 + $0x18] sm:$0xf]
        %v371 = vld [vmem:[%s361 + $0x1c] sm:$0xf]
        %v372 = vld [vmem:[%s361 + $0x20] sm:$0xf]
        %v373 = vld [vmem:[%s361 + $0x24] sm:$0xf]
        %v374 = vld [vmem:[%s361 + $0x28] sm:$0xf]
        %v375 = vld [vmem:[%s361 + $0x2c] sm:$0xf]
        %v376 = vld [vmem:[%s361 + $0x30] sm:$0xf]
        %v377 = vld [vmem:[%s361 + $0x34] sm:$0xf]
        %v378 = vld [vmem:[%s361 + $0x38] sm:$0xf]
        %v379 = vld [vmem:[%s361 + $0x3c] sm:$0xf]
        %v380 = vld [vmem:[%s2] sm:$0xf]
        %v381 = vld [vmem:[%s2 + $0x4] sm:$0xf]
        %v382 = vld [vmem:[%s2 + $0x8] sm:$0xf]
        %v383 = vld [vmem:[%s2 + $0xc] sm:$0xf]
        %v384 = vld [vmem:[%s2 + $0x10] sm:$0xf]
        %v385 = vld [vmem:[%s2 + $0x14] sm:$0xf]
        %v386 = vld [vmem:[%s2 + $0x18] sm:$0xf]
        %v387 = vld [vmem:[%s2 + $0x1c] sm:$0xf]
        %v404 = vunpack.c.l.b16 %v364
        %v405 = vunpack.c.l.b16 %v365
        %v406 = vunpack.c.l.b16 %v366
        %v407 = vunpack.c.l.b16 %v367
        %v408 = vunpack.c.l.b16 %v368
        %v409 = vunpack.c.l.b16 %v369
        %v410 = vunpack.c.l.b16 %v370
        %v411 = vunpack.c.l.b16 %v371
        %v412 = vunpack.c.l.b16 %v372
        %v413 = vunpack.c.l.b16 %v373
        %v414 = vunpack.c.l.b16 %v374
        %v415 = vunpack.c.l.b16 %v375
        %v416 = vunpack.c.l.b16 %v376
        %v417 = vunpack.c.l.b16 %v377
        %v418 = vunpack.c.l.b16 %v378
        %v419 = vunpack.c.l.b16 %v379
        %v420 = vpack.c.b16 %v405, %v404
        %v421 = vpack.c.b16 %v407, %v406
        %v422 = vpack.c.b16 %v409, %v408
        %v423 = vpack.c.b16 %v411, %v410
        %v424 = vpack.c.b16 %v413, %v412
        %v425 = vpack.c.b16 %v415, %v414
        %v426 = vpack.c.b16 %v417, %v416
        %v427 = vpack.c.b16 %v419, %v418
        %v436 = vunpack.c.l.b16 %v380
        %v437 = vunpack.c.l.b16 %v381
        %v438 = vunpack.c.l.b16 %v382
        %v439 = vunpack.c.l.b16 %v383
        %v440 = vunpack.c.l.b16 %v384
        %v441 = vunpack.c.l.b16 %v385
        %v442 = vunpack.c.l.b16 %v386
        %v443 = vunpack.c.l.b16 %v387
        %v444 = vpack.c.b16 %v437, %v436
        %v445 = vpack.c.b16 %v439, %v438
        %v446 = vpack.c.b16 %v441, %v440
        %v447 = vpack.c.b16 %v443, %v442
        %vm452 = vcmask 523264
        %v454 = vsel %vm452, %v420, 0
        %v457 = vsel %vm452, %v421, 0
        %v460 = vsel %vm452, %v422, 0
        %v463 = vsel %vm452, %v423, 0
        %v466 = vsel %vm452, %v424, 0
        %v469 = vsel %vm452, %v425, 0
        %v472 = vsel %vm452, %v426, 0
        %v475 = vsel %vm452, %v427, 0
        %477 = vmatpush.bf16.msra.mxu0 0
        %478 = vmatpush.bf16.msra.mxu0 0
        %479 = vmatpush.bf16.msra.mxu0 0
        %480 = vmatpush.bf16.msra.mxu0 0
        %481 = vmatpush.bf16.msra.mxu0 %v447
        %482 = vmatpush.bf16.msra.mxu0 %v446
        %483 = vmatpush.bf16.msra.mxu0 %v445
        %484 = vmatpush.bf16.msra.mxu0 %v444
        %485 = vmatmul.bf16.gmra.mxu0 %v454
        %v486 = vpop.f32.mrf.mxu0
        %v487 = vadd.f32 0.0, %v486
        %v488 = vpop.f32.mrf.mxu0
        %v489 = vadd.f32 0.0, %v488
        %490 = vmatmul.bf16.gmra.mxu0 %v457
        %v491 = vpop.f32.mrf.mxu0
        %v492 = vadd.f32 0.0, %v491
        %v493 = vpop.f32.mrf.mxu0
        %v494 = vadd.f32 0.0, %v493
        %495 = vmatmul.bf16.gmra.mxu0 %v460
        %v496 = vpop.f32.mrf.mxu0
        %v497 = vadd.f32 0.0, %v496
        %v498 = vpop.f32.mrf.mxu0
        %v499 = vadd.f32 0.0, %v498
        %500 = vmatmul.bf16.gmra.mxu0 %v463
        %v501 = vpop.f32.mrf.mxu0
        %v502 = vadd.f32 0.0, %v501
        %v503 = vpop.f32.mrf.mxu0
        %v504 = vadd.f32 0.0, %v503
        %505 = vmatmul.bf16.gmra.mxu0 %v466
        %v506 = vpop.f32.mrf.mxu0
        %v507 = vadd.f32 0.0, %v506
        %v508 = vpop.f32.mrf.mxu0
        %v509 = vadd.f32 0.0, %v508
        %510 = vmatmul.bf16.gmra.mxu0 %v469
        %v511 = vpop.f32.mrf.mxu0
        %v512 = vadd.f32 0.0, %v511
        %v513 = vpop.f32.mrf.mxu0
        %v514 = vadd.f32 0.0, %v513
        %515 = vmatmul.bf16.gmra.mxu0 %v472
        %v516 = vpop.f32.mrf.mxu0
        %v517 = vadd.f32 0.0, %v516
        %v518 = vpop.f32.mrf.mxu0
        %v519 = vadd.f32 0.0, %v518
        %520 = vmatmul.bf16.gmra.mxu0 %v475
        %v521 = vpop.f32.mrf.mxu0
        %v522 = vadd.f32 0.0, %v521
        %v523 = vpop.f32.mrf.mxu0
        %v524 = vadd.f32 0.0, %v523
        %525 = vdwg.mxu0
        %v526 = vld [vmem:[%s6] sm:$0xff]
        %v527 = vld [vmem:[%s6 + $0x8] sm:$0xff]
        %v528 = vadd.f32 %v487, %v526
        %v529 = vadd.f32 %v489, %v527
        %v530 = vadd.f32 %v492, %v526
        %v531 = vadd.f32 %v494, %v527
        %v532 = vadd.f32 %v497, %v526
        %v533 = vadd.f32 %v499, %v527
        %v534 = vadd.f32 %v502, %v526
        %v535 = vadd.f32 %v504, %v527
        %v536 = vadd.f32 %v507, %v526
        %v537 = vadd.f32 %v509, %v527
        %v538 = vadd.f32 %v512, %v526
        %v539 = vadd.f32 %v514, %v527
        %v540 = vadd.f32 %v517, %v526
        %v541 = vadd.f32 %v519, %v527
        %v542 = vadd.f32 %v522, %v526
        %v543 = vadd.f32 %v524, %v527
        %v544 = vadd.f32 %v487, %v489
        %v545 = vrot.slane %v544, 4
        %v546 = vadd.f32 %v544, %v545
        %v547 = vrot.slane %v546, 2
        %v548 = vadd.f32 %v546, %v547
        %v549 = vrot.slane %v548, 1
        %v550 = vadd.f32 %v548, %v549
        %v551 = vadd.f32 %v492, %v494
        %v552 = vrot.slane %v551, 4
        %v553 = vadd.f32 %v551, %v552
        %v554 = vrot.slane %v553, 2
        %v555 = vadd.f32 %v553, %v554
        %v556 = vrot.slane %v555, 1
        %v557 = vadd.f32 %v555, %v556
        %v558 = vadd.f32 %v497, %v499
        %v559 = vrot.slane %v558, 4
        %v560 = vadd.f32 %v558, %v559
        %v561 = vrot.slane %v560, 2
        %v562 = vadd.f32 %v560, %v561
        %v563 = vrot.slane %v562, 1
        %v564 = vadd.f32 %v562, %v563
        %v565 = vadd.f32 %v502, %v504
        %v566 = vrot.slane %v565, 4
        %v567 = vadd.f32 %v565, %v566
        %v568 = vrot.slane %v567, 2
        %v569 = vadd.f32 %v567, %v568
        %v570 = vrot.slane %v569, 1
        %v571 = vadd.f32 %v569, %v570
        %v572 = vadd.f32 %v507, %v509
        %v573 = vrot.slane %v572, 4
        %v574 = vadd.f32 %v572, %v573
        %v575 = vrot.slane %v574, 2
        %v576 = vadd.f32 %v574, %v575
        %v577 = vrot.slane %v576, 1
        %v578 = vadd.f32 %v576, %v577
        %v579 = vadd.f32 %v512, %v514
        %v580 = vrot.slane %v579, 4
        %v581 = vadd.f32 %v579, %v580
        %v582 = vrot.slane %v581, 2
        %v583 = vadd.f32 %v581, %v582
        %v584 = vrot.slane %v583, 1
        %v585 = vadd.f32 %v583, %v584
        %v586 = vadd.f32 %v517, %v519
        %v587 = vrot.slane %v586, 4
        %v588 = vadd.f32 %v586, %v587
        %v589 = vrot.slane %v588, 2
        %v590 = vadd.f32 %v588, %v589
        %v591 = vrot.slane %v590, 1
        %v592 = vadd.f32 %v590, %v591
        %v593 = vadd.f32 %v522, %v524
        %v594 = vrot.slane %v593, 4
        %v595 = vadd.f32 %v593, %v594
        %v596 = vrot.slane %v595, 2
        %v597 = vadd.f32 %v595, %v596
        %v598 = vrot.slane %v597, 1
        %v599 = vadd.f32 %v597, %v598
        %v600 = vmul.f32 %v550, 0.0625
        %v601 = vmul.f32 %v557, 0.0625
        %v602 = vmul.f32 %v564, 0.0625
        %v603 = vmul.f32 %v571, 0.0625
        %v604 = vmul.f32 %v578, 0.0625
        %v605 = vmul.f32 %v585, 0.0625
        %v606 = vmul.f32 %v592, 0.0625
        %v607 = vmul.f32 %v599, 0.0625
        %v608 = vld [vmem:[%s5] sm:$0x1]
        %v610 = vperm.slane %v608, 0
        %v612 = vadd.f32 %v600, %v610
        %v613 = vadd.f32 %v601, %v610
        %v614 = vadd.f32 %v602, %v610
        %v615 = vadd.f32 %v603, %v610
        %v616 = vadd.f32 %v604, %v610
        %v617 = vadd.f32 %v605, %v610
        %v618 = vadd.f32 %v606, %v610
        %v619 = vadd.f32 %v607, %v610
        %v620 = vunpack.c.l.bf16 %v364
        %v621 = vunpack.c.l.bf16 %v365
        %v622 = vunpack.c.l.bf16 %v366
        %v623 = vunpack.c.l.bf16 %v367
        %v624 = vunpack.c.l.bf16 %v368
        %v625 = vunpack.c.l.bf16 %v369
        %v626 = vunpack.c.l.bf16 %v370
        %v627 = vunpack.c.l.bf16 %v371
        %v628 = vunpack.c.l.bf16 %v372
        %v629 = vunpack.c.l.bf16 %v373
        %v630 = vunpack.c.l.bf16 %v374
        %v631 = vunpack.c.l.bf16 %v375
        %v632 = vunpack.c.l.bf16 %v376
        %v633 = vunpack.c.l.bf16 %v377
        %v634 = vunpack.c.l.bf16 %v378
        %v635 = vunpack.c.l.bf16 %v379
        %v636 = vsel %vm452, %v620, 0.0
        %v637 = vsel %vm452, %v621, 0.0
        %v638 = vadd.f32 %v636, %v637
        %v639 = vrot.slane %v638, 4
        %v640 = vadd.f32 %v638, %v639
        %v641 = vrot.slane %v640, 2
        %v642 = vadd.f32 %v640, %v641
        %v643 = vrot.slane %v642, 1
        %v644 = vadd.f32 %v642, %v643
        %v645 = vsel %vm452, %v622, 0.0
        %v646 = vsel %vm452, %v623, 0.0
        %v647 = vadd.f32 %v645, %v646
        %v648 = vrot.slane %v647, 4
        %v649 = vadd.f32 %v647, %v648
        %v650 = vrot.slane %v649, 2
        %v651 = vadd.f32 %v649, %v650
        %v652 = vrot.slane %v651, 1
        %v653 = vadd.f32 %v651, %v652
        %v654 = vsel %vm452, %v624, 0.0
        %v655 = vsel %vm452, %v625, 0.0
        %v656 = vadd.f32 %v654, %v655
        %v657 = vrot.slane %v656, 4
        %v658 = vadd.f32 %v656, %v657
        %v659 = vrot.slane %v658, 2
        %v660 = vadd.f32 %v658, %v659
        %v661 = vrot.slane %v660, 1
        %v662 = vadd.f32 %v660, %v661
        %v663 = vsel %vm452, %v626, 0.0
        %v664 = vsel %vm452, %v627, 0.0
        %v665 = vadd.f32 %v663, %v664
        %v666 = vrot.slane %v665, 4
        %v667 = vadd.f32 %v665, %v666
        %v668 = vrot.slane %v667, 2
        %v669 = vadd.f32 %v667, %v668
        %v670 = vrot.slane %v669, 1
        %v671 = vadd.f32 %v669, %v670
        %v672 = vsel %vm452, %v628, 0.0
        %v673 = vsel %vm452, %v629, 0.0
        %v674 = vadd.f32 %v672, %v673
        %v675 = vrot.slane %v674, 4
        %v676 = vadd.f32 %v674, %v675
        %v677 = vrot.slane %v676, 2
        %v678 = vadd.f32 %v676, %v677
        %v679 = vrot.slane %v678, 1
        %v680 = vadd.f32 %v678, %v679
        %v681 = vsel %vm452, %v630, 0.0
        %v682 = vsel %vm452, %v631, 0.0
        %v683 = vadd.f32 %v681, %v682
        %v684 = vrot.slane %v683, 4
        %v685 = vadd.f32 %v683, %v684
        %v686 = vrot.slane %v685, 2
        %v687 = vadd.f32 %v685, %v686
        %v688 = vrot.slane %v687, 1
        %v689 = vadd.f32 %v687, %v688
        %v690 = vsel %vm452, %v632, 0.0
        %v691 = vsel %vm452, %v633, 0.0
        %v692 = vadd.f32 %v690, %v691
        %v693 = vrot.slane %v692, 4
        %v694 = vadd.f32 %v692, %v693
        %v695 = vrot.slane %v694, 2
        %v696 = vadd.f32 %v694, %v695
        %v697 = vrot.slane %v696, 1
        %v698 = vadd.f32 %v696, %v697
        %v699 = vsel %vm452, %v634, 0.0
        %v700 = vsel %vm452, %v635, 0.0
        %v701 = vadd.f32 %v699, %v700
        %v702 = vrot.slane %v701, 4
        %v703 = vadd.f32 %v701, %v702
        %v704 = vrot.slane %v703, 2
        %v705 = vadd.f32 %v703, %v704
        %v706 = vrot.slane %v705, 1
        %v707 = vadd.f32 %v705, %v706
        %v708 = vmul.f32 %v644, 0.0625
        %v709 = vmul.f32 %v653, 0.0625
        %v710 = vmul.f32 %v662, 0.0625
        %v711 = vmul.f32 %v671, 0.0625
        %v712 = vmul.f32 %v680, 0.0625
        %v713 = vmul.f32 %v689, 0.0625
        %v714 = vmul.f32 %v698, 0.0625
        %v715 = vmul.f32 %v707, 0.0625
        %v716 = vpack.c.bf16 %v708, %v708
        %v717 = vpack.c.bf16 %v709, %v709
        %v718 = vpack.c.bf16 %v710, %v710
        %v719 = vpack.c.bf16 %v711, %v711
        %v720 = vpack.c.bf16 %v712, %v712
        %v721 = vpack.c.bf16 %v713, %v713
        %v722 = vpack.c.bf16 %v714, %v714
        %v723 = vpack.c.bf16 %v715, %v715
        %v724 = vld [vmem:[%s1] sm:$0xf]
        %v725 = vld [vmem:[%s1 + $0x4] sm:$0xf]
        %v726 = vld [vmem:[%s1 + $0x8] sm:$0xf]
        %v727 = vld [vmem:[%s1 + $0xc] sm:$0xf]
        %v728 = vld [vmem:[%s1 + $0x10] sm:$0xf]
        %v729 = vld [vmem:[%s1 + $0x14] sm:$0xf]
        %v730 = vld [vmem:[%s1 + $0x18] sm:$0xf]
        %v731 = vld [vmem:[%s1 + $0x1c] sm:$0xf]
        %v732 = vld [vmem:[%s4] sm:$0x1]
        %v734 = vperm.slane %v732, 0
        %v744 = vunpack.c.l.b16 %v716
        %v745 = vunpack.c.l.b16 %v717
        %v746 = vunpack.c.l.b16 %v718
        %v747 = vunpack.c.l.b16 %v719
        %v748 = vunpack.c.l.b16 %v720
        %v749 = vunpack.c.l.b16 %v721
        %v750 = vunpack.c.l.b16 %v722
        %v751 = vunpack.c.l.b16 %v723
        %vm752 = vcmask 1041409
        %v753 = vsel %vm752, %v745, %v744
        %vm754 = vcmask 1042434
        %v755 = vsel %vm754, %v746, %v753
        %vm756 = vcmask 1043459
        %v757 = vsel %vm756, %v747, %v755
        %vm758 = vcmask 1044484
        %v759 = vsel %vm758, %v748, %v757
        %vm760 = vcmask 1045509
        %v761 = vsel %vm760, %v749, %v759
        %vm762 = vcmask 1046534
        %v763 = vsel %vm762, %v750, %v761
        %vm764 = vcmask 1047559
        %v765 = vsel %vm764, %v751, %v763
        %v766 = vpack.c.b16 %v765, %v765
        %v775 = vunpack.c.l.b16 %v724
        %v776 = vunpack.c.l.b16 %v725
        %v777 = vunpack.c.l.b16 %v726
        %v778 = vunpack.c.l.b16 %v727
        %v779 = vunpack.c.l.b16 %v728
        %v780 = vunpack.c.l.b16 %v729
        %v781 = vunpack.c.l.b16 %v730
        %v782 = vunpack.c.l.b16 %v731
        %v783 = vpack.c.b16 %v776, %v775
        %v784 = vpack.c.b16 %v778, %v777
        %v785 = vpack.c.b16 %v780, %v779
        %v786 = vpack.c.b16 %v782, %v781
        %v792 = vsel %vm452, %v766, 0
        %794 = vmatpush.bf16.msra.mxu0 0
        %795 = vmatpush.bf16.msra.mxu0 0
        %796 = vmatpush.bf16.msra.mxu0 0
        %797 = vmatpush.bf16.msra.mxu0 0
        %798 = vmatpush.bf16.msra.mxu0 %v786
        %799 = vmatpush.bf16.msra.mxu0 %v785
        %800 = vmatpush.bf16.msra.mxu0 %v784
        %801 = vmatpush.bf16.msra.mxu0 %v783
        %802 = vmatmul.bf16.gmra.mxu0 %v792
        %v803 = vpop.f32.mrf.mxu0
        %v804 = vadd.f32 %v734, %v803
        %v805 = vpop.f32.mrf.mxu0
        %806 = vdwg.mxu0
        %v807 = vld [vmem:[%s8] sm:$0xff]
        %v808 = vld [vmem:[%s8 + $0x8] sm:$0xff]
        %v809 = vld [vmem:[%s8 + $0x10] sm:$0xff]
        %v810 = vld [vmem:[%s8 + $0x18] sm:$0xff]
        %v811 = vld [vmem:[%s8 + $0x20] sm:$0xff]
        %v812 = vld [vmem:[%s8 + $0x28] sm:$0xff]
        %v813 = vld [vmem:[%s8 + $0x30] sm:$0xff]
        %v814 = vld [vmem:[%s8 + $0x38] sm:$0xff]
        %v816 = vrot.slane %v804, 1
        %v817 = vrot.slane %v804, 2
        %v818 = vrot.slane %v804, 3
        %v819 = vrot.slane %v804, 4
        %v820 = vrot.slane %v804, 5
        %v821 = vrot.slane %v804, 6
        %v822 = vrot.slane %v804, 7
        %v823 = vperm.slane %v804, 0
        %v824 = vperm.slane %v816, 0
        %v825 = vperm.slane %v817, 0
        %v826 = vperm.slane %v818, 0
        %v827 = vperm.slane %v819, 0
        %v828 = vperm.slane %v820, 0
        %v829 = vperm.slane %v821, 0
        %v830 = vperm.slane %v822, 0
        %v839 = vmul.f32 %v823, %v528
        %v840 = vmul.f32 %v823, %v529
        %v841 = vmul.f32 %v824, %v530
        %v842 = vmul.f32 %v824, %v531
        %v843 = vmul.f32 %v825, %v532
        %v844 = vmul.f32 %v825, %v533
        %v845 = vmul.f32 %v826, %v534
        %v846 = vmul.f32 %v826, %v535
        %v847 = vmul.f32 %v827, %v536
        %v848 = vmul.f32 %v827, %v537
        %v849 = vmul.f32 %v828, %v538
        %v850 = vmul.f32 %v828, %v539
        %v851 = vmul.f32 %v829, %v540
        %v852 = vmul.f32 %v829, %v541
        %v853 = vmul.f32 %v830, %v542
        %v854 = vmul.f32 %v830, %v543
        %v856 = vsel %vm452, %v839, 0
        %v859 = vsel %vm452, %v840, 0
        %v862 = vsel %vm452, %v841, 0
        %v865 = vsel %vm452, %v842, 0
        %v868 = vsel %vm452, %v843, 0
        %v871 = vsel %vm452, %v844, 0
        %v874 = vsel %vm452, %v845, 0
        %v877 = vsel %vm452, %v846, 0
        %v880 = vsel %vm452, %v847, 0
        %v883 = vsel %vm452, %v848, 0
        %v886 = vsel %vm452, %v849, 0
        %v889 = vsel %vm452, %v850, 0
        %v892 = vsel %vm452, %v851, 0
        %v895 = vsel %vm452, %v852, 0
        %v898 = vsel %vm452, %v853, 0
        %v901 = vsel %vm452, %v854, 0
        %903 = vmatpush.msra.mxu0 0.0
        %904 = vmatpush.msra.mxu0 0.0
        %905 = vmatpush.msra.mxu0 0.0
        %906 = vmatpush.msra.mxu0 0.0
        %907 = vmatpush.msra.mxu0 0.0
        %908 = vmatpush.msra.mxu0 0.0
        %909 = vmatpush.msra.mxu0 0.0
        %910 = vmatpush.msra.mxu0 0.0
        %911 = vmatpush.msra.mxu0 %v814
        %912 = vmatpush.msra.mxu0 %v813
        %913 = vmatpush.msra.mxu0 %v812
        %914 = vmatpush.msra.mxu0 %v811
        %915 = vmatpush.msra.mxu0 %v810
        %916 = vmatpush.msra.mxu0 %v809
        %917 = vmatpush.msra.mxu0 %v808
        %918 = vmatpush.msra.mxu0 %v807
        %919 = vmatmul.f32.gmra.mxu0 %v856
        %v920 = vpop.f32.mrf.mxu0
        %v921 = vadd.f32 0.0, %v920
        %922 = vmatmul.f32.gmra.mxu0 %v859
        %v923 = vpop.f32.mrf.mxu0
        %v924 = vadd.f32 0.0, %v923
        %925 = vmatmul.f32.gmra.mxu0 %v862
        %v926 = vpop.f32.mrf.mxu0
        %v927 = vadd.f32 0.0, %v926
        %928 = vmatmul.f32.gmra.mxu0 %v865
        %v929 = vpop.f32.mrf.mxu0
        %v930 = vadd.f32 0.0, %v929
        %931 = vmatmul.f32.gmra.mxu0 %v868
        %v932 = vpop.f32.mrf.mxu0
        %v933 = vadd.f32 0.0, %v932
        %934 = vmatmul.f32.gmra.mxu0 %v871
        %v935 = vpop.f32.mrf.mxu0
        %v936 = vadd.f32 0.0, %v935
        %937 = vmatmul.f32.gmra.mxu0 %v874
        %v938 = vpop.f32.mrf.mxu0
        %v939 = vadd.f32 0.0, %v938
        %940 = vmatmul.f32.gmra.mxu0 %v877
        %v941 = vpop.f32.mrf.mxu0
        %v942 = vadd.f32 0.0, %v941
        %943 = vmatmul.f32.gmra.mxu0 %v880
        %v944 = vpop.f32.mrf.mxu0
        %v945 = vadd.f32 0.0, %v944
        %946 = vmatmul.f32.gmra.mxu0 %v883
        %v947 = vpop.f32.mrf.mxu0
        %v948 = vadd.f32 0.0, %v947
        %949 = vmatmul.f32.gmra.mxu0 %v886
        %v950 = vpop.f32.mrf.mxu0
        %v951 = vadd.f32 0.0, %v950
        %952 = vmatmul.f32.gmra.mxu0 %v889
        %v953 = vpop.f32.mrf.mxu0
        %v954 = vadd.f32 0.0, %v953
        %955 = vmatmul.f32.gmra.mxu0 %v892
        %v956 = vpop.f32.mrf.mxu0
        %v957 = vadd.f32 0.0, %v956
        %958 = vmatmul.f32.gmra.mxu0 %v895
        %v959 = vpop.f32.mrf.mxu0
        %v960 = vadd.f32 0.0, %v959
        %961 = vmatmul.f32.gmra.mxu0 %v898
        %v962 = vpop.f32.mrf.mxu0
        %v963 = vadd.f32 0.0, %v962
        %964 = vmatmul.f32.gmra.mxu0 %v901
        %v965 = vpop.f32.mrf.mxu0
        %v966 = vadd.f32 0.0, %v965
        %967 = vdwg.mxu0
        %v976 = vrot.slane %v613, 7
        %v977 = vsel %vm752, %v976, %v612
        %v978 = vrot.slane %v614, 6
        %v979 = vsel %vm754, %v978, %v977
        %v980 = vrot.slane %v615, 5
        %v981 = vsel %vm756, %v980, %v979
        %v982 = vrot.slane %v616, 4
        %v983 = vsel %vm758, %v982, %v981
        %v984 = vrot.slane %v617, 3
        %v985 = vsel %vm760, %v984, %v983
        %v986 = vrot.slane %v618, 2
        %v987 = vsel %vm762, %v986, %v985
        %v988 = vrot.slane %v619, 1
        %v989 = vsel %vm764, %v988, %v987
        %v991 = vmul.f32 %v804, %v989
        %v993 = vsel %vm452, %v991, 0
        %995 = vmatpush.msra.mxu0 0.0
        %996 = vmatpush.msra.mxu0 0.0
        %997 = vmatpush.msra.mxu0 0.0
        %998 = vmatpush.msra.mxu0 0.0
        %999 = vmatpush.msra.mxu0 0.0
        %1000 = vmatpush.msra.mxu0 0.0
        %1001 = vmatpush.msra.mxu0 0.0
        %1002 = vmatpush.msra.mxu0 0.0
        %1003 = vmatpush.msra.mxu0 %v814
        %1004 = vmatpush.msra.mxu0 %v813
        %1005 = vmatpush.msra.mxu0 %v812
        %1006 = vmatpush.msra.mxu0 %v811
        %1007 = vmatpush.msra.mxu0 %v810
        %1008 = vmatpush.msra.mxu0 %v809
        %1009 = vmatpush.msra.mxu0 %v808
        %1010 = vmatpush.msra.mxu0 %v807
        %1011 = vmatmul.f32.gmra.mxu0 %v993
        %v1012 = vpop.f32.mrf.mxu0
        %v1013 = vadd.f32 0.0, %v1012
        %1014 = vdwg.mxu0
        %vm1015 = vcmask 31744
        %v1016 = vsel %vm1015, %v921, -inf
        %v1017 = vsel %vm1015, %v924, -inf
        %v1018 = vmax.f32 %v1016, %v1017
        %v1019 = vrot.slane %v1018, 4
        %v1020 = vmax.f32 %v1018, %v1019
        %v1021 = vrot.slane %v1020, 2
        %v1022 = vmax.f32 %v1020, %v1021
        %v1023 = vrot.slane %v1022, 1
        %v1024 = vmax.f32 %v1022, %v1023
        %v1025 = vsel %vm1015, %v927, -inf
        %v1026 = vsel %vm1015, %v930, -inf
        %v1027 = vmax.f32 %v1025, %v1026
        %v1028 = vrot.slane %v1027, 4
        %v1029 = vmax.f32 %v1027, %v1028
        %v1030 = vrot.slane %v1029, 2
        %v1031 = vmax.f32 %v1029, %v1030
        %v1032 = vrot.slane %v1031, 1
        %v1033 = vmax.f32 %v1031, %v1032
        %v1034 = vsel %vm1015, %v933, -inf
        %v1035 = vsel %vm1015, %v936, -inf
        %v1036 = vmax.f32 %v1034, %v1035
        %v1037 = vrot.slane %v1036, 4
        %v1038 = vmax.f32 %v1036, %v1037
        %v1039 = vrot.slane %v1038, 2
        %v1040 = vmax.f32 %v1038, %v1039
        %v1041 = vrot.slane %v1040, 1
        %v1042 = vmax.f32 %v1040, %v1041
        %v1043 = vsel %vm1015, %v939, -inf
        %v1044 = vsel %vm1015, %v942, -inf
        %v1045 = vmax.f32 %v1043, %v1044
        %v1046 = vrot.slane %v1045, 4
        %v1047 = vmax.f32 %v1045, %v1046
        %v1048 = vrot.slane %v1047, 2
        %v1049 = vmax.f32 %v1047, %v1048
        %v1050 = vrot.slane %v1049, 1
        %v1051 = vmax.f32 %v1049, %v1050
        %v1052 = vsel %vm1015, %v945, -inf
        %v1053 = vsel %vm1015, %v948, -inf
        %v1054 = vmax.f32 %v1052, %v1053
        %v1055 = vrot.slane %v1054, 4
        %v1056 = vmax.f32 %v1054, %v1055
        %v1057 = vrot.slane %v1056, 2
        %v1058 = vmax.f32 %v1056, %v1057
        %v1059 = vrot.slane %v1058, 1
        %v1060 = vmax.f32 %v1058, %v1059
        %v1061 = vsel %vm1015, %v951, -inf
        %v1062 = vsel %vm1015, %v954, -inf
        %v1063 = vmax.f32 %v1061, %v1062
        %v1064 = vrot.slane %v1063, 4
        %v1065 = vmax.f32 %v1063, %v1064
        %v1066 = vrot.slane %v1065, 2
        %v1067 = vmax.f32 %v1065, %v1066
        %v1068 = vrot.slane %v1067, 1
        %v1069 = vmax.f32 %v1067, %v1068
        %v1070 = vsel %vm1015, %v957, -inf
        %v1071 = vsel %vm1015, %v960, -inf
        %v1072 = vmax.f32 %v1070, %v1071
        %v1073 = vrot.slane %v1072, 4
        %v1074 = vmax.f32 %v1072, %v1073
        %v1075 = vrot.slane %v1074, 2
        %v1076 = vmax.f32 %v1074, %v1075
        %v1077 = vrot.slane %v1076, 1
        %v1078 = vmax.f32 %v1076, %v1077
        %v1079 = vsel %vm1015, %v963, -inf
        %v1080 = vsel %vm1015, %v966, -inf
        %v1081 = vmax.f32 %v1079, %v1080
        %v1082 = vrot.slane %v1081, 4
        %v1083 = vmax.f32 %v1081, %v1082
        %v1084 = vrot.slane %v1083, 2
        %v1085 = vmax.f32 %v1083, %v1084
        %v1086 = vrot.slane %v1085, 1
        %v1087 = vmax.f32 %v1085, %v1086
        %v1089 = vrot.slane %v1013, 1
        %v1090 = vrot.slane %v1013, 2
        %v1091 = vrot.slane %v1013, 3
        %v1092 = vrot.slane %v1013, 4
        %v1093 = vrot.slane %v1013, 5
        %v1094 = vrot.slane %v1013, 6
        %v1095 = vrot.slane %v1013, 7
        %v1104 = vmax.f32 %v1024, %v1013
        %v1105 = vmax.f32 %v1033, %v1089
        %v1106 = vmax.f32 %v1042, %v1090
        %v1107 = vmax.f32 %v1051, %v1091
        %v1108 = vmax.f32 %v1060, %v1092
        %v1109 = vmax.f32 %v1069, %v1093
        %v1110 = vmax.f32 %v1078, %v1094
        %v1111 = vmax.f32 %v1087, %v1095
        %v1112 = vperm.slane %v1104, 0
        %v1113 = vperm.slane %v1105, 0
        %v1114 = vperm.slane %v1106, 0
        %v1115 = vperm.slane %v1107, 0
        %v1116 = vperm.slane %v1108, 0
        %v1117 = vperm.slane %v1109, 0
        %v1118 = vperm.slane %v1110, 0
        %v1119 = vperm.slane %v1111, 0
        %v1120 = vsub.f32 %v921, %v1112
        %v1121 = vsub.f32 %v924, %v1112
        %v1122 = vsub.f32 %v927, %v1113
        %v1123 = vsub.f32 %v930, %v1113
        %v1124 = vsub.f32 %v933, %v1114
        %v1125 = vsub.f32 %v936, %v1114
        %v1126 = vsub.f32 %v939, %v1115
        %v1127 = vsub.f32 %v942, %v1115
        %v1128 = vsub.f32 %v945, %v1116
        %v1129 = vsub.f32 %v948, %v1116
        %v1130 = vsub.f32 %v951, %v1117
        %v1131 = vsub.f32 %v954, %v1117
        %v1132 = vsub.f32 %v957, %v1118
        %v1133 = vsub.f32 %v960, %v1118
        %v1134 = vsub.f32 %v963, %v1119
        %v1135 = vsub.f32 %v966, %v1119
        %v1136 = vmul.f32 %v1120, 1.442695
        %v1137 = vpow.pop %v1136
        %v1138 = vmul.f32 %v1121, 1.442695
        %v1139 = vpow.pop %v1138
        %v1140 = vmul.f32 %v1122, 1.442695
        %v1141 = vpow.pop %v1140
        %v1142 = vmul.f32 %v1123, 1.442695
        %v1143 = vpow.pop %v1142
        %v1144 = vmul.f32 %v1124, 1.442695
        %v1145 = vpow.pop %v1144
        %v1146 = vmul.f32 %v1125, 1.442695
        %v1147 = vpow.pop %v1146
        %v1148 = vmul.f32 %v1126, 1.442695
        %v1149 = vpow.pop %v1148
        %v1150 = vmul.f32 %v1127, 1.442695
        %v1151 = vpow.pop %v1150
        %v1152 = vmul.f32 %v1128, 1.442695
        %v1153 = vpow.pop %v1152
        %v1154 = vmul.f32 %v1129, 1.442695
        %v1155 = vpow.pop %v1154
        %v1156 = vmul.f32 %v1130, 1.442695
        %v1157 = vpow.pop %v1156
        %v1158 = vmul.f32 %v1131, 1.442695
        %v1159 = vpow.pop %v1158
        %v1160 = vmul.f32 %v1132, 1.442695
        %v1161 = vpow.pop %v1160
        %v1162 = vmul.f32 %v1133, 1.442695
        %v1163 = vpow.pop %v1162
        %v1164 = vmul.f32 %v1134, 1.442695
        %v1165 = vpow.pop %v1164
        %v1166 = vmul.f32 %v1135, 1.442695
        %v1167 = vpow.pop %v1166
        %v1176 = vrot.slane %v1105, 7
        %v1177 = vsel %vm752, %v1176, %v1104
        %v1178 = vrot.slane %v1106, 6
        %v1179 = vsel %vm754, %v1178, %v1177
        %v1180 = vrot.slane %v1107, 5
        %v1181 = vsel %vm756, %v1180, %v1179
        %v1182 = vrot.slane %v1108, 4
        %v1183 = vsel %vm758, %v1182, %v1181
        %v1184 = vrot.slane %v1109, 3
        %v1185 = vsel %vm760, %v1184, %v1183
        %v1186 = vrot.slane %v1110, 2
        %v1187 = vsel %vm762, %v1186, %v1185
        %v1188 = vrot.slane %v1111, 1
        %v1189 = vsel %vm764, %v1188, %v1187
        %v1191 = vsub.f32 %v1013, %v1189
        %v1192 = vmul.f32 %v1191, 1.442695
        %v1193 = vpow.pop %v1192
        %v1194 = vsel %vm1015, %v1137, 0.0
        %v1195 = vsel %vm1015, %v1139, 0.0
        %v1196 = vadd.f32 %v1194, %v1195
        %v1197 = vrot.slane %v1196, 4
        %v1198 = vadd.f32 %v1196, %v1197
        %v1199 = vrot.slane %v1198, 2
        %v1200 = vadd.f32 %v1198, %v1199
        %v1201 = vrot.slane %v1200, 1
        %v1202 = vadd.f32 %v1200, %v1201
        %v1203 = vsel %vm1015, %v1141, 0.0
        %v1204 = vsel %vm1015, %v1143, 0.0
        %v1205 = vadd.f32 %v1203, %v1204
        %v1206 = vrot.slane %v1205, 4
        %v1207 = vadd.f32 %v1205, %v1206
        %v1208 = vrot.slane %v1207, 2
        %v1209 = vadd.f32 %v1207, %v1208
        %v1210 = vrot.slane %v1209, 1
        %v1211 = vadd.f32 %v1209, %v1210
        %v1212 = vsel %vm1015, %v1145, 0.0
        %v1213 = vsel %vm1015, %v1147, 0.0
        %v1214 = vadd.f32 %v1212, %v1213
        %v1215 = vrot.slane %v1214, 4
        %v1216 = vadd.f32 %v1214, %v1215
        %v1217 = vrot.slane %v1216, 2
        %v1218 = vadd.f32 %v1216, %v1217
        %v1219 = vrot.slane %v1218, 1
        %v1220 = vadd.f32 %v1218, %v1219
        %v1221 = vsel %vm1015, %v1149, 0.0
        %v1222 = vsel %vm1015, %v1151, 0.0
        %v1223 = vadd.f32 %v1221, %v1222
        %v1224 = vrot.slane %v1223, 4
        %v1225 = vadd.f32 %v1223, %v1224
        %v1226 = vrot.slane %v1225, 2
        %v1227 = vadd.f32 %v1225, %v1226
        %v1228 = vrot.slane %v1227, 1
        %v1229 = vadd.f32 %v1227, %v1228
        %v1230 = vsel %vm1015, %v1153, 0.0
        %v1231 = vsel %vm1015, %v1155, 0.0
        %v1232 = vadd.f32 %v1230, %v1231
        %v1233 = vrot.slane %v1232, 4
        %v1234 = vadd.f32 %v1232, %v1233
        %v1235 = vrot.slane %v1234, 2
        %v1236 = vadd.f32 %v1234, %v1235
        %v1237 = vrot.slane %v1236, 1
        %v1238 = vadd.f32 %v1236, %v1237
        %v1239 = vsel %vm1015, %v1157, 0.0
        %v1240 = vsel %vm1015, %v1159, 0.0
        %v1241 = vadd.f32 %v1239, %v1240
        %v1242 = vrot.slane %v1241, 4
        %v1243 = vadd.f32 %v1241, %v1242
        %v1244 = vrot.slane %v1243, 2
        %v1245 = vadd.f32 %v1243, %v1244
        %v1246 = vrot.slane %v1245, 1
        %v1247 = vadd.f32 %v1245, %v1246
        %v1248 = vsel %vm1015, %v1161, 0.0
        %v1249 = vsel %vm1015, %v1163, 0.0
        %v1250 = vadd.f32 %v1248, %v1249
        %v1251 = vrot.slane %v1250, 4
        %v1252 = vadd.f32 %v1250, %v1251
        %v1253 = vrot.slane %v1252, 2
        %v1254 = vadd.f32 %v1252, %v1253
        %v1255 = vrot.slane %v1254, 1
        %v1256 = vadd.f32 %v1254, %v1255
        %v1257 = vsel %vm1015, %v1165, 0.0
        %v1258 = vsel %vm1015, %v1167, 0.0
        %v1259 = vadd.f32 %v1257, %v1258
        %v1260 = vrot.slane %v1259, 4
        %v1261 = vadd.f32 %v1259, %v1260
        %v1262 = vrot.slane %v1261, 2
        %v1263 = vadd.f32 %v1261, %v1262
        %v1264 = vrot.slane %v1263, 1
        %v1265 = vadd.f32 %v1263, %v1264
        %v1267 = vrot.slane %v1193, 1
        %v1268 = vrot.slane %v1193, 2
        %v1269 = vrot.slane %v1193, 3
        %v1270 = vrot.slane %v1193, 4
        %v1271 = vrot.slane %v1193, 5
        %v1272 = vrot.slane %v1193, 6
        %v1273 = vrot.slane %v1193, 7
        %v1282 = vadd.f32 %v1202, %v1193
        %v1283 = vadd.f32 %v1211, %v1267
        %v1284 = vadd.f32 %v1220, %v1268
        %v1285 = vadd.f32 %v1229, %v1269
        %v1286 = vadd.f32 %v1238, %v1270
        %v1287 = vadd.f32 %v1247, %v1271
        %v1288 = vadd.f32 %v1256, %v1272
        %v1289 = vadd.f32 %v1265, %v1273
        %v1290 = vrcp.pop %v1282
        %v1291 = vrcp.pop %v1283
        %v1292 = vrcp.pop %v1284
        %v1293 = vrcp.pop %v1285
        %v1294 = vrcp.pop %v1286
        %v1295 = vrcp.pop %v1287
        %v1296 = vrcp.pop %v1288
        %v1297 = vrcp.pop %v1289
        %v1298 = vperm.slane %v1290, 0
        %v1299 = vperm.slane %v1291, 0
        %v1300 = vperm.slane %v1292, 0
        %v1301 = vperm.slane %v1293, 0
        %v1302 = vperm.slane %v1294, 0
        %v1303 = vperm.slane %v1295, 0
        %v1304 = vperm.slane %v1296, 0
        %v1305 = vperm.slane %v1297, 0
        %v1306 = vmul.f32 %v1137, %v1298
        %v1307 = vmul.f32 %v1139, %v1298
        %v1308 = vmul.f32 %v1141, %v1299
        %v1309 = vmul.f32 %v1143, %v1299
        %v1310 = vmul.f32 %v1145, %v1300
        %v1311 = vmul.f32 %v1147, %v1300
        %v1312 = vmul.f32 %v1149, %v1301
        %v1313 = vmul.f32 %v1151, %v1301
        %v1314 = vmul.f32 %v1153, %v1302
        %v1315 = vmul.f32 %v1155, %v1302
        %v1316 = vmul.f32 %v1157, %v1303
        %v1317 = vmul.f32 %v1159, %v1303
        %v1318 = vmul.f32 %v1161, %v1304
        %v1319 = vmul.f32 %v1163, %v1304
        %v1320 = vmul.f32 %v1165, %v1305
        %v1321 = vmul.f32 %v1167, %v1305
        %v1330 = vrot.slane %v1291, 7
        %v1331 = vsel %vm752, %v1330, %v1290
        %v1332 = vrot.slane %v1292, 6
        %v1333 = vsel %vm754, %v1332, %v1331
        %v1334 = vrot.slane %v1293, 5
        %v1335 = vsel %vm756, %v1334, %v1333
        %v1336 = vrot.slane %v1294, 4
        %v1337 = vsel %vm758, %v1336, %v1335
        %v1338 = vrot.slane %v1295, 3
        %v1339 = vsel %vm760, %v1338, %v1337
        %v1340 = vrot.slane %v1296, 2
        %v1341 = vsel %vm762, %v1340, %v1339
        %v1342 = vrot.slane %v1297, 1
        %v1343 = vsel %vm764, %v1342, %v1341
        %v1345 = vmul.f32 %v1193, %v1343
        %v1346 = vld [vmem:[%s9] sm:$0x3]
        %v1347 = vpack.c.bf16 %v1307, %v1306
        %v1348 = vpack.c.bf16 %v1309, %v1308
        %v1349 = vpack.c.bf16 %v1311, %v1310
        %v1350 = vpack.c.bf16 %v1313, %v1312
        %v1351 = vpack.c.bf16 %v1315, %v1314
        %v1352 = vpack.c.bf16 %v1317, %v1316
        %v1353 = vpack.c.bf16 %v1319, %v1318
        %v1354 = vpack.c.bf16 %v1321, %v1320
        %v1356 = vsel %vm1015, %v1347, 0
        %v1359 = vsel %vm1015, %v1348, 0
        %v1362 = vsel %vm1015, %v1349, 0
        %v1365 = vsel %vm1015, %v1350, 0
        %v1368 = vsel %vm1015, %v1351, 0
        %v1371 = vsel %vm1015, %v1352, 0
        %v1374 = vsel %vm1015, %v1353, 0
        %v1377 = vsel %vm1015, %v1354, 0
        %vm1379 = vcmask 1041408
        %v1381 = vsel %vm1379, %v1346, 0
        %1383 = vmatpush.bf16.msra.mxu0 0
        %1384 = vmatpush.bf16.msra.mxu0 0
        %1385 = vmatpush.bf16.msra.mxu0 0
        %1386 = vmatpush.bf16.msra.mxu0 0
        %1387 = vmatpush.bf16.msra.mxu0 0
        %1388 = vmatpush.bf16.msra.mxu0 0
        %1389 = vmatpush.bf16.msra.mxu0 0
        %1390 = vmatpush.bf16.msra.mxu0 %v1381
        %1391 = vmatmul.bf16.gmra.mxu0 %v1356
        %v1392 = vpop.f32.mrf.mxu0
        %v1393 = vadd.f32 0.0, %v1392
        %v1394 = vpop.f32.mrf.mxu0
        %v1395 = vadd.f32 0.0, %v1394
        %1396 = vmatmul.bf16.gmra.mxu0 %v1359
        %v1397 = vpop.f32.mrf.mxu0
        %v1398 = vadd.f32 0.0, %v1397
        %v1399 = vpop.f32.mrf.mxu0
        %v1400 = vadd.f32 0.0, %v1399
        %1401 = vmatmul.bf16.gmra.mxu0 %v1362
        %v1402 = vpop.f32.mrf.mxu0
        %v1403 = vadd.f32 0.0, %v1402
        %v1404 = vpop.f32.mrf.mxu0
        %v1405 = vadd.f32 0.0, %v1404
        %1406 = vmatmul.bf16.gmra.mxu0 %v1365
        %v1407 = vpop.f32.mrf.mxu0
        %v1408 = vadd.f32 0.0, %v1407
        %v1409 = vpop.f32.mrf.mxu0
        %v1410 = vadd.f32 0.0, %v1409
        %1411 = vmatmul.bf16.gmra.mxu0 %v1368
        %v1412 = vpop.f32.mrf.mxu0
        %v1413 = vadd.f32 0.0, %v1412
        %v1414 = vpop.f32.mrf.mxu0
        %v1415 = vadd.f32 0.0, %v1414
        %1416 = vmatmul.bf16.gmra.mxu0 %v1371
        %v1417 = vpop.f32.mrf.mxu0
        %v1418 = vadd.f32 0.0, %v1417
        %v1419 = vpop.f32.mrf.mxu0
        %v1420 = vadd.f32 0.0, %v1419
        %1421 = vmatmul.bf16.gmra.mxu0 %v1374
        %v1422 = vpop.f32.mrf.mxu0
        %v1423 = vadd.f32 0.0, %v1422
        %v1424 = vpop.f32.mrf.mxu0
        %v1425 = vadd.f32 0.0, %v1424
        %1426 = vmatmul.bf16.gmra.mxu0 %v1377
        %v1427 = vpop.f32.mrf.mxu0
        %v1428 = vadd.f32 0.0, %v1427
        %v1429 = vpop.f32.mrf.mxu0
        %v1430 = vadd.f32 0.0, %v1429
        %1431 = vdwg.mxu0
        %1448 = vrot.lane.b32.xlu0 %v528, 64
        %v1449 = vpop.permute.xlu0 %1448
        %1450 = vrot.lane.b32.xlu0 %v529, 64
        %v1451 = vpop.permute.xlu0 %1450
        %1452 = vrot.lane.b32.xlu0 %v530, 64
        %v1453 = vpop.permute.xlu0 %1452
        %1454 = vrot.lane.b32.xlu0 %v531, 64
        %v1455 = vpop.permute.xlu0 %1454
        %1456 = vrot.lane.b32.xlu0 %v532, 64
        %v1457 = vpop.permute.xlu0 %1456
        %1458 = vrot.lane.b32.xlu0 %v533, 64
        %v1459 = vpop.permute.xlu0 %1458
        %1460 = vrot.lane.b32.xlu0 %v534, 64
        %v1461 = vpop.permute.xlu0 %1460
        %1462 = vrot.lane.b32.xlu0 %v535, 64
        %v1463 = vpop.permute.xlu0 %1462
        %1464 = vrot.lane.b32.xlu0 %v536, 64
        %v1465 = vpop.permute.xlu0 %1464
        %1466 = vrot.lane.b32.xlu0 %v537, 64
        %v1467 = vpop.permute.xlu0 %1466
        %1468 = vrot.lane.b32.xlu0 %v538, 64
        %v1469 = vpop.permute.xlu0 %1468
        %1470 = vrot.lane.b32.xlu0 %v539, 64
        %v1471 = vpop.permute.xlu0 %1470
        %1472 = vrot.lane.b32.xlu0 %v540, 64
        %v1473 = vpop.permute.xlu0 %1472
        %1474 = vrot.lane.b32.xlu0 %v541, 64
        %v1475 = vpop.permute.xlu0 %1474
        %1476 = vrot.lane.b32.xlu0 %v542, 64
        %v1477 = vpop.permute.xlu0 %1476
        %1478 = vrot.lane.b32.xlu0 %v543, 64
        %v1479 = vpop.permute.xlu0 %1478
        %v1496 = vmul.f32 %v1393, %v1449
        %v1497 = vmul.f32 %v1395, %v1451
        %v1498 = vmul.f32 %v1398, %v1453
        %v1499 = vmul.f32 %v1400, %v1455
        %v1500 = vmul.f32 %v1403, %v1457
        %v1501 = vmul.f32 %v1405, %v1459
        %v1502 = vmul.f32 %v1408, %v1461
        %v1503 = vmul.f32 %v1410, %v1463
        %v1504 = vmul.f32 %v1413, %v1465
        %v1505 = vmul.f32 %v1415, %v1467
        %v1506 = vmul.f32 %v1418, %v1469
        %v1507 = vmul.f32 %v1420, %v1471
        %v1508 = vmul.f32 %v1423, %v1473
        %v1509 = vmul.f32 %v1425, %v1475
        %v1510 = vmul.f32 %v1428, %v1477
        %v1511 = vmul.f32 %v1430, %v1479
        %v1512 = vsel %vm452, %v1496, 0.0
        %v1513 = vsel %vm452, %v1497, 0.0
        %v1514 = vadd.f32 %v1512, %v1513
        %v1515 = vrot.slane %v1514, 4
        %v1516 = vadd.f32 %v1514, %v1515
        %v1517 = vrot.slane %v1516, 2
        %v1518 = vadd.f32 %v1516, %v1517
        %v1519 = vrot.slane %v1518, 1
        %v1520 = vadd.f32 %v1518, %v1519
        %v1521 = vsel %vm452, %v1498, 0.0
        %v1522 = vsel %vm452, %v1499, 0.0
        %v1523 = vadd.f32 %v1521, %v1522
        %v1524 = vrot.slane %v1523, 4
        %v1525 = vadd.f32 %v1523, %v1524
        %v1526 = vrot.slane %v1525, 2
        %v1527 = vadd.f32 %v1525, %v1526
        %v1528 = vrot.slane %v1527, 1
        %v1529 = vadd.f32 %v1527, %v1528
        %v1530 = vsel %vm452, %v1500, 0.0
        %v1531 = vsel %vm452, %v1501, 0.0
        %v1532 = vadd.f32 %v1530, %v1531
        %v1533 = vrot.slane %v1532, 4
        %v1534 = vadd.f32 %v1532, %v1533
        %v1535 = vrot.slane %v1534, 2
        %v1536 = vadd.f32 %v1534, %v1535
        %v1537 = vrot.slane %v1536, 1
        %v1538 = vadd.f32 %v1536, %v1537
        %v1539 = vsel %vm452, %v1502, 0.0
        %v1540 = vsel %vm452, %v1503, 0.0
        %v1541 = vadd.f32 %v1539, %v1540
        %v1542 = vrot.slane %v1541, 4
        %v1543 = vadd.f32 %v1541, %v1542
        %v1544 = vrot.slane %v1543, 2
        %v1545 = vadd.f32 %v1543, %v1544
        %v1546 = vrot.slane %v1545, 1
        %v1547 = vadd.f32 %v1545, %v1546
        %v1548 = vsel %vm452, %v1504, 0.0
        %v1549 = vsel %vm452, %v1505, 0.0
        %v1550 = vadd.f32 %v1548, %v1549
        %v1551 = vrot.slane %v1550, 4
        %v1552 = vadd.f32 %v1550, %v1551
        %v1553 = vrot.slane %v1552, 2
        %v1554 = vadd.f32 %v1552, %v1553
        %v1555 = vrot.slane %v1554, 1
        %v1556 = vadd.f32 %v1554, %v1555
        %v1557 = vsel %vm452, %v1506, 0.0
        %v1558 = vsel %vm452, %v1507, 0.0
        %v1559 = vadd.f32 %v1557, %v1558
        %v1560 = vrot.slane %v1559, 4
        %v1561 = vadd.f32 %v1559, %v1560
        %v1562 = vrot.slane %v1561, 2
        %v1563 = vadd.f32 %v1561, %v1562
        %v1564 = vrot.slane %v1563, 1
        %v1565 = vadd.f32 %v1563, %v1564
        %v1566 = vsel %vm452, %v1508, 0.0
        %v1567 = vsel %vm452, %v1509, 0.0
        %v1568 = vadd.f32 %v1566, %v1567
        %v1569 = vrot.slane %v1568, 4
        %v1570 = vadd.f32 %v1568, %v1569
        %v1571 = vrot.slane %v1570, 2
        %v1572 = vadd.f32 %v1570, %v1571
        %v1573 = vrot.slane %v1572, 1
        %v1574 = vadd.f32 %v1572, %v1573
        %v1575 = vsel %vm452, %v1510, 0.0
        %v1576 = vsel %vm452, %v1511, 0.0
        %v1577 = vadd.f32 %v1575, %v1576
        %v1578 = vrot.slane %v1577, 4
        %v1579 = vadd.f32 %v1577, %v1578
        %v1580 = vrot.slane %v1579, 2
        %v1581 = vadd.f32 %v1579, %v1580
        %v1582 = vrot.slane %v1581, 1
        %v1583 = vadd.f32 %v1581, %v1582
        %v1584 = vpack.c.bf16 %v1345, %v1345
        %v1586 = vsel %vm1015, %v1584, 0
        %1588 = vmatpush.bf16.msra.mxu0 0
        %1589 = vmatpush.bf16.msra.mxu0 0
        %1590 = vmatpush.bf16.msra.mxu0 0
        %1591 = vmatpush.bf16.msra.mxu0 0
        %1592 = vmatpush.bf16.msra.mxu0 0
        %1593 = vmatpush.bf16.msra.mxu0 0
        %1594 = vmatpush.bf16.msra.mxu0 0
        %1595 = vmatpush.bf16.msra.mxu0 %v1381
        %1596 = vmatmul.bf16.gmra.mxu0 %v1586
        %v1597 = vpop.f32.mrf.mxu0
        %v1598 = vadd.f32 0.0, %v1597
        %v1599 = vpop.f32.mrf.mxu0
        %1600 = vdwg.mxu0
        %1601 = vrot.lane.b32.xlu0 %v989, 64
        %v1602 = vpop.permute.xlu0 %1601
        %v1604 = vmul.f32 %v1598, %v1602
        %v1606 = vrot.slane %v1604, 1
        %v1607 = vrot.slane %v1604, 2
        %v1608 = vrot.slane %v1604, 3
        %v1609 = vrot.slane %v1604, 4
        %v1610 = vrot.slane %v1604, 5
        %v1611 = vrot.slane %v1604, 6
        %v1612 = vrot.slane %v1604, 7
        %v1621 = vadd.f32 %v1520, %v1604
        %v1622 = vadd.f32 %v1529, %v1606
        %v1623 = vadd.f32 %v1538, %v1607
        %v1624 = vadd.f32 %v1547, %v1608
        %v1625 = vadd.f32 %v1556, %v1609
        %v1626 = vadd.f32 %v1565, %v1610
        %v1627 = vadd.f32 %v1574, %v1611
        %v1628 = vadd.f32 %v1583, %v1612
        %v1629 = vpack.c.bf16 %v1621, %v1621
        %v1630 = vpack.c.bf16 %v1622, %v1622
        %v1631 = vpack.c.bf16 %v1623, %v1623
        %v1632 = vpack.c.bf16 %v1624, %v1624
        %v1633 = vpack.c.bf16 %v1625, %v1625
        %v1634 = vpack.c.bf16 %v1626, %v1626
        %v1635 = vpack.c.bf16 %v1627, %v1627
        %v1636 = vpack.c.bf16 %v1628, %v1628
        %v1637 = vld [vmem:[%s3] sm:$0xf]
        %v1638 = vld [vmem:[%s3 + $0x4] sm:$0xf]
        %v1639 = vld [vmem:[%s3 + $0x8] sm:$0xf]
        %v1640 = vld [vmem:[%s3 + $0xc] sm:$0xf]
        %v1641 = vld [vmem:[%s3 + $0x10] sm:$0xf]
        %v1642 = vld [vmem:[%s3 + $0x14] sm:$0xf]
        %v1643 = vld [vmem:[%s3 + $0x18] sm:$0xf]
        %v1644 = vld [vmem:[%s3 + $0x1c] sm:$0xf]
        %v1645 = vld [vmem:[%s7] sm:$0x1]
        %v1647 = vperm.slane %v1645, 0
        %v1657 = vunpack.c.l.b16 %v1629
        %v1658 = vunpack.c.l.b16 %v1630
        %v1659 = vunpack.c.l.b16 %v1631
        %v1660 = vunpack.c.l.b16 %v1632
        %v1661 = vunpack.c.l.b16 %v1633
        %v1662 = vunpack.c.l.b16 %v1634
        %v1663 = vunpack.c.l.b16 %v1635
        %v1664 = vunpack.c.l.b16 %v1636
        %v1665 = vrot.slane %v1658, 7
        %v1666 = vsel %vm752, %v1665, %v1657
        %v1667 = vrot.slane %v1659, 6
        %v1668 = vsel %vm754, %v1667, %v1666
        %v1669 = vrot.slane %v1660, 5
        %v1670 = vsel %vm756, %v1669, %v1668
        %v1671 = vrot.slane %v1661, 4
        %v1672 = vsel %vm758, %v1671, %v1670
        %v1673 = vrot.slane %v1662, 3
        %v1674 = vsel %vm760, %v1673, %v1672
        %v1675 = vrot.slane %v1663, 2
        %v1676 = vsel %vm762, %v1675, %v1674
        %v1677 = vrot.slane %v1664, 1
        %v1678 = vsel %vm764, %v1677, %v1676
        %v1679 = vpack.c.b16 %v1678, %v1678
        %v1688 = vunpack.c.l.b16 %v1637
        %v1689 = vunpack.c.l.b16 %v1638
        %v1690 = vunpack.c.l.b16 %v1639
        %v1691 = vunpack.c.l.b16 %v1640
        %v1692 = vunpack.c.l.b16 %v1641
        %v1693 = vunpack.c.l.b16 %v1642
        %v1694 = vunpack.c.l.b16 %v1643
        %v1695 = vunpack.c.l.b16 %v1644
        %v1696 = vpack.c.b16 %v1689, %v1688
        %v1697 = vpack.c.b16 %v1691, %v1690
        %v1698 = vpack.c.b16 %v1693, %v1692
        %v1699 = vpack.c.b16 %v1695, %v1694
        %v1705 = vsel %vm452, %v1679, 0
        %1707 = vmatpush.bf16.msra.mxu0 0
        %1708 = vmatpush.bf16.msra.mxu0 0
        %1709 = vmatpush.bf16.msra.mxu0 0
        %1710 = vmatpush.bf16.msra.mxu0 0
        %1711 = vmatpush.bf16.msra.mxu0 %v1699
        %1712 = vmatpush.bf16.msra.mxu0 %v1698
        %1713 = vmatpush.bf16.msra.mxu0 %v1697
        %1714 = vmatpush.bf16.msra.mxu0 %v1696
        %1715 = vmatmul.bf16.gmra.mxu0 %v1705
        %v1716 = vpop.f32.mrf.mxu0
        %v1717 = vadd.f32 %v1647, %v1716
        %v1718 = vpop.f32.mrf.mxu0
        %1719 = vdwg.mxu0
        %1720 = vst [vmem:[%s355] sm:$0xff] %v1717
        %s1721 = sand.u32 %s247, 1
        %s1722 = scalar_lea.sflag [#allocation3], %s1721
        %s1723 = sand.u32 %s247, 1
        %s1724 = smul.addr %s1723, 8
        %s1725 = scalar_lea.vmem [#allocation2], %s1724
        // Predicated region
        $region61: #{attention_pool2d.1} parent=59 // pred_check
          %p1726 = pneg %p257
        $region62: #{attention_pool2d.1} parent=59 // pred_check_branch
          %1728 = sbr.rel (%p1726) target = $region64
        $region63: #{attention_pool2d.1} parent=59 // pred_region
          %1730 = vsyncadd %s1722, 0
          %s1731 = smul.addr %s24, 8
          %s1732 = scalar_lea.hbm %s10, %s1731
          %s1734 = sshll.u32 %s1725, 4
          %s1735 = int_to_ptr.vmem [resolvable:$true] %s1734
          %s1736 = sshll.u32 %s1732, 4
          %s1737 = int_to_ptr.hbm [resolvable:$true] %s1736
          %1739 = dma.vmem_to_hbm [thread:$0]  %s1735, 128, %s1737, %s1722
        $region64: #{attention_pool2d.1} parent=59 // pred_fallthru
          _
      $region60: #{attention_pool2d.1} parent=5 // pred_fallthru
        _
      %p1740 = scmp.le.s32.totalorder 2, %s19
      // Predicated region
      $region65: #{attention_pool2d.1} parent=5 // pred_check
        %p1741 = pneg %p1740
      $region66: #{attention_pool2d.1} parent=5 // pred_check_branch
        %1743 = sbr.rel (%p1741) target = $region68
      $region67: #{attention_pool2d.1} parent=5 // pred_region
        %s1744 = ssub.s32 %s19, 2
        // Predicated region
        $region69: #{attention_pool2d.1} parent=67 // pred_check
          %p1745 = pneg %p263
        $region70: #{attention_pool2d.1} parent=67 // pred_check_branch
          %1747 = sbr.rel (%p1745) target = $region72
        $region71: #{attention_pool2d.1} parent=67 // pred_region
          %s1748 = sand.u32 %s248, 1
          %s1749 = scalar_lea.sflag [#allocation3], %s1748
          %s1750 = sand.u32 %s248, 1
          %s1751 = smul.addr %s1750, 8
          %s1752 = scalar_lea.vmem [#allocation2], %s1751
          %1754 = dma.done %s1749, 128
        $region72: #{attention_pool2d.1} parent=67 // pred_fallthru
          _
      $region68: #{attention_pool2d.1} parent=5 // pred_fallthru
        _
    $region6: #{attention_pool2d.1} parent=1 // loop_footer
      %s23 = sadd.s32 1, %s19
    $region7: #{attention_pool2d.1} parent=1 // loop_footer_branch
      %18 = sbr.rel target = $region3
    $region8: #{attention_pool2d.1} parent=1 // loop_exit
      _
    %1755 = vsyncpa [#allocation3], 1
    %s1756 = scalar_lea.sflag [#allocation3], 1
    %1757 = vsyncpa %s1756, 1

</llo_original>
